<compile_context>
chip_gen: v5e
topology: v5e:2x2
jax: 0.10.0
libtpu: 0.0.40
codegen_flags: <defaults>
</compile_context>

<pallas_src>
import functools

import jax
import jax.numpy as jnp
from jax.experimental import pallas as pl
from jax.experimental.pallas import tpu as pltpu

_BN_EPS = 1e-5


# ----------------------------------------------------------------------------
# Fused BasicBlock kernel (one batch item per grid step)
# ----------------------------------------------------------------------------
def _fused_basic_block_kernel(stride, has_proj, x_ref, w1_ref, s1_ref, b1_ref,
                              w2_ref, s2_ref, b2_ref, *rest):
    """conv3x3(s)+BN+ReLU -> conv3x3(1)+BN -> (+shortcut) -> ReLU, VMEM-resident.

    stride == 1:
        x_ref: (1, H, W, Cin) f32, scratch = (xp_scr, mid_scr)   [bf16 scratches]
    stride  > 1:
        x_ref: (s*s, Hs, Ws, Cin) f32 stride-phase images of the padded input,
        scratch = (mid_scr,)
    w1_ref: (9*Cin,  Cmid) bf16   (K index = (dy*3 + dx)*Cin + c)
    w2_ref: (9*Cmid, Cout) bf16
    s*/b*_ref: (1, C) f32 folded BN scale/bias
    ws_ref: (Cin, Cout) bf16 1x1 projection weight (only if has_proj)
    o_ref:  (1, Ho*Wo, Cout) f32
    """
    if has_proj:
        ws_ref, ss_ref, bs_ref, o_ref, *scratch = rest
    else:
        ws_ref = ss_ref = bs_ref = None
        o_ref, *scratch = rest
    if stride == 1:
        xp_scr, mid_scr = scratch
    else:
        (mid_scr,) = scratch

    f32, bf16 = jnp.float32, jnp.bfloat16
    Cin = x_ref.shape[-1]
    Cmid = mid_scr.shape[-1]
    Ho, Wo = mid_scr.shape[0] - 2, mid_scr.shape[1] - 2
    Cout = o_ref.shape[-1]
    M = Ho * Wo

    # ---- stage conv1 input: 1-px zero halo lives in bf16 VMEM, never in HBM ----
    if stride == 1:
        H, W = x_ref.shape[1], x_ref.shape[2]
        Hp, Wp = H + 2, W + 2
        # Zero only the 4 thin halo strips; the interior write covers the rest.
        xp_scr[0:1, :, :] = jnp.zeros((1, Wp, Cin), bf16)
        xp_scr[Hp - 1:Hp, :, :] = jnp.zeros((1, Wp, Cin), bf16)
        xp_scr[:, 0:1, :] = jnp.zeros((Hp, 1, Cin), bf16)
        xp_scr[:, Wp - 1:Wp, :] = jnp.zeros((Hp, 1, Cin), bf16)
        xp_scr[1:H + 1, 1:W + 1, :] = x_ref[0].astype(bf16)

        def conv1_tap(dy, dx):                 # bf16 ref slice, loaded at use
            return xp_scr[dy:dy + Ho, dx:dx + Wo, :]
    else:
        def conv1_tap(dy, dx):                 # contiguous slice of a phase image
            p = (dy % stride) * stride + (dx % stride)
            return x_ref[p,
                         dy // stride:dy // stride + Ho,
                         dx // stride:dx // stride + Wo, :].astype(bf16)

    def conv3x3(tap, wr, c_in):
        """3x3 conv as MXU matmul(s); tap(dy,dx) -> (Ho, Wo, c_in) bf16."""
        if c_in >= 128:
            # K = c_in already fills the MXU; skip the lane-axis concatenation.
            acc = None
            for t in range(9):
                part = jnp.dot(tap(t // 3, t % 3).reshape(M, c_in),
                               wr[t * c_in:(t + 1) * c_in, :],
                               preferred_element_type=f32)
                acc = part if acc is None else acc + part
            return acc
        # Small channel count: one im2col matmul with K = 9*c_in.
        slab = jnp.concatenate([tap(t // 3, t % 3) for t in range(9)], axis=-1)
        return jnp.dot(slab.reshape(M, 9 * c_in), wr[...],
                       preferred_element_type=f32)

    # ---- conv1 (3x3, stride s) + BN1 + ReLU ----
    mid = jnp.maximum(
        conv3x3(conv1_tap, w1_ref, Cin) * s1_ref[...] + b1_ref[...], 0.0)

    # ---- intermediate stays in VMEM (bf16) with a 1-px zero halo for conv2 ----
    Hop, Wop = Ho + 2, Wo + 2
    mid_scr[0:1, :, :] = jnp.zeros((1, Wop, Cmid), bf16)
    mid_scr[Hop - 1:Hop, :, :] = jnp.zeros((1, Wop, Cmid), bf16)
    mid_scr[:, 0:1, :] = jnp.zeros((Hop, 1, Cmid), bf16)
    mid_scr[:, Wop - 1:Wop, :] = jnp.zeros((Hop, 1, Cmid), bf16)
    mid_scr[1:Ho + 1, 1:Wo + 1, :] = mid.reshape(Ho, Wo, Cmid).astype(bf16)

    def conv2_tap(dy, dx):
        return mid_scr[dy:dy + Ho, dx:dx + Wo, :]

    # ---- conv2 (3x3, stride 1) + BN2 ----
    out = conv3x3(conv2_tap, w2_ref, Cmid) * s2_ref[...] + b2_ref[...]

    # ---- shortcut (fused; no separate pallas_call / HBM traffic) ----
    if has_proj:
        # x[::s, ::s] is exactly tap (1,1) of the padded input.
        sc = jnp.dot(conv1_tap(1, 1).reshape(M, Cin), ws_ref[...],
                     preferred_element_type=f32)
        out = out + (sc * ss_ref[...] + bs_ref[...])
    else:
        out = out + x_ref[0].reshape(M, Cout)   # exact f32 identity add

    o_ref[...] = jnp.maximum(out, 0.0).reshape(1, M, Cout).astype(o_ref.dtype)


# ----------------------------------------------------------------------------
# Parameter prep helpers
# ----------------------------------------------------------------------------
def _fold_bn(bn):
    scale = bn["gamma"] / jnp.sqrt(bn["var"] + _BN_EPS)
    bias = bn["beta"] - bn["mean"] * scale
    return scale.astype(jnp.float32), bias.astype(jnp.float32)


def _prep_w3x3(w_oihw):
    """(Cout, Cin, 3, 3) -> ((dy*3+dx)*Cin + c, Cout) in bf16 (MXU operand)."""
    cout, cin = w_oihw.shape[0], w_oihw.shape[1]
    w = jnp.transpose(w_oihw, (2, 3, 1, 0))            # (3, 3, Cin, Cout)
    return w.reshape(9 * cin, cout).astype(jnp.bfloat16)


# ----------------------------------------------------------------------------
# Wrapper: PyTorch-facing NCHW I/O, one fused pallas_call for the whole block
# ----------------------------------------------------------------------------
def basic_block_pallas(x_nchw, params, stride):
    x = jnp.transpose(x_nchw, (0, 2, 3, 1)).astype(jnp.float32)   # NCHW -> NHWC
    N, H, W, Cin = x.shape
    Cmid = params["w1"].shape[0]
    Cout = params["w2"].shape[0]
    Ho = (H - 1) // stride + 1
    Wo = (W - 1) // stride + 1
    has_proj = "ws" in params

    s1, b1 = _fold_bn(params["bn1"])
    s2, b2 = _fold_bn(params["bn2"])
    w1 = _prep_w3x3(params["w1"])
    w2 = _prep_w3x3(params["w2"])

    if stride == 1:
        # Unpadded input goes straight to the kernel; the halo is built in VMEM.
        x_in = x
        x_spec = pl.BlockSpec((1, H, W, Cin), lambda n: (n, 0, 0, 0))
        scratch = [pltpu.VMEM((H + 2, W + 2, Cin), jnp.bfloat16),
                   pltpu.VMEM((Ho + 2, Wo + 2, Cmid), jnp.bfloat16)]
        x_blk_elems = H * W * Cin
    else:
        # TODO(synk): replace with in-kernel strided ref slices
        # (pl.ds(..., stride=s)) to drop this extra XLA padding/reshape pass.
        s = stride
        H2 = -(-(H + 2) // s) * s
        W2 = -(-(W + 2) // s) * s
        # Every 3x3 tap must fit inside the phase images (fail loudly otherwise).
        assert H2 // s >= Ho + 2 // s and W2 // s >= Wo + 2 // s, (H, W, s)
        xpad = jnp.pad(x, ((0, 0), (1, H2 - H - 1), (1, W2 - W - 1), (0, 0)))
        xph = xpad.reshape(N, H2 // s, s, W2 // s, s, Cin)
        xph = jnp.transpose(xph, (0, 2, 4, 1, 3, 5))
        x_in = xph.reshape(N * s * s, H2 // s, W2 // s, Cin)
        x_spec = pl.BlockSpec((s * s, H2 // s, W2 // s, Cin),
                              lambda n: (n, 0, 0, 0))
        scratch = [pltpu.VMEM((Ho + 2, Wo + 2, Cmid), jnp.bfloat16)]
        x_blk_elems = s * s * (H2 // s) * (W2 // s) * Cin

    args = [x_in, w1, s1.reshape(1, Cmid), b1.reshape(1, Cmid),
            w2, s2.reshape(1, Cout), b2.reshape(1, Cout)]
    in_specs = [x_spec,
                pl.BlockSpec((9 * Cin, Cmid), lambda n: (0, 0)),
                pl.BlockSpec((1, Cmid), lambda n: (0, 0)),
                pl.BlockSpec((1, Cmid), lambda n: (0, 0)),
                pl.BlockSpec((9 * Cmid, Cout), lambda n: (0, 0)),
                pl.BlockSpec((1, Cout), lambda n: (0, 0)),
                pl.BlockSpec((1, Cout), lambda n: (0, 0))]
    if has_proj:
        ss, bs = _fold_bn(params["bns"])
        ws = jnp.transpose(params["ws"][:, :, 0, 0], (1, 0)).astype(jnp.bfloat16)
        args += [ws, ss.reshape(1, Cout), bs.reshape(1, Cout)]
        in_specs += [pl.BlockSpec((Cin, Cout), lambda n: (0, 0)),
                     pl.BlockSpec((1, Cout), lambda n: (0, 0)),
                     pl.BlockSpec((1, Cout), lambda n: (0, 0))]

    # VMEM budget from buffer math: double-buffered I/O blocks + weights +
    # bf16 staging scratches + working set (im2col slab, f32 accumulators).
    cmax = max(Cin, Cmid, Cout)
    est = (2 * 4 * (x_blk_elems + Ho * Wo * Cout)                 # x/out blocks x2
           + 2 * 2 * (w1.size + w2.size + Cin * Cout)             # weights x2 buf
           + 2 * ((H + 2) * (W + 2) * Cin + (Ho + 2) * (Wo + 2) * Cmid)
           + 4 * Ho * Wo * (2 * 9 * cmax + 3 * cmax))             # slab + temps
    vmem_limit = int(min(max(2 * est, 16 * 1024 * 1024), 40 * 1024 * 1024))

    kernel = functools.partial(_fused_basic_block_kernel, stride, has_proj)
    out = pl.pallas_call(
        kernel,
        out_shape=jax.ShapeDtypeStruct((N, Ho * Wo, Cout), jnp.float32),
        grid=(N,),
        in_specs=in_specs,
        out_specs=pl.BlockSpec((1, Ho * Wo, Cout), lambda n: (n, 0, 0)),
        scratch_shapes=scratch,
        compiler_params=pltpu.CompilerParams(
            dimension_semantics=("parallel",),
            vmem_limit_bytes=vmem_limit),
    )(*args)
    out = out.reshape(N, Ho, Wo, Cout)
    return jnp.transpose(out, (0, 3, 1, 2))                       # NHWC -> NCHW


# ----------------------------------------------------------------------------
# Deterministic synthetic parameters
# ----------------------------------------------------------------------------
def _bn_params(key, c):
    k1, k2, k3, k4 = jax.random.split(key, 4)
    return {
        "gamma": 1.0 + 0.1 * jax.random.normal(k1, (c,), jnp.float32),
        "beta": 0.1 * jax.random.normal(k2, (c,), jnp.float32),
        "mean": 0.1 * jax.random.normal(k3, (c,), jnp.float32),
        "var": jax.random.uniform(k4, (c,), jnp.float32, 0.5, 1.5),
    }


def init_basic_block_params(key, in_planes, planes, stride):
    ks = jax.random.split(key, 6)
    params = {
        # PyTorch conv weight layout: (Cout, Cin, kH, kW)
        "w1": 0.1 * jax.random.normal(ks[0], (planes, in_planes, 3, 3), jnp.float32),
        "bn1": _bn_params(ks[1], planes),
        "w2": 0.1 * jax.random.normal(ks[2], (planes, planes, 3, 3), jnp.float32),
        "bn2": _bn_params(ks[3], planes),
    }
    if stride != 1 or in_planes != planes:
        params["ws"] = 0.1 * jax.random.normal(ks[4], (planes, in_planes, 1, 1), jnp.float32)
        params["bns"] = _bn_params(ks[5], planes)
    return params


# ----------------------------------------------------------------------------
# Pure-JAX reference (same bf16 MXU operands / f32 accumulation as the kernel)
# ----------------------------------------------------------------------------
def basic_block_reference(x_nchw, params, stride):
    x = jnp.transpose(x_nchw, (0, 2, 3, 1)).astype(jnp.float32)

    def conv(y, w_oihw, s, pad):
        w = jnp.transpose(w_oihw, (2, 3, 1, 0)).astype(jnp.bfloat16).astype(jnp.float32)
        y = y.astype(jnp.bfloat16).astype(jnp.float32)
        return jax.lax.conv_general_dilated(
            y, w, (s, s), ((pad, pad), (pad, pad)),
            dimension_numbers=("NHWC", "HWIO", "NHWC"),
            preferred_element_type=jnp.float32,
            precision=jax.lax.Precision.HIGHEST)

    def bn(y, p):
        return (y - p["mean"]) / jnp.sqrt(p["var"] + _BN_EPS) * p["gamma"] + p["beta"]

    out = jax.nn.relu(bn(conv(x, params["w1"], stride, 1), params["bn1"]))
    out = bn(conv(out, params["w2"], 1, 1), params["bn2"])
    if "ws" in params:
        sc = bn(conv(x, params["ws"], stride, 0), params["bns"])
    else:
        sc = x
    return jnp.transpose(jax.nn.relu(out + sc), (0, 3, 1, 2))


# ----------------------------------------------------------------------------
if __name__ == "__main__":
    key = jax.random.PRNGKey(0)
    N, H, W = 2, 16, 16
    configs = [
        (4, 4, 1),   # identity shortcut
        (4, 8, 1),   # 1x1 projection shortcut (channel change)
        (4, 8, 2),   # strided block + projection shortcut (phase-split path)
    ]
    for cfg_id, (in_planes, planes, stride) in enumerate(configs):
        kp, kx, key = jax.random.split(key, 3)
        params = init_basic_block_params(kp, in_planes, planes, stride)
        x = jax.random.normal(kx, (N, in_planes, H, W), jnp.float32)

        y = jax.block_until_ready(basic_block_pallas(x, params, stride))
        y_ref = basic_block_reference(x, params, stride)

        assert y.shape == y_ref.shape, (cfg_id, y.shape, y_ref.shape)
        max_err = float(jnp.max(jnp.abs(y - y_ref)))
        assert jnp.allclose(y, y_ref, atol=2e-3, rtol=2e-3), (cfg_id, max_err)

    print("KERNEL_OK")
</pallas_src>

<mosaic_0001>
module attributes {stable_mosaic.version = 11 : i64} {
  func.func @_fused_basic_block_kernel(%arg0: i32, %arg1: memref<1x16x16x4xf32, #tpu.memory_space<vmem>>, %arg2: memref<36x4xbf16, #tpu.memory_space<vmem>>, %arg3: memref<1x4xf32, #tpu.memory_space<vmem>>, %arg4: memref<1x4xf32, #tpu.memory_space<vmem>>, %arg5: memref<36x4xbf16, #tpu.memory_space<vmem>>, %arg6: memref<1x4xf32, #tpu.memory_space<vmem>>, %arg7: memref<1x4xf32, #tpu.memory_space<vmem>>, %arg8: memref<1x256x4xf32, #tpu.memory_space<vmem>>, %arg9: memref<18x18x4xbf16, #tpu.memory_space<vmem>>, %arg10: memref<18x18x4xbf16, #tpu.memory_space<vmem>>) attributes {dimension_semantics = [#tpu.dimension_semantics<parallel>], iteration_bounds = array<i64: 2>, scalar_prefetch = 0 : i64, scratch_operands = 2 : i64, tpu.core_type = #tpu.core_type<tc>, window_params = [{transform_indices = @transform_0, window_bounds = array<i64: 1, 16, 16, 4>}, {pipeline_mode = #tpu.pipeline_mode<synchronous>, transform_indices = @transform_1, window_bounds = array<i64: 36, 4>}, {pipeline_mode = #tpu.pipeline_mode<synchronous>, transform_indices = @transform_2, window_bounds = array<i64: 1, 4>}, {pipeline_mode = #tpu.pipeline_mode<synchronous>, transform_indices = @transform_3, window_bounds = array<i64: 1, 4>}, {pipeline_mode = #tpu.pipeline_mode<synchronous>, transform_indices = @transform_4, window_bounds = array<i64: 36, 4>}, {pipeline_mode = #tpu.pipeline_mode<synchronous>, transform_indices = @transform_5, window_bounds = array<i64: 1, 4>}, {pipeline_mode = #tpu.pipeline_mode<synchronous>, transform_indices = @transform_6, window_bounds = array<i64: 1, 4>}, {transform_indices = @transform_7, window_bounds = array<i64: 1, 256, 4>}]} {
    %cst = arith.constant 0.000000e+00 : bf16
    %0 = vector.broadcast %cst : bf16 to vector<1x18x4xbf16>
    %c0 = arith.constant 0 : index
    %c0_0 = arith.constant 0 : index
    %c0_1 = arith.constant 0 : index
    %1 = vector.load %arg9[%c0, %c0_0, %c0_1] : memref<18x18x4xbf16, #tpu.memory_space<vmem>>, vector<1x18x4xbf16>
    tpu.vector_store %arg9[%c0, %c0_0, %c0_1], %0 {strides = array<i32>} : memref<18x18x4xbf16, #tpu.memory_space<vmem>>, vector<1x18x4xbf16>,
    %cst_2 = arith.constant 0.000000e+00 : bf16
    %2 = vector.broadcast %cst_2 : bf16 to vector<1x18x4xbf16>
    %c17 = arith.constant 17 : index
    %c0_3 = arith.constant 0 : index
    %c0_4 = arith.constant 0 : index
    %3 = vector.load %arg9[%c17, %c0_3, %c0_4] : memref<18x18x4xbf16, #tpu.memory_space<vmem>>, vector<1x18x4xbf16>
    tpu.vector_store %arg9[%c17, %c0_3, %c0_4], %2 {strides = array<i32>} : memref<18x18x4xbf16, #tpu.memory_space<vmem>>, vector<1x18x4xbf16>,
    %cst_5 = arith.constant 0.000000e+00 : bf16
    %4 = vector.broadcast %cst_5 : bf16 to vector<18x1x4xbf16>
    %c0_6 = arith.constant 0 : index
    %c0_7 = arith.constant 0 : index
    %c0_8 = arith.constant 0 : index
    %5 = vector.load %arg9[%c0_6, %c0_7, %c0_8] : memref<18x18x4xbf16, #tpu.memory_space<vmem>>, vector<18x1x4xbf16>
    tpu.vector_store %arg9[%c0_6, %c0_7, %c0_8], %4 {strides = array<i32>} : memref<18x18x4xbf16, #tpu.memory_space<vmem>>, vector<18x1x4xbf16>,
    %cst_9 = arith.constant 0.000000e+00 : bf16
    %6 = vector.broadcast %cst_9 : bf16 to vector<18x1x4xbf16>
    %c0_10 = arith.constant 0 : index
    %c17_11 = arith.constant 17 : index
    %c0_12 = arith.constant 0 : index
    %7 = vector.load %arg9[%c0_10, %c17_11, %c0_12] : memref<18x18x4xbf16, #tpu.memory_space<vmem>>, vector<18x1x4xbf16>
    tpu.vector_store %arg9[%c0_10, %c17_11, %c0_12], %6 {strides = array<i32>} : memref<18x18x4xbf16, #tpu.memory_space<vmem>>, vector<18x1x4xbf16>,
    %c0_13 = arith.constant 0 : index
    %c0_14 = arith.constant 0 : index
    %c0_15 = arith.constant 0 : index
    %c0_16 = arith.constant 0 : index
    %8 = vector.load %arg1[%c0_13, %c0_14, %c0_15, %c0_16] : memref<1x16x16x4xf32, #tpu.memory_space<vmem>>, vector<1x16x16x4xf32>
    %9 = vector.shape_cast %8 : vector<1x16x16x4xf32> to vector<16x16x4xf32>
    %10 = arith.truncf %9 : vector<16x16x4xf32> to vector<16x16x4xbf16>
    %c1 = arith.constant 1 : index
    %c1_17 = arith.constant 1 : index
    %c0_18 = arith.constant 0 : index
    %11 = vector.load %arg9[%c1, %c1_17, %c0_18] : memref<18x18x4xbf16, #tpu.memory_space<vmem>>, vector<16x16x4xbf16>
    tpu.vector_store %arg9[%c1, %c1_17, %c0_18], %10 {strides = array<i32>} : memref<18x18x4xbf16, #tpu.memory_space<vmem>>, vector<16x16x4xbf16>,
    %c0_19 = arith.constant 0 : index
    %c0_20 = arith.constant 0 : index
    %c0_21 = arith.constant 0 : index
    %12 = vector.load %arg9[%c0_19, %c0_20, %c0_21] : memref<18x18x4xbf16, #tpu.memory_space<vmem>>, vector<16x16x4xbf16>
    %c0_22 = arith.constant 0 : index
    %c1_23 = arith.constant 1 : index
    %c0_24 = arith.constant 0 : index
    %13 = vector.load %arg9[%c0_22, %c1_23, %c0_24] : memref<18x18x4xbf16, #tpu.memory_space<vmem>>, vector<16x16x4xbf16>
    %c0_25 = arith.constant 0 : index
    %c2 = arith.constant 2 : index
    %c0_26 = arith.constant 0 : index
    %14 = vector.load %arg9[%c0_25, %c2, %c0_26] : memref<18x18x4xbf16, #tpu.memory_space<vmem>>, vector<16x16x4xbf16>
    %c1_27 = arith.constant 1 : index
    %c0_28 = arith.constant 0 : index
    %c0_29 = arith.constant 0 : index
    %15 = vector.load %arg9[%c1_27, %c0_28, %c0_29] : memref<18x18x4xbf16, #tpu.memory_space<vmem>>, vector<16x16x4xbf16>
    %c1_30 = arith.constant 1 : index
    %c1_31 = arith.constant 1 : index
    %c0_32 = arith.constant 0 : index
    %16 = vector.load %arg9[%c1_30, %c1_31, %c0_32] : memref<18x18x4xbf16, #tpu.memory_space<vmem>>, vector<16x16x4xbf16>
    %c1_33 = arith.constant 1 : index
    %c2_34 = arith.constant 2 : index
    %c0_35 = arith.constant 0 : index
    %17 = vector.load %arg9[%c1_33, %c2_34, %c0_35] : memref<18x18x4xbf16, #tpu.memory_space<vmem>>, vector<16x16x4xbf16>
    %c2_36 = arith.constant 2 : index
    %c0_37 = arith.constant 0 : index
    %c0_38 = arith.constant 0 : index
    %18 = vector.load %arg9[%c2_36, %c0_37, %c0_38] : memref<18x18x4xbf16, #tpu.memory_space<vmem>>, vector<16x16x4xbf16>
    %c2_39 = arith.constant 2 : index
    %c1_40 = arith.constant 1 : index
    %c0_41 = arith.constant 0 : index
    %19 = vector.load %arg9[%c2_39, %c1_40, %c0_41] : memref<18x18x4xbf16, #tpu.memory_space<vmem>>, vector<16x16x4xbf16>
    %c2_42 = arith.constant 2 : index
    %c2_43 = arith.constant 2 : index
    %c0_44 = arith.constant 0 : index
    %20 = vector.load %arg9[%c2_42, %c2_43, %c0_44] : memref<18x18x4xbf16, #tpu.memory_space<vmem>>, vector<16x16x4xbf16>
    %21 = tpu.concatenate %12, %13, %14, %15, %16, %17, %18, %19, %20 in 2 : vector<16x16x4xbf16>, vector<16x16x4xbf16>, vector<16x16x4xbf16>, vector<16x16x4xbf16>, vector<16x16x4xbf16>, vector<16x16x4xbf16>, vector<16x16x4xbf16>, vector<16x16x4xbf16>, vector<16x16x4xbf16> -> vector<16x16x36xbf16>
    %22 = vector.shape_cast %21 : vector<16x16x36xbf16> to vector<256x36xbf16>
    %c0_45 = arith.constant 0 : index
    %c0_46 = arith.constant 0 : index
    %23 = vector.load %arg2[%c0_45, %c0_46] : memref<36x4xbf16, #tpu.memory_space<vmem>>, vector<36x4xbf16>
    %cst_47 = arith.constant dense<0.000000e+00> : vector<256x4xf32>
    %24 = tpu.matmul %22, %23, %cst_47 {dimension_numbers = #tpu.dot_dimension_numbers<[1], [0], [0], [1], [0, 0, 1, 1], [], []>} : vector<256x36xbf16>, vector<36x4xbf16>, vector<256x4xf32> -> vector<256x4xf32>
    %c0_48 = arith.constant 0 : index
    %c0_49 = arith.constant 0 : index
    %25 = vector.load %arg3[%c0_48, %c0_49] : memref<1x4xf32, #tpu.memory_space<vmem>>, vector<1x4xf32>
    %26 = vector.broadcast %25 : vector<1x4xf32> to vector<256x4xf32>
    %27 = arith.mulf %24, %26 : vector<256x4xf32>
    %c0_50 = arith.constant 0 : index
    %c0_51 = arith.constant 0 : index
    %28 = vector.load %arg4[%c0_50, %c0_51] : memref<1x4xf32, #tpu.memory_space<vmem>>, vector<1x4xf32>
    %29 = vector.broadcast %28 : vector<1x4xf32> to vector<256x4xf32>
    %30 = arith.addf %27, %29 : vector<256x4xf32>
    %cst_52 = arith.constant 0.000000e+00 : f32
    %31 = vector.broadcast %cst_52 : f32 to vector<256x4xf32>
    %32 = arith.maximumf %30, %31 : vector<256x4xf32>
    %cst_53 = arith.constant 0.000000e+00 : bf16
    %33 = vector.broadcast %cst_53 : bf16 to vector<1x18x4xbf16>
    %c0_54 = arith.constant 0 : index
    %c0_55 = arith.constant 0 : index
    %c0_56 = arith.constant 0 : index
    %34 = vector.load %arg10[%c0_54, %c0_55, %c0_56] : memref<18x18x4xbf16, #tpu.memory_space<vmem>>, vector<1x18x4xbf16>
    tpu.vector_store %arg10[%c0_54, %c0_55, %c0_56], %33 {strides = array<i32>} : memref<18x18x4xbf16, #tpu.memory_space<vmem>>, vector<1x18x4xbf16>,
    %cst_57 = arith.constant 0.000000e+00 : bf16
    %35 = vector.broadcast %cst_57 : bf16 to vector<1x18x4xbf16>
    %c17_58 = arith.constant 17 : index
    %c0_59 = arith.constant 0 : index
    %c0_60 = arith.constant 0 : index
    %36 = vector.load %arg10[%c17_58, %c0_59, %c0_60] : memref<18x18x4xbf16, #tpu.memory_space<vmem>>, vector<1x18x4xbf16>
    tpu.vector_store %arg10[%c17_58, %c0_59, %c0_60], %35 {strides = array<i32>} : memref<18x18x4xbf16, #tpu.memory_space<vmem>>, vector<1x18x4xbf16>,
    %cst_61 = arith.constant 0.000000e+00 : bf16
    %37 = vector.broadcast %cst_61 : bf16 to vector<18x1x4xbf16>
    %c0_62 = arith.constant 0 : index
    %c0_63 = arith.constant 0 : index
    %c0_64 = arith.constant 0 : index
    %38 = vector.load %arg10[%c0_62, %c0_63, %c0_64] : memref<18x18x4xbf16, #tpu.memory_space<vmem>>, vector<18x1x4xbf16>
    tpu.vector_store %arg10[%c0_62, %c0_63, %c0_64], %37 {strides = array<i32>} : memref<18x18x4xbf16, #tpu.memory_space<vmem>>, vector<18x1x4xbf16>,
    %cst_65 = arith.constant 0.000000e+00 : bf16
    %39 = vector.broadcast %cst_65 : bf16 to vector<18x1x4xbf16>
    %c0_66 = arith.constant 0 : index
    %c17_67 = arith.constant 17 : index
    %c0_68 = arith.constant 0 : index
    %40 = vector.load %arg10[%c0_66, %c17_67, %c0_68] : memref<18x18x4xbf16, #tpu.memory_space<vmem>>, vector<18x1x4xbf16>
    tpu.vector_store %arg10[%c0_66, %c17_67, %c0_68], %39 {strides = array<i32>} : memref<18x18x4xbf16, #tpu.memory_space<vmem>>, vector<18x1x4xbf16>,
    %41 = vector.shape_cast %32 : vector<256x4xf32> to vector<16x16x4xf32>
    %42 = arith.truncf %41 : vector<16x16x4xf32> to vector<16x16x4xbf16>
    %c1_69 = arith.constant 1 : index
    %c1_70 = arith.constant 1 : index
    %c0_71 = arith.constant 0 : index
    %43 = vector.load %arg10[%c1_69, %c1_70, %c0_71] : memref<18x18x4xbf16, #tpu.memory_space<vmem>>, vector<16x16x4xbf16>
    tpu.vector_store %arg10[%c1_69, %c1_70, %c0_71], %42 {strides = array<i32>} : memref<18x18x4xbf16, #tpu.memory_space<vmem>>, vector<16x16x4xbf16>,
    %c0_72 = arith.constant 0 : index
    %c0_73 = arith.constant 0 : index
    %c0_74 = arith.constant 0 : index
    %44 = vector.load %arg10[%c0_72, %c0_73, %c0_74] : memref<18x18x4xbf16, #tpu.memory_space<vmem>>, vector<16x16x4xbf16>
    %c0_75 = arith.constant 0 : index
    %c1_76 = arith.constant 1 : index
    %c0_77 = arith.constant 0 : index
    %45 = vector.load %arg10[%c0_75, %c1_76, %c0_77] : memref<18x18x4xbf16, #tpu.memory_space<vmem>>, vector<16x16x4xbf16>
    %c0_78 = arith.constant 0 : index
    %c2_79 = arith.constant 2 : index
    %c0_80 = arith.constant 0 : index
    %46 = vector.load %arg10[%c0_78, %c2_79, %c0_80] : memref<18x18x4xbf16, #tpu.memory_space<vmem>>, vector<16x16x4xbf16>
    %c1_81 = arith.constant 1 : index
    %c0_82 = arith.constant 0 : index
    %c0_83 = arith.constant 0 : index
    %47 = vector.load %arg10[%c1_81, %c0_82, %c0_83] : memref<18x18x4xbf16, #tpu.memory_space<vmem>>, vector<16x16x4xbf16>
    %c1_84 = arith.constant 1 : index
    %c1_85 = arith.constant 1 : index
    %c0_86 = arith.constant 0 : index
    %48 = vector.load %arg10[%c1_84, %c1_85, %c0_86] : memref<18x18x4xbf16, #tpu.memory_space<vmem>>, vector<16x16x4xbf16>
    %c1_87 = arith.constant 1 : index
    %c2_88 = arith.constant 2 : index
    %c0_89 = arith.constant 0 : index
    %49 = vector.load %arg10[%c1_87, %c2_88, %c0_89] : memref<18x18x4xbf16, #tpu.memory_space<vmem>>, vector<16x16x4xbf16>
    %c2_90 = arith.constant 2 : index
    %c0_91 = arith.constant 0 : index
    %c0_92 = arith.constant 0 : index
    %50 = vector.load %arg10[%c2_90, %c0_91, %c0_92] : memref<18x18x4xbf16, #tpu.memory_space<vmem>>, vector<16x16x4xbf16>
    %c2_93 = arith.constant 2 : index
    %c1_94 = arith.constant 1 : index
    %c0_95 = arith.constant 0 : index
    %51 = vector.load %arg10[%c2_93, %c1_94, %c0_95] : memref<18x18x4xbf16, #tpu.memory_space<vmem>>, vector<16x16x4xbf16>
    %c2_96 = arith.constant 2 : index
    %c2_97 = arith.constant 2 : index
    %c0_98 = arith.constant 0 : index
    %52 = vector.load %arg10[%c2_96, %c2_97, %c0_98] : memref<18x18x4xbf16, #tpu.memory_space<vmem>>, vector<16x16x4xbf16>
    %53 = tpu.concatenate %44, %45, %46, %47, %48, %49, %50, %51, %52 in 2 : vector<16x16x4xbf16>, vector<16x16x4xbf16>, vector<16x16x4xbf16>, vector<16x16x4xbf16>, vector<16x16x4xbf16>, vector<16x16x4xbf16>, vector<16x16x4xbf16>, vector<16x16x4xbf16>, vector<16x16x4xbf16> -> vector<16x16x36xbf16>
    %54 = vector.shape_cast %53 : vector<16x16x36xbf16> to vector<256x36xbf16>
    %c0_99 = arith.constant 0 : index
    %c0_100 = arith.constant 0 : index
    %55 = vector.load %arg5[%c0_99, %c0_100] : memref<36x4xbf16, #tpu.memory_space<vmem>>, vector<36x4xbf16>
    %cst_101 = arith.constant dense<0.000000e+00> : vector<256x4xf32>
    %56 = tpu.matmul %54, %55, %cst_101 {dimension_numbers = #tpu.dot_dimension_numbers<[1], [0], [0], [1], [0, 0, 1, 1], [], []>} : vector<256x36xbf16>, vector<36x4xbf16>, vector<256x4xf32> -> vector<256x4xf32>
    %c0_102 = arith.constant 0 : index
    %c0_103 = arith.constant 0 : index
    %57 = vector.load %arg6[%c0_102, %c0_103] : memref<1x4xf32, #tpu.memory_space<vmem>>, vector<1x4xf32>
    %58 = vector.broadcast %57 : vector<1x4xf32> to vector<256x4xf32>
    %59 = arith.mulf %56, %58 : vector<256x4xf32>
    %c0_104 = arith.constant 0 : index
    %c0_105 = arith.constant 0 : index
    %60 = vector.load %arg7[%c0_104, %c0_105] : memref<1x4xf32, #tpu.memory_space<vmem>>, vector<1x4xf32>
    %61 = vector.broadcast %60 : vector<1x4xf32> to vector<256x4xf32>
    %62 = arith.addf %59, %61 : vector<256x4xf32>
    %c0_106 = arith.constant 0 : index
    %c0_107 = arith.constant 0 : index
    %c0_108 = arith.constant 0 : index
    %c0_109 = arith.constant 0 : index
    %63 = vector.load %arg1[%c0_106, %c0_107, %c0_108, %c0_109] : memref<1x16x16x4xf32, #tpu.memory_space<vmem>>, vector<1x16x16x4xf32>
    %64 = vector.shape_cast %63 : vector<1x16x16x4xf32> to vector<16x16x4xf32>
    %65 = vector.shape_cast %64 : vector<16x16x4xf32> to vector<256x4xf32>
    %66 = arith.addf %62, %65 : vector<256x4xf32>
    %cst_110 = arith.constant 0.000000e+00 : f32
    %67 = vector.broadcast %cst_110 : f32 to vector<256x4xf32>
    %68 = arith.maximumf %66, %67 : vector<256x4xf32>
    %69 = vector.shape_cast %68 : vector<256x4xf32> to vector<1x256x4xf32>
    %c0_111 = arith.constant 0 : index
    %c0_112 = arith.constant 0 : index
    %c0_113 = arith.constant 0 : index
    %70 = vector.load %arg8[%c0_111, %c0_112, %c0_113] : memref<1x256x4xf32, #tpu.memory_space<vmem>>, vector<1x256x4xf32>
    tpu.vector_store %arg8[%c0_111, %c0_112, %c0_113], %69 {strides = array<i32>} : memref<1x256x4xf32, #tpu.memory_space<vmem>>, vector<1x256x4xf32>,
    return
  }
  func.func @transform_0(%arg0: i32) -> (i32, i32, i32, i32) {
    %c0_i32 = arith.constant 0 : i32
    %c0_i32_0 = arith.constant 0 : i32
    %c0_i32_1 = arith.constant 0 : i32
    %c0_i32_2 = arith.constant 0 : i32
    return %arg0, %c0_i32, %c0_i32_0, %c0_i32_1 : i32, i32, i32, i32
  }
  func.func @transform_1(%arg0: i32) -> (i32, i32) {
    %c0_i32 = arith.constant 0 : i32
    %c0_i32_0 = arith.constant 0 : i32
    %c0_i32_1 = arith.constant 0 : i32
    return %c0_i32, %c0_i32_0 : i32, i32
  }
  func.func @transform_2(%arg0: i32) -> (i32, i32) {
    %c0_i32 = arith.constant 0 : i32
    %c0_i32_0 = arith.constant 0 : i32
    %c0_i32_1 = arith.constant 0 : i32
    return %c0_i32, %c0_i32_0 : i32, i32
  }
  func.func @transform_3(%arg0: i32) -> (i32, i32) {
    %c0_i32 = arith.constant 0 : i32
    %c0_i32_0 = arith.constant 0 : i32
    %c0_i32_1 = arith.constant 0 : i32
    return %c0_i32, %c0_i32_0 : i32, i32
  }
  func.func @transform_4(%arg0: i32) -> (i32, i32) {
    %c0_i32 = arith.constant 0 : i32
    %c0_i32_0 = arith.constant 0 : i32
    %c0_i32_1 = arith.constant 0 : i32
    return %c0_i32, %c0_i32_0 : i32, i32
  }
  func.func @transform_5(%arg0: i32) -> (i32, i32) {
    %c0_i32 = arith.constant 0 : i32
    %c0_i32_0 = arith.constant 0 : i32
    %c0_i32_1 = arith.constant 0 : i32
    return %c0_i32, %c0_i32_0 : i32, i32
  }
  func.func @transform_6(%arg0: i32) -> (i32, i32) {
    %c0_i32 = arith.constant 0 : i32
    %c0_i32_0 = arith.constant 0 : i32
    %c0_i32_1 = arith.constant 0 : i32
    return %c0_i32, %c0_i32_0 : i32, i32
  }
  func.func @transform_7(%arg0: i32) -> (i32, i32, i32) {
    %c0_i32 = arith.constant 0 : i32
    %c0_i32_0 = arith.constant 0 : i32
    %c0_i32_1 = arith.constant 0 : i32
    return %arg0, %c0_i32, %c0_i32_0 : i32, i32, i32
  }
}

</mosaic_0001>

<llo_original>
// kernel: tpu_custom_call.1
$region0: #{tpu_custom_call.1}
  #allocation0 [shape = 'u32[]', space=smem, size = 0x4, offset = 0x4, fixed_abs, tag = 'smem constant byte address 0x4 - core index']
  #allocation1 [shape = 'u32[72,128]{1,0:T(1,128)}', space=vmem, size = 0x9000, scoped, tag = 'internal scratch']
  #allocation2 [shape = 'bf16[18,18,4]{2,1,0:T(8,128)(2,1)}', space=vmem, size = 0x1b000, scoped, tag = 'scratch operand']
  #allocation3 [shape = 'bf16[18,18,4]{2,1,0:T(8,128)(2,1)}', space=vmem, size = 0x1b000, scoped, tag = 'scratch operand']
  %s0 = inlined_call_operand.vmem [shape: f32[2,16,16,4], index: 0, kind: input, shape index: {}]
  %s1 = inlined_call_operand.vmem [shape: bf16[36,4], index: 1, kind: input, shape index: {}]
  %s2 = inlined_call_operand.vmem [shape: f32[1,4], index: 2, kind: input, shape index: {}]
  %s3 = inlined_call_operand.vmem [shape: f32[1,4], index: 3, kind: input, shape index: {}]
  %s4 = inlined_call_operand.vmem [shape: bf16[36,4], index: 4, kind: input, shape index: {}]
  %s5 = inlined_call_operand.vmem [shape: f32[1,4], index: 5, kind: input, shape index: {}]
  %s6 = inlined_call_operand.vmem [shape: f32[1,4], index: 6, kind: input, shape index: {}]
  %s7 = inlined_call_operand.vmem [shape: f32[2,256,4], index: 7, kind: output, shape index: {}]
  %s8 = sld [smem:[#allocation0]]
  $region61: #{tpu_custom_call.1} parent=0
    _
  %s10 = ssub.s32 1, %s8
  %s11 = scalar_select 0, %s10, %s8
  loop: start=0, step=1, limit=4
  $region2: #{tpu_custom_call.1} parent=0 // loop_pre_header
    _
  $region3: #{tpu_custom_call.1} parent=0 // loop_header
    %s13 = sphi 0, %s17
    %p14 = scmp.ge.s32.totalorder %s13, 4
    %s23 = sphi 0, %s25
    %s26 = sphi 0, %s23
    %s27 = sphi 0, %s26
    %s43 = sphi 0, %s27
    %s47 = sphi 0, %s47
    %s49 = sphi 0, %s47
    %s50 = sphi 0, %s49
    %s64 = sphi 0, %s50
    %s68 = sphi 0, %s68
    %s70 = sphi 0, %s68
    %s71 = sphi 0, %s70
    %s85 = sphi 0, %s71
    %s89 = sphi 0, %s89
    %s91 = sphi 0, %s89
    %s92 = sphi 0, %s91
    %s106 = sphi 0, %s92
    %s110 = sphi 0, %s110
    %s112 = sphi 0, %s110
    %s113 = sphi 0, %s112
    %s127 = sphi 0, %s113
    %s131 = sphi 0, %s131
    %s133 = sphi 0, %s131
    %s134 = sphi 0, %s133
    %s148 = sphi 0, %s134
    %s152 = sphi 0, %s152
    %s154 = sphi 0, %s152
    %s155 = sphi 0, %s154
    %s169 = sphi 0, %s155
    %s175 = sphi 0, %s177
    %s178 = sphi 0, %s175
    %s179 = sphi 0, %s178
    %s195 = sphi 0, %s179
  $region4: #{tpu_custom_call.1} parent=0 // loop_header_branch
    %16 = sbr.rel (%p14) target = $region8
  $region5: #{tpu_custom_call.1} parent=0 // loop_body
    %s18 = ssub.s32 %s13, 1
    %s19 = ssub.s32 %s13, 2
    %s20 = sadd.s32 %s13, 1
    %s21 = ssub.s32 %s13, %s20
    %p22 = scmp.eq.s32.totalorder %s21, 0
    %s24 = sadd.s32 %s23, 1
    %s25 = scalar_select %p22, %s23, %s24
    %p28 = pneg %p22
    %p29 = scmp.eq.s32.totalorder %s13, 1
    %p30 = por %p28, %p29
    %p31 = scmp.ne.s32.totalorder %s23, %s26
    %p32 = scmp.eq.s32.totalorder %s13, 0
    %p33 = por %p31, %p32
    %p34 = scmp.ne.s32.totalorder %s23, %s26
    %p35 = scmp.eq.s32.totalorder %s18, 1
    %p36 = por %p34, %p35
    %p37 = scmp.ne.s32.totalorder %s26, %s27
    %p38 = scmp.eq.s32.totalorder %s18, 0
    %p39 = por %p37, %p38
    %p40 = scmp.ne.s32.totalorder %s26, %s27
    %p41 = scmp.eq.s32.totalorder %s19, 1
    %p42 = por %p40, %p41
    %p44 = scmp.ne.s32.totalorder %s27, %s43
    %p45 = scmp.eq.s32.totalorder %s19, 0
    %p46 = por %p44, %p45
    %s48 = sadd.s32 %s47, 1
    %p51 = scmp.eq.s32.totalorder %s13, 1
    %p52 = scmp.ne.s32.totalorder %s47, %s49
    %p53 = scmp.eq.s32.totalorder %s13, 0
    %p54 = por %p52, %p53
    %p55 = scmp.ne.s32.totalorder %s47, %s49
    %p56 = scmp.eq.s32.totalorder %s18, 1
    %p57 = por %p55, %p56
    %p58 = scmp.ne.s32.totalorder %s49, %s50
    %p59 = scmp.eq.s32.totalorder %s18, 0
    %p60 = por %p58, %p59
    %p61 = scmp.ne.s32.totalorder %s49, %s50
    %p62 = scmp.eq.s32.totalorder %s19, 1
    %p63 = por %p61, %p62
    %p65 = scmp.ne.s32.totalorder %s50, %s64
    %p66 = scmp.eq.s32.totalorder %s19, 0
    %p67 = por %p65, %p66
    %s69 = sadd.s32 %s68, 1
    %p72 = scmp.eq.s32.totalorder %s13, 1
    %p73 = scmp.ne.s32.totalorder %s68, %s70
    %p74 = scmp.eq.s32.totalorder %s13, 0
    %p75 = por %p73, %p74
    %p76 = scmp.ne.s32.totalorder %s68, %s70
    %p77 = scmp.eq.s32.totalorder %s18, 1
    %p78 = por %p76, %p77
    %p79 = scmp.ne.s32.totalorder %s70, %s71
    %p80 = scmp.eq.s32.totalorder %s18, 0
    %p81 = por %p79, %p80
    %p82 = scmp.ne.s32.totalorder %s70, %s71
    %p83 = scmp.eq.s32.totalorder %s19, 1
    %p84 = por %p82, %p83
    %p86 = scmp.ne.s32.totalorder %s71, %s85
    %p87 = scmp.eq.s32.totalorder %s19, 0
    %p88 = por %p86, %p87
    %s90 = sadd.s32 %s89, 1
    %p93 = scmp.eq.s32.totalorder %s13, 1
    %p94 = scmp.ne.s32.totalorder %s89, %s91
    %p95 = scmp.eq.s32.totalorder %s13, 0
    %p96 = por %p94, %p95
    %p97 = scmp.ne.s32.totalorder %s89, %s91
    %p98 = scmp.eq.s32.totalorder %s18, 1
    %p99 = por %p97, %p98
    %p100 = scmp.ne.s32.totalorder %s91, %s92
    %p101 = scmp.eq.s32.totalorder %s18, 0
    %p102 = por %p100, %p101
    %p103 = scmp.ne.s32.totalorder %s91, %s92
    %p104 = scmp.eq.s32.totalorder %s19, 1
    %p105 = por %p103, %p104
    %p107 = scmp.ne.s32.totalorder %s92, %s106
    %p108 = scmp.eq.s32.totalorder %s19, 0
    %p109 = por %p107, %p108
    %s111 = sadd.s32 %s110, 1
    %p114 = scmp.eq.s32.totalorder %s13, 1
    %p115 = scmp.ne.s32.totalorder %s110, %s112
    %p116 = scmp.eq.s32.totalorder %s13, 0
    %p117 = por %p115, %p116
    %p118 = scmp.ne.s32.totalorder %s110, %s112
    %p119 = scmp.eq.s32.totalorder %s18, 1
    %p120 = por %p118, %p119
    %p121 = scmp.ne.s32.totalorder %s112, %s113
    %p122 = scmp.eq.s32.totalorder %s18, 0
    %p123 = por %p121, %p122
    %p124 = scmp.ne.s32.totalorder %s112, %s113
    %p125 = scmp.eq.s32.totalorder %s19, 1
    %p126 = por %p124, %p125
    %p128 = scmp.ne.s32.totalorder %s113, %s127
    %p129 = scmp.eq.s32.totalorder %s19, 0
    %p130 = por %p128, %p129
    %s132 = sadd.s32 %s131, 1
    %p135 = scmp.eq.s32.totalorder %s13, 1
    %p136 = scmp.ne.s32.totalorder %s131, %s133
    %p137 = scmp.eq.s32.totalorder %s13, 0
    %p138 = por %p136, %p137
    %p139 = scmp.ne.s32.totalorder %s131, %s133
    %p140 = scmp.eq.s32.totalorder %s18, 1
    %p141 = por %p139, %p140
    %p142 = scmp.ne.s32.totalorder %s133, %s134
    %p143 = scmp.eq.s32.totalorder %s18, 0
    %p144 = por %p142, %p143
    %p145 = scmp.ne.s32.totalorder %s133, %s134
    %p146 = scmp.eq.s32.totalorder %s19, 1
    %p147 = por %p145, %p146
    %p149 = scmp.ne.s32.totalorder %s134, %s148
    %p150 = scmp.eq.s32.totalorder %s19, 0
    %p151 = por %p149, %p150
    %s153 = sadd.s32 %s152, 1
    %p156 = scmp.eq.s32.totalorder %s13, 1
    %p157 = scmp.ne.s32.totalorder %s152, %s154
    %p158 = scmp.eq.s32.totalorder %s13, 0
    %p159 = por %p157, %p158
    %p160 = scmp.ne.s32.totalorder %s152, %s154
    %p161 = scmp.eq.s32.totalorder %s18, 1
    %p162 = por %p160, %p161
    %p163 = scmp.ne.s32.totalorder %s154, %s155
    %p164 = scmp.eq.s32.totalorder %s18, 0
    %p165 = por %p163, %p164
    %p166 = scmp.ne.s32.totalorder %s154, %s155
    %p167 = scmp.eq.s32.totalorder %s19, 1
    %p168 = por %p166, %p167
    %p170 = scmp.ne.s32.totalorder %s155, %s169
    %p171 = scmp.eq.s32.totalorder %s19, 0
    %p172 = por %p170, %p171
    %s173 = ssub.s32 %s13, %s20
    %p174 = scmp.eq.s32.totalorder %s173, 0
    %s176 = sadd.s32 %s175, 1
    %s177 = scalar_select %p174, %s175, %s176
    %p180 = pneg %p174
    %p181 = scmp.eq.s32.totalorder %s13, 1
    %p182 = por %p180, %p181
    %p183 = scmp.ne.s32.totalorder %s175, %s178
    %p184 = scmp.eq.s32.totalorder %s13, 0
    %p185 = por %p183, %p184
    %p186 = scmp.ne.s32.totalorder %s175, %s178
    %p187 = scmp.eq.s32.totalorder %s18, 1
    %p188 = por %p186, %p187
    %p189 = scmp.ne.s32.totalorder %s178, %s179
    %p190 = scmp.eq.s32.totalorder %s18, 0
    %p191 = por %p189, %p190
    %p192 = scmp.ne.s32.totalorder %s178, %s179
    %p193 = scmp.eq.s32.totalorder %s19, 1
    %p194 = por %p192, %p193
    %p196 = scmp.ne.s32.totalorder %s179, %s195
    %p197 = scmp.eq.s32.totalorder %s19, 0
    %p198 = por %p196, %p197
    %p199 = scmp.le.s32.totalorder 1, %s13
    %p200 = scmp.lt.s32.totalorder %s13, 3
    %p201 = pnand %p199, %p200
    %p202 = pneg %p201
    // Predicated region
    $region9: #{tpu_custom_call.1} parent=5 // pred_check
      _
    $region10: #{tpu_custom_call.1} parent=5 // pred_check_branch
      %204 = sbr.rel (%p201) target = $region12
    $region11: #{tpu_custom_call.1} parent=5 // pred_region
      %s205 = ssub.s32 %s13, 1
      // Predicated region
      $region13: #{tpu_custom_call.1} parent=11 // pred_check
        %p206 = pneg %p60
      $region14: #{tpu_custom_call.1} parent=11 // pred_check_branch
        %208 = sbr.rel (%p206) target = $region16
      $region15: #{tpu_custom_call.1} parent=11 // pred_region
        _
      $region16: #{tpu_custom_call.1} parent=11 // pred_fallthru
        _
      // Predicated region
      $region17: #{tpu_custom_call.1} parent=11 // pred_check
        %p209 = pneg %p81
      $region18: #{tpu_custom_call.1} parent=11 // pred_check_branch
        %211 = sbr.rel (%p209) target = $region20
      $region19: #{tpu_custom_call.1} parent=11 // pred_region
        _
      $region20: #{tpu_custom_call.1} parent=11 // pred_fallthru
        _
      // Predicated region
      $region21: #{tpu_custom_call.1} parent=11 // pred_check
        %p212 = pneg %p102
      $region22: #{tpu_custom_call.1} parent=11 // pred_check_branch
        %214 = sbr.rel (%p212) target = $region24
      $region23: #{tpu_custom_call.1} parent=11 // pred_region
        _
      $region24: #{tpu_custom_call.1} parent=11 // pred_fallthru
        _
      // Predicated region
      $region25: #{tpu_custom_call.1} parent=11 // pred_check
        %p215 = pneg %p123
      $region26: #{tpu_custom_call.1} parent=11 // pred_check_branch
        %217 = sbr.rel (%p215) target = $region28
      $region27: #{tpu_custom_call.1} parent=11 // pred_region
        _
      $region28: #{tpu_custom_call.1} parent=11 // pred_fallthru
        _
      // Predicated region
      $region29: #{tpu_custom_call.1} parent=11 // pred_check
        %p218 = pneg %p144
      $region30: #{tpu_custom_call.1} parent=11 // pred_check_branch
        %220 = sbr.rel (%p218) target = $region32
      $region31: #{tpu_custom_call.1} parent=11 // pred_region
        _
      $region32: #{tpu_custom_call.1} parent=11 // pred_fallthru
        _
      // Predicated region
      $region33: #{tpu_custom_call.1} parent=11 // pred_check
        %p221 = pneg %p165
      $region34: #{tpu_custom_call.1} parent=11 // pred_check_branch
        %223 = sbr.rel (%p221) target = $region36
      $region35: #{tpu_custom_call.1} parent=11 // pred_region
        _
      $region36: #{tpu_custom_call.1} parent=11 // pred_fallthru
        _
    $region12: #{tpu_custom_call.1} parent=5 // pred_fallthru
      _
    %p224 = scmp.lt.s32.totalorder %s13, 2
    // Predicated region
    $region37: #{tpu_custom_call.1} parent=5 // pred_check
      %p225 = pneg %p224
    $region38: #{tpu_custom_call.1} parent=5 // pred_check_branch
      %227 = sbr.rel (%p225) target = $region40
    $region39: #{tpu_custom_call.1} parent=5 // pred_region
      // Predicated region
      $region41: #{tpu_custom_call.1} parent=39 // pred_check
        %p228 = pneg %p33
      $region42: #{tpu_custom_call.1} parent=39 // pred_check_branch
        %230 = sbr.rel (%p228) target = $region44
      $region43: #{tpu_custom_call.1} parent=39 // pred_region
        %p231 = scmp.lt.s32.totalorder %s13, 1
        %s232 = scalar_select %p231, %s13, 1
        %s233 = smul.addr %s232, 32
        %s234 = smul.addr %s233, 8
        %s235 = scalar_lea.vmem %s0, %s234
      $region44: #{tpu_custom_call.1} parent=39 // pred_fallthru
        _
    $region40: #{tpu_custom_call.1} parent=5 // pred_fallthru
      _
    %p236 = scmp.le.s32.totalorder 1, %s13
    %p237 = scmp.lt.s32.totalorder %s13, 3
    %p238 = pnand %p236, %p237
    %p239 = pneg %p238
    // Predicated region
    $region45: #{tpu_custom_call.1} parent=5 // pred_check
      _
    $region46: #{tpu_custom_call.1} parent=5 // pred_check_branch
      %241 = sbr.rel (%p238) target = $region48
    $region47: #{tpu_custom_call.1} parent=5 // pred_region
      %s242 = ssub.s32 %s13, 1
      %p243 = scmp.lt.s32.totalorder %s18, 1
      %s244 = scalar_select %p243, %s18, 1
      %s245 = smul.addr %s244, 32
      %s246 = smul.addr %s245, 8
      %s247 = scalar_lea.vmem %s0, %s246
      %p248 = pneg %p39
      %p249 = pneg %p36
      %p250 = pneg %p60
      %p251 = pneg %p57
      %p252 = pneg %p81
      %p253 = pneg %p78
      %p254 = pneg %p102
      %p255 = pneg %p99
      %p256 = pneg %p123
      %p257 = pneg %p120
      %p258 = pneg %p144
      %p259 = pneg %p141
      %p260 = pneg %p165
      %p261 = pneg %p162
      %p262 = pneg %p191
      %p263 = pneg %p188
      %p264 = scmp.lt.s32.totalorder %s18, 1
      %s265 = scalar_select %p264, %s18, 1
      %s266 = smul.addr %s265, 32
      %s267 = smul.addr %s266, 8
      %s268 = scalar_lea.vmem %s7, %s267
      %p269 = scmp.lt.s32.totalorder %s18, 1
      %s270 = scalar_select %p269, %s18, 1
      %s271 = smul.addr %s270, 32
      %s272 = smul.addr %s271, 8
      %s273 = scalar_lea.vmem %s0, %s272
      %p274 = scmp.lt.s32.totalorder %s18, 1
      %s275 = scalar_select %p274, %s18, 1
      %s276 = smul.addr %s275, 32
      %s277 = smul.addr %s276, 8
      %s278 = scalar_lea.vmem %s7, %s277
      %vm280 = vcmask 27648
      %281 = vst.msk [vmem:[#allocation2] sm:$0xf] %vm280, 0
      %282 = vst.msk [vmem:[#allocation2 + $0x4] sm:$0xf] %vm280, 0
      %vm283 = vcmask 24576
      %284 = vst.msk [vmem:[#allocation2 + $0x8] sm:$0x1] %vm283, 0
      %s285 = scalar_lea.vmem [#allocation2], 204
      %286 = vst.msk [vmem:[%s285] sm:$0xf] %vm280, 0
      %287 = vst.msk [vmem:[%s285 + $0x4] sm:$0xf] %vm280, 0
      %288 = vst.msk [vmem:[%s285 + $0x8] sm:$0x1] %vm283, 0
      %vm289 = vcmask 24576
      %vm290 = vsmask.f32 256
      %vm291 = vmand %vm289, %vm290
      %v292 = vld [vmem:[#allocation2] sm:$0x1]
      %v293 = vsel %vm291, 0, %v292
      %294 = vst [vmem:[#allocation2] sm:$0x1] %v293
      %v295 = vld [vmem:[#allocation2 + $0xc] sm:$0x1]
      %v296 = vsel %vm291, 0, %v295
      %297 = vst [vmem:[#allocation2 + $0xc] sm:$0x1] %v296
      %v298 = vld [vmem:[#allocation2 + $0x18] sm:$0x1]
      %v299 = vsel %vm291, 0, %v298
      %300 = vst [vmem:[#allocation2 + $0x18] sm:$0x1] %v299
      %v301 = vld [vmem:[#allocation2 + $0x24] sm:$0x1]
      %v302 = vsel %vm291, 0, %v301
      %303 = vst [vmem:[#allocation2 + $0x24] sm:$0x1] %v302
      %v304 = vld [vmem:[#allocation2 + $0x30] sm:$0x1]
      %v305 = vsel %vm291, 0, %v304
      %306 = vst [vmem:[#allocation2 + $0x30] sm:$0x1] %v305
      %v307 = vld [vmem:[#allocation2 + $0x3c] sm:$0x1]
      %v308 = vsel %vm291, 0, %v307
      %309 = vst [vmem:[#allocation2 + $0x3c] sm:$0x1] %v308
      %v310 = vld [vmem:[#allocation2 + $0x48] sm:$0x1]
      %v311 = vsel %vm291, 0, %v310
      %312 = vst [vmem:[#allocation2 + $0x48] sm:$0x1] %v311
      %v313 = vld [vmem:[#allocation2 + $0x54] sm:$0x1]
      %v314 = vsel %vm291, 0, %v313
      %315 = vst [vmem:[#allocation2 + $0x54] sm:$0x1] %v314
      %v316 = vld [vmem:[#allocation2 + $0x60] sm:$0x1]
      %v317 = vsel %vm291, 0, %v316
      %318 = vst [vmem:[#allocation2 + $0x60] sm:$0x1] %v317
      %v319 = vld [vmem:[#allocation2 + $0x6c] sm:$0x1]
      %v320 = vsel %vm291, 0, %v319
      %321 = vst [vmem:[#allocation2 + $0x6c] sm:$0x1] %v320
      %v322 = vld [vmem:[#allocation2 + $0x78] sm:$0x1]
      %v323 = vsel %vm291, 0, %v322
      %324 = vst [vmem:[#allocation2 + $0x78] sm:$0x1] %v323
      %v325 = vld [vmem:[#allocation2 + $0x84] sm:$0x1]
      %v326 = vsel %vm291, 0, %v325
      %327 = vst [vmem:[#allocation2 + $0x84] sm:$0x1] %v326
      %v328 = vld [vmem:[#allocation2 + $0x90] sm:$0x1]
      %v329 = vsel %vm291, 0, %v328
      %330 = vst [vmem:[#allocation2 + $0x90] sm:$0x1] %v329
      %v331 = vld [vmem:[#allocation2 + $0x9c] sm:$0x1]
      %v332 = vsel %vm291, 0, %v331
      %333 = vst [vmem:[#allocation2 + $0x9c] sm:$0x1] %v332
      %v334 = vld [vmem:[#allocation2 + $0xa8] sm:$0x1]
      %v335 = vsel %vm291, 0, %v334
      %336 = vst [vmem:[#allocation2 + $0xa8] sm:$0x1] %v335
      %v337 = vld [vmem:[#allocation2 + $0xb4] sm:$0x1]
      %v338 = vsel %vm291, 0, %v337
      %339 = vst [vmem:[#allocation2 + $0xb4] sm:$0x1] %v338
      %v340 = vld [vmem:[#allocation2 + $0xc0] sm:$0x1]
      %v341 = vsel %vm291, 0, %v340
      %342 = vst [vmem:[#allocation2 + $0xc0] sm:$0x1] %v341
      %v343 = vld [vmem:[#allocation2 + $0xcc] sm:$0x1]
      %v344 = vsel %vm291, 0, %v343
      %345 = vst [vmem:[#allocation2 + $0xcc] sm:$0x1] %v344
      %vm346 = vsmask.f32 7938
      %vm347 = vmand %vm289, %vm346
      %v348 = vld [vmem:[#allocation2 + $0x8] sm:$0x1]
      %v349 = vsel %vm347, 0, %v348
      %350 = vst [vmem:[#allocation2 + $0x8] sm:$0x1] %v349
      %v351 = vld [vmem:[#allocation2 + $0x14] sm:$0x1]
      %v352 = vsel %vm347, 0, %v351
      %353 = vst [vmem:[#allocation2 + $0x14] sm:$0x1] %v352
      %v354 = vld [vmem:[#allocation2 + $0x20] sm:$0x1]
      %v355 = vsel %vm347, 0, %v354
      %356 = vst [vmem:[#allocation2 + $0x20] sm:$0x1] %v355
      %v357 = vld [vmem:[#allocation2 + $0x2c] sm:$0x1]
      %v358 = vsel %vm347, 0, %v357
      %359 = vst [vmem:[#allocation2 + $0x2c] sm:$0x1] %v358
      %v360 = vld [vmem:[#allocation2 + $0x38] sm:$0x1]
      %v361 = vsel %vm347, 0, %v360
      %362 = vst [vmem:[#allocation2 + $0x38] sm:$0x1] %v361
      %v363 = vld [vmem:[#allocation2 + $0x44] sm:$0x1]
      %v364 = vsel %vm347, 0, %v363
      %365 = vst [vmem:[#allocation2 + $0x44] sm:$0x1] %v364
      %v366 = vld [vmem:[#allocation2 + $0x50] sm:$0x1]
      %v367 = vsel %vm347, 0, %v366
      %368 = vst [vmem:[#allocation2 + $0x50] sm:$0x1] %v367
      %v369 = vld [vmem:[#allocation2 + $0x5c] sm:$0x1]
      %v370 = vsel %vm347, 0, %v369
      %371 = vst [vmem:[#allocation2 + $0x5c] sm:$0x1] %v370
      %v372 = vld [vmem:[#allocation2 + $0x68] sm:$0x1]
      %v373 = vsel %vm347, 0, %v372
      %374 = vst [vmem:[#allocation2 + $0x68] sm:$0x1] %v373
      %v375 = vld [vmem:[#allocation2 + $0x74] sm:$0x1]
      %v376 = vsel %vm347, 0, %v375
      %377 = vst [vmem:[#allocation2 + $0x74] sm:$0x1] %v376
      %v378 = vld [vmem:[#allocation2 + $0x80] sm:$0x1]
      %v379 = vsel %vm347, 0, %v378
      %380 = vst [vmem:[#allocation2 + $0x80] sm:$0x1] %v379
      %v381 = vld [vmem:[#allocation2 + $0x8c] sm:$0x1]
      %v382 = vsel %vm347, 0, %v381
      %383 = vst [vmem:[#allocation2 + $0x8c] sm:$0x1] %v382
      %v384 = vld [vmem:[#allocation2 + $0x98] sm:$0x1]
      %v385 = vsel %vm347, 0, %v384
      %386 = vst [vmem:[#allocation2 + $0x98] sm:$0x1] %v385
      %v387 = vld [vmem:[#allocation2 + $0xa4] sm:$0x1]
      %v388 = vsel %vm347, 0, %v387
      %389 = vst [vmem:[#allocation2 + $0xa4] sm:$0x1] %v388
      %v390 = vld [vmem:[#allocation2 + $0xb0] sm:$0x1]
      %v391 = vsel %vm347, 0, %v390
      %392 = vst [vmem:[#allocation2 + $0xb0] sm:$0x1] %v391
      %v393 = vld [vmem:[#allocation2 + $0xbc] sm:$0x1]
      %v394 = vsel %vm347, 0, %v393
      %395 = vst [vmem:[#allocation2 + $0xbc] sm:$0x1] %v394
      %v396 = vld [vmem:[#allocation2 + $0xc8] sm:$0x1]
      %v397 = vsel %vm347, 0, %v396
      %398 = vst [vmem:[#allocation2 + $0xc8] sm:$0x1] %v397
      %v399 = vld [vmem:[#allocation2 + $0xd4] sm:$0x1]
      %v400 = vsel %vm347, 0, %v399
      %401 = vst [vmem:[#allocation2 + $0xd4] sm:$0x1] %v400
      %v402 = vld [vmem:[%s273] sm:$0xff]
      %v403 = vld [vmem:[%s273 + $0x8] sm:$0xff]
      %v404 = vld [vmem:[%s273 + $0x10] sm:$0xff]
      %v405 = vld [vmem:[%s273 + $0x18] sm:$0xff]
      %v406 = vld [vmem:[%s273 + $0x20] sm:$0xff]
      %v407 = vld [vmem:[%s273 + $0x28] sm:$0xff]
      %v408 = vld [vmem:[%s273 + $0x30] sm:$0xff]
      %v409 = vld [vmem:[%s273 + $0x38] sm:$0xff]
      %v410 = vld [vmem:[%s273 + $0x40] sm:$0xff]
      %v411 = vld [vmem:[%s273 + $0x48] sm:$0xff]
      %v412 = vld [vmem:[%s273 + $0x50] sm:$0xff]
      %v413 = vld [vmem:[%s273 + $0x58] sm:$0xff]
      %v414 = vld [vmem:[%s273 + $0x60] sm:$0xff]
      %v415 = vld [vmem:[%s273 + $0x68] sm:$0xff]
      %v416 = vld [vmem:[%s273 + $0x70] sm:$0xff]
      %v417 = vld [vmem:[%s273 + $0x78] sm:$0xff]
      %v418 = vld [vmem:[%s273 + $0x80] sm:$0xff]
      %v419 = vld [vmem:[%s273 + $0x88] sm:$0xff]
      %v420 = vld [vmem:[%s273 + $0x90] sm:$0xff]
      %v421 = vld [vmem:[%s273 + $0x98] sm:$0xff]
      %v422 = vld [vmem:[%s273 + $0xa0] sm:$0xff]
      %v423 = vld [vmem:[%s273 + $0xa8] sm:$0xff]
      %v424 = vld [vmem:[%s273 + $0xb0] sm:$0xff]
      %v425 = vld [vmem:[%s273 + $0xb8] sm:$0xff]
      %v426 = vld [vmem:[%s273 + $0xc0] sm:$0xff]
      %v427 = vld [vmem:[%s273 + $0xc8] sm:$0xff]
      %v428 = vld [vmem:[%s273 + $0xd0] sm:$0xff]
      %v429 = vld [vmem:[%s273 + $0xd8] sm:$0xff]
      %v430 = vld [vmem:[%s273 + $0xe0] sm:$0xff]
      %v431 = vld [vmem:[%s273 + $0xe8] sm:$0xff]
      %v432 = vld [vmem:[%s273 + $0xf0] sm:$0xff]
      %v433 = vld [vmem:[%s273 + $0xf8] sm:$0xff]
      %v434 = vpack.c.bf16 %v402, %v402
      %v435 = vpack.c.bf16 %v403, %v403
      %v436 = vpack.c.bf16 %v404, %v404
      %v437 = vpack.c.bf16 %v405, %v405
      %v438 = vpack.c.bf16 %v406, %v406
      %v439 = vpack.c.bf16 %v407, %v407
      %v440 = vpack.c.bf16 %v408, %v408
      %v441 = vpack.c.bf16 %v409, %v409
      %v442 = vpack.c.bf16 %v410, %v410
      %v443 = vpack.c.bf16 %v411, %v411
      %v444 = vpack.c.bf16 %v412, %v412
      %v445 = vpack.c.bf16 %v413, %v413
      %v446 = vpack.c.bf16 %v414, %v414
      %v447 = vpack.c.bf16 %v415, %v415
      %v448 = vpack.c.bf16 %v416, %v416
      %v449 = vpack.c.bf16 %v417, %v417
      %v450 = vpack.c.bf16 %v418, %v418
      %v451 = vpack.c.bf16 %v419, %v419
      %v452 = vpack.c.bf16 %v420, %v420
      %v453 = vpack.c.bf16 %v421, %v421
      %v454 = vpack.c.bf16 %v422, %v422
      %v455 = vpack.c.bf16 %v423, %v423
      %v456 = vpack.c.bf16 %v424, %v424
      %v457 = vpack.c.bf16 %v425, %v425
      %v458 = vpack.c.bf16 %v426, %v426
      %v459 = vpack.c.bf16 %v427, %v427
      %v460 = vpack.c.bf16 %v428, %v428
      %v461 = vpack.c.bf16 %v429, %v429
      %v462 = vpack.c.bf16 %v430, %v430
      %v463 = vpack.c.bf16 %v431, %v431
      %v464 = vpack.c.bf16 %v432, %v432
      %v465 = vpack.c.bf16 %v433, %v433
      %vm466 = vsmask.f32 4368
      %vm467 = vmor %vm290, %vm466
      %v469 = vshrl.u32 %v434, 16
      %v471 = vrot.slane %v469, 7
      %v472 = vshll.u32 %v434, 16
      %v474 = vor.u32 %v471, %v472
      %v475 = vrot.slane %v471, 4
      %v477 = vshrl.u32 %v435, 16
      %v479 = vrot.slane %v477, 7
      %v480 = vshll.u32 %v435, 16
      %v482 = vor.u32 %v479, %v480
      %v483 = vsel %vm467, %v475, %v482
      %v484 = vrot.slane %v479, 4
      %v486 = vshrl.u32 %v436, 16
      %v488 = vrot.slane %v486, 7
      %v489 = vshll.u32 %v436, 16
      %v491 = vor.u32 %v488, %v489
      %v492 = vrot.slane %v488, 4
      %v494 = vshrl.u32 %v437, 16
      %v496 = vrot.slane %v494, 7
      %v497 = vshll.u32 %v437, 16
      %v499 = vor.u32 %v496, %v497
      %v500 = vsel %vm467, %v492, %v499
      %v501 = vrot.slane %v496, 4
      %v503 = vshrl.u32 %v438, 16
      %v505 = vrot.slane %v503, 7
      %v506 = vshll.u32 %v438, 16
      %v508 = vor.u32 %v505, %v506
      %v509 = vrot.slane %v505, 4
      %v511 = vshrl.u32 %v439, 16
      %v513 = vrot.slane %v511, 7
      %v514 = vshll.u32 %v439, 16
      %v516 = vor.u32 %v513, %v514
      %v517 = vsel %vm467, %v509, %v516
      %v518 = vrot.slane %v513, 4
      %v520 = vshrl.u32 %v440, 16
      %v522 = vrot.slane %v520, 7
      %v523 = vshll.u32 %v440, 16
      %v525 = vor.u32 %v522, %v523
      %v526 = vrot.slane %v522, 4
      %v528 = vshrl.u32 %v441, 16
      %v530 = vrot.slane %v528, 7
      %v531 = vshll.u32 %v441, 16
      %v533 = vor.u32 %v530, %v531
      %v534 = vsel %vm467, %v526, %v533
      %v535 = vrot.slane %v530, 4
      %v537 = vshrl.u32 %v442, 16
      %v539 = vrot.slane %v537, 7
      %v540 = vshll.u32 %v442, 16
      %v542 = vor.u32 %v539, %v540
      %v543 = vrot.slane %v539, 4
      %v545 = vshrl.u32 %v443, 16
      %v547 = vrot.slane %v545, 7
      %v548 = vshll.u32 %v443, 16
      %v550 = vor.u32 %v547, %v548
      %v551 = vsel %vm467, %v543, %v550
      %v552 = vrot.slane %v547, 4
      %v554 = vshrl.u32 %v444, 16
      %v556 = vrot.slane %v554, 7
      %v557 = vshll.u32 %v444, 16
      %v559 = vor.u32 %v556, %v557
      %v560 = vrot.slane %v556, 4
      %v562 = vshrl.u32 %v445, 16
      %v564 = vrot.slane %v562, 7
      %v565 = vshll.u32 %v445, 16
      %v567 = vor.u32 %v564, %v565
      %v568 = vsel %vm467, %v560, %v567
      %v569 = vrot.slane %v564, 4
      %v571 = vshrl.u32 %v446, 16
      %v573 = vrot.slane %v571, 7
      %v574 = vshll.u32 %v446, 16
      %v576 = vor.u32 %v573, %v574
      %v577 = vrot.slane %v573, 4
      %v579 = vshrl.u32 %v447, 16
      %v581 = vrot.slane %v579, 7
      %v582 = vshll.u32 %v447, 16
      %v584 = vor.u32 %v581, %v582
      %v585 = vsel %vm467, %v577, %v584
      %v586 = vrot.slane %v581, 4
      %v588 = vshrl.u32 %v448, 16
      %v590 = vrot.slane %v588, 7
      %v591 = vshll.u32 %v448, 16
      %v593 = vor.u32 %v590, %v591
      %v594 = vrot.slane %v590, 4
      %v596 = vshrl.u32 %v449, 16
      %v598 = vrot.slane %v596, 7
      %v599 = vshll.u32 %v449, 16
      %v601 = vor.u32 %v598, %v599
      %v602 = vsel %vm467, %v594, %v601
      %v603 = vrot.slane %v598, 4
      %v605 = vshrl.u32 %v450, 16
      %v607 = vrot.slane %v605, 7
      %v608 = vshll.u32 %v450, 16
      %v610 = vor.u32 %v607, %v608
      %v611 = vrot.slane %v607, 4
      %v613 = vshrl.u32 %v451, 16
      %v615 = vrot.slane %v613, 7
      %v616 = vshll.u32 %v451, 16
      %v618 = vor.u32 %v615, %v616
      %v619 = vsel %vm467, %v611, %v618
      %v620 = vrot.slane %v615, 4
      %v622 = vshrl.u32 %v452, 16
      %v624 = vrot.slane %v622, 7
      %v625 = vshll.u32 %v452, 16
      %v627 = vor.u32 %v624, %v625
      %v628 = vrot.slane %v624, 4
      %v630 = vshrl.u32 %v453, 16
      %v632 = vrot.slane %v630, 7
      %v633 = vshll.u32 %v453, 16
      %v635 = vor.u32 %v632, %v633
      %v636 = vsel %vm467, %v628, %v635
      %v637 = vrot.slane %v632, 4
      %v639 = vshrl.u32 %v454, 16
      %v641 = vrot.slane %v639, 7
      %v642 = vshll.u32 %v454, 16
      %v644 = vor.u32 %v641, %v642
      %v645 = vrot.slane %v641, 4
      %v647 = vshrl.u32 %v455, 16
      %v649 = vrot.slane %v647, 7
      %v650 = vshll.u32 %v455, 16
      %v652 = vor.u32 %v649, %v650
      %v653 = vsel %vm467, %v645, %v652
      %v654 = vrot.slane %v649, 4
      %v656 = vshrl.u32 %v456, 16
      %v658 = vrot.slane %v656, 7
      %v659 = vshll.u32 %v456, 16
      %v661 = vor.u32 %v658, %v659
      %v662 = vrot.slane %v658, 4
      %v664 = vshrl.u32 %v457, 16
      %v666 = vrot.slane %v664, 7
      %v667 = vshll.u32 %v457, 16
      %v669 = vor.u32 %v666, %v667
      %v670 = vsel %vm467, %v662, %v669
      %v671 = vrot.slane %v666, 4
      %v673 = vshrl.u32 %v458, 16
      %v675 = vrot.slane %v673, 7
      %v676 = vshll.u32 %v458, 16
      %v678 = vor.u32 %v675, %v676
      %v679 = vrot.slane %v675, 4
      %v681 = vshrl.u32 %v459, 16
      %v683 = vrot.slane %v681, 7
      %v684 = vshll.u32 %v459, 16
      %v686 = vor.u32 %v683, %v684
      %v687 = vsel %vm467, %v679, %v686
      %v688 = vrot.slane %v683, 4
      %v690 = vshrl.u32 %v460, 16
      %v692 = vrot.slane %v690, 7
      %v693 = vshll.u32 %v460, 16
      %v695 = vor.u32 %v692, %v693
      %v696 = vrot.slane %v692, 4
      %v698 = vshrl.u32 %v461, 16
      %v700 = vrot.slane %v698, 7
      %v701 = vshll.u32 %v461, 16
      %v703 = vor.u32 %v700, %v701
      %v704 = vsel %vm467, %v696, %v703
      %v705 = vrot.slane %v700, 4
      %v707 = vshrl.u32 %v462, 16
      %v709 = vrot.slane %v707, 7
      %v710 = vshll.u32 %v462, 16
      %v712 = vor.u32 %v709, %v710
      %v713 = vrot.slane %v709, 4
      %v715 = vshrl.u32 %v463, 16
      %v717 = vrot.slane %v715, 7
      %v718 = vshll.u32 %v463, 16
      %v720 = vor.u32 %v717, %v718
      %v721 = vsel %vm467, %v713, %v720
      %v722 = vrot.slane %v717, 4
      %v724 = vshrl.u32 %v464, 16
      %v726 = vrot.slane %v724, 7
      %v727 = vshll.u32 %v464, 16
      %v729 = vor.u32 %v726, %v727
      %v730 = vrot.slane %v726, 4
      %v732 = vshrl.u32 %v465, 16
      %v734 = vrot.slane %v732, 7
      %v735 = vshll.u32 %v465, 16
      %v737 = vor.u32 %v734, %v735
      %v738 = vsel %vm467, %v730, %v737
      %v739 = vrot.slane %v734, 4
      %s788 = scalar_lea.vmem [#allocation2], 12
      %vm789 = vcmask 27648
      %vm790 = vmand %vm789, %vm346
      %v791 = vld [vmem:[%s788] sm:$0xf]
      %v792 = vsel %vm790, %v474, %v791
      %793 = vst [vmem:[%s788] sm:$0xf] %v792
      %794 = vst.msk [vmem:[%s788 + $0x4] sm:$0xf] %vm280, %v483
      %v795 = vld [vmem:[%s788 + $0x8] sm:$0x1]
      %v796 = vsel %vm291, %v484, %v795
      %797 = vst [vmem:[%s788 + $0x8] sm:$0x1] %v796
      %v798 = vld [vmem:[%s788 + $0xc] sm:$0xf]
      %v799 = vsel %vm790, %v491, %v798
      %800 = vst [vmem:[%s788 + $0xc] sm:$0xf] %v799
      %801 = vst.msk [vmem:[%s788 + $0x10] sm:$0xf] %vm280, %v500
      %v802 = vld [vmem:[%s788 + $0x14] sm:$0x1]
      %v803 = vsel %vm291, %v501, %v802
      %804 = vst [vmem:[%s788 + $0x14] sm:$0x1] %v803
      %v805 = vld [vmem:[%s788 + $0x18] sm:$0xf]
      %v806 = vsel %vm790, %v508, %v805
      %807 = vst [vmem:[%s788 + $0x18] sm:$0xf] %v806
      %808 = vst.msk [vmem:[%s788 + $0x1c] sm:$0xf] %vm280, %v517
      %v809 = vld [vmem:[%s788 + $0x20] sm:$0x1]
      %v810 = vsel %vm291, %v518, %v809
      %811 = vst [vmem:[%s788 + $0x20] sm:$0x1] %v810
      %v812 = vld [vmem:[%s788 + $0x24] sm:$0xf]
      %v813 = vsel %vm790, %v525, %v812
      %814 = vst [vmem:[%s788 + $0x24] sm:$0xf] %v813
      %815 = vst.msk [vmem:[%s788 + $0x28] sm:$0xf] %vm280, %v534
      %v816 = vld [vmem:[%s788 + $0x2c] sm:$0x1]
      %v817 = vsel %vm291, %v535, %v816
      %818 = vst [vmem:[%s788 + $0x2c] sm:$0x1] %v817
      %v819 = vld [vmem:[%s788 + $0x30] sm:$0xf]
      %v820 = vsel %vm790, %v542, %v819
      %821 = vst [vmem:[%s788 + $0x30] sm:$0xf] %v820
      %822 = vst.msk [vmem:[%s788 + $0x34] sm:$0xf] %vm280, %v551
      %v823 = vld [vmem:[%s788 + $0x38] sm:$0x1]
      %v824 = vsel %vm291, %v552, %v823
      %825 = vst [vmem:[%s788 + $0x38] sm:$0x1] %v824
      %v826 = vld [vmem:[%s788 + $0x3c] sm:$0xf]
      %v827 = vsel %vm790, %v559, %v826
      %828 = vst [vmem:[%s788 + $0x3c] sm:$0xf] %v827
      %829 = vst.msk [vmem:[%s788 + $0x40] sm:$0xf] %vm280, %v568
      %v830 = vld [vmem:[%s788 + $0x44] sm:$0x1]
      %v831 = vsel %vm291, %v569, %v830
      %832 = vst [vmem:[%s788 + $0x44] sm:$0x1] %v831
      %v833 = vld [vmem:[%s788 + $0x48] sm:$0xf]
      %v834 = vsel %vm790, %v576, %v833
      %835 = vst [vmem:[%s788 + $0x48] sm:$0xf] %v834
      %836 = vst.msk [vmem:[%s788 + $0x4c] sm:$0xf] %vm280, %v585
      %v837 = vld [vmem:[%s788 + $0x50] sm:$0x1]
      %v838 = vsel %vm291, %v586, %v837
      %839 = vst [vmem:[%s788 + $0x50] sm:$0x1] %v838
      %v840 = vld [vmem:[%s788 + $0x54] sm:$0xf]
      %v841 = vsel %vm790, %v593, %v840
      %842 = vst [vmem:[%s788 + $0x54] sm:$0xf] %v841
      %843 = vst.msk [vmem:[%s788 + $0x58] sm:$0xf] %vm280, %v602
      %v844 = vld [vmem:[%s788 + $0x5c] sm:$0x1]
      %v845 = vsel %vm291, %v603, %v844
      %846 = vst [vmem:[%s788 + $0x5c] sm:$0x1] %v845
      %v847 = vld [vmem:[%s788 + $0x60] sm:$0xf]
      %v848 = vsel %vm790, %v610, %v847
      %849 = vst [vmem:[%s788 + $0x60] sm:$0xf] %v848
      %850 = vst.msk [vmem:[%s788 + $0x64] sm:$0xf] %vm280, %v619
      %v851 = vld [vmem:[%s788 + $0x68] sm:$0x1]
      %v852 = vsel %vm291, %v620, %v851
      %853 = vst [vmem:[%s788 + $0x68] sm:$0x1] %v852
      %v854 = vld [vmem:[%s788 + $0x6c] sm:$0xf]
      %v855 = vsel %vm790, %v627, %v854
      %856 = vst [vmem:[%s788 + $0x6c] sm:$0xf] %v855
      %857 = vst.msk [vmem:[%s788 + $0x70] sm:$0xf] %vm280, %v636
      %v858 = vld [vmem:[%s788 + $0x74] sm:$0x1]
      %v859 = vsel %vm291, %v637, %v858
      %860 = vst [vmem:[%s788 + $0x74] sm:$0x1] %v859
      %v861 = vld [vmem:[%s788 + $0x78] sm:$0xf]
      %v862 = vsel %vm790, %v644, %v861
      %863 = vst [vmem:[%s788 + $0x78] sm:$0xf] %v862
      %864 = vst.msk [vmem:[%s788 + $0x7c] sm:$0xf] %vm280, %v653
      %v865 = vld [vmem:[%s788 + $0x80] sm:$0x1]
      %v866 = vsel %vm291, %v654, %v865
      %867 = vst [vmem:[%s788 + $0x80] sm:$0x1] %v866
      %v868 = vld [vmem:[%s788 + $0x84] sm:$0xf]
      %v869 = vsel %vm790, %v661, %v868
      %870 = vst [vmem:[%s788 + $0x84] sm:$0xf] %v869
      %871 = vst.msk [vmem:[%s788 + $0x88] sm:$0xf] %vm280, %v670
      %v872 = vld [vmem:[%s788 + $0x8c] sm:$0x1]
      %v873 = vsel %vm291, %v671, %v872
      %874 = vst [vmem:[%s788 + $0x8c] sm:$0x1] %v873
      %v875 = vld [vmem:[%s788 + $0x90] sm:$0xf]
      %v876 = vsel %vm790, %v678, %v875
      %877 = vst [vmem:[%s788 + $0x90] sm:$0xf] %v876
      %878 = vst.msk [vmem:[%s788 + $0x94] sm:$0xf] %vm280, %v687
      %v879 = vld [vmem:[%s788 + $0x98] sm:$0x1]
      %v880 = vsel %vm291, %v688, %v879
      %881 = vst [vmem:[%s788 + $0x98] sm:$0x1] %v880
      %v882 = vld [vmem:[%s788 + $0x9c] sm:$0xf]
      %v883 = vsel %vm790, %v695, %v882
      %884 = vst [vmem:[%s788 + $0x9c] sm:$0xf] %v883
      %885 = vst.msk [vmem:[%s788 + $0xa0] sm:$0xf] %vm280, %v704
      %v886 = vld [vmem:[%s788 + $0xa4] sm:$0x1]
      %v887 = vsel %vm291, %v705, %v886
      %888 = vst [vmem:[%s788 + $0xa4] sm:$0x1] %v887
      %v889 = vld [vmem:[%s788 + $0xa8] sm:$0xf]
      %v890 = vsel %vm790, %v712, %v889
      %891 = vst [vmem:[%s788 + $0xa8] sm:$0xf] %v890
      %892 = vst.msk [vmem:[%s788 + $0xac] sm:$0xf] %vm280, %v721
      %v893 = vld [vmem:[%s788 + $0xb0] sm:$0x1]
      %v894 = vsel %vm291, %v722, %v893
      %895 = vst [vmem:[%s788 + $0xb0] sm:$0x1] %v894
      %v896 = vld [vmem:[%s788 + $0xb4] sm:$0xf]
      %v897 = vsel %vm790, %v729, %v896
      %898 = vst [vmem:[%s788 + $0xb4] sm:$0xf] %v897
      %899 = vst.msk [vmem:[%s788 + $0xb8] sm:$0xf] %vm280, %v738
      %v900 = vld [vmem:[%s788 + $0xbc] sm:$0x1]
      %v901 = vsel %vm291, %v739, %v900
      %902 = vst [vmem:[%s788 + $0xbc] sm:$0x1] %v901
      %v903 = vld [vmem:[#allocation2] sm:$0xf]
      %v904 = vld [vmem:[#allocation2 + $0x4] sm:$0xf]
      %v905 = vld [vmem:[#allocation2 + $0xc] sm:$0xf]
      %v906 = vld [vmem:[#allocation2 + $0x10] sm:$0xf]
      %v907 = vld [vmem:[#allocation2 + $0x18] sm:$0xf]
      %v908 = vld [vmem:[#allocation2 + $0x1c] sm:$0xf]
      %v909 = vld [vmem:[#allocation2 + $0x24] sm:$0xf]
      %v910 = vld [vmem:[#allocation2 + $0x28] sm:$0xf]
      %v911 = vld [vmem:[#allocation2 + $0x30] sm:$0xf]
      %v912 = vld [vmem:[#allocation2 + $0x34] sm:$0xf]
      %v913 = vld [vmem:[#allocation2 + $0x3c] sm:$0xf]
      %v914 = vld [vmem:[#allocation2 + $0x40] sm:$0xf]
      %v915 = vld [vmem:[#allocation2 + $0x48] sm:$0xf]
      %v916 = vld [vmem:[#allocation2 + $0x4c] sm:$0xf]
      %v917 = vld [vmem:[#allocation2 + $0x54] sm:$0xf]
      %v918 = vld [vmem:[#allocation2 + $0x58] sm:$0xf]
      %v919 = vld [vmem:[#allocation2 + $0x60] sm:$0xf]
      %v920 = vld [vmem:[#allocation2 + $0x64] sm:$0xf]
      %v921 = vld [vmem:[#allocation2 + $0x6c] sm:$0xf]
      %v922 = vld [vmem:[#allocation2 + $0x70] sm:$0xf]
      %v923 = vld [vmem:[#allocation2 + $0x78] sm:$0xf]
      %v924 = vld [vmem:[#allocation2 + $0x7c] sm:$0xf]
      %v925 = vld [vmem:[#allocation2 + $0x84] sm:$0xf]
      %v926 = vld [vmem:[#allocation2 + $0x88] sm:$0xf]
      %v927 = vld [vmem:[#allocation2 + $0x90] sm:$0xf]
      %v928 = vld [vmem:[#allocation2 + $0x94] sm:$0xf]
      %v929 = vld [vmem:[#allocation2 + $0x9c] sm:$0xf]
      %v930 = vld [vmem:[#allocation2 + $0xa0] sm:$0xf]
      %v931 = vld [vmem:[#allocation2 + $0xa8] sm:$0xf]
      %v932 = vld [vmem:[#allocation2 + $0xac] sm:$0xf]
      %v933 = vld [vmem:[#allocation2 + $0xb4] sm:$0xf]
      %v934 = vld [vmem:[#allocation2 + $0xb8] sm:$0xf]
      %v935 = vld [vmem:[#allocation2 + $0x8] sm:$0x1]
      %v936 = vld [vmem:[#allocation2 + $0x14] sm:$0x1]
      %v937 = vld [vmem:[#allocation2 + $0x20] sm:$0x1]
      %v938 = vld [vmem:[#allocation2 + $0x2c] sm:$0x1]
      %v939 = vld [vmem:[#allocation2 + $0x38] sm:$0x1]
      %v940 = vld [vmem:[#allocation2 + $0x44] sm:$0x1]
      %v941 = vld [vmem:[#allocation2 + $0x50] sm:$0x1]
      %v942 = vld [vmem:[#allocation2 + $0x5c] sm:$0x1]
      %v943 = vld [vmem:[#allocation2 + $0x68] sm:$0x1]
      %v944 = vld [vmem:[#allocation2 + $0x74] sm:$0x1]
      %v945 = vld [vmem:[#allocation2 + $0x80] sm:$0x1]
      %v946 = vld [vmem:[#allocation2 + $0x8c] sm:$0x1]
      %v947 = vld [vmem:[#allocation2 + $0x98] sm:$0x1]
      %v948 = vld [vmem:[#allocation2 + $0xa4] sm:$0x1]
      %v949 = vld [vmem:[#allocation2 + $0xb0] sm:$0x1]
      %v950 = vld [vmem:[#allocation2 + $0xbc] sm:$0x1]
      %v951 = vld [vmem:[#allocation2] sm:$0xe]
      %v952 = vld [vmem:[#allocation2 + $0xc] sm:$0xe]
      %v953 = vld [vmem:[#allocation2 + $0x18] sm:$0xe]
      %v954 = vld [vmem:[#allocation2 + $0x24] sm:$0xe]
      %v955 = vld [vmem:[#allocation2 + $0x30] sm:$0xe]
      %v956 = vld [vmem:[#allocation2 + $0x3c] sm:$0xe]
      %v957 = vld [vmem:[#allocation2 + $0x48] sm:$0xe]
      %v958 = vld [vmem:[#allocation2 + $0x54] sm:$0xe]
      %v959 = vld [vmem:[#allocation2 + $0x60] sm:$0xe]
      %v960 = vld [vmem:[#allocation2 + $0x6c] sm:$0xe]
      %v961 = vld [vmem:[#allocation2 + $0x78] sm:$0xe]
      %v962 = vld [vmem:[#allocation2 + $0x84] sm:$0xe]
      %v963 = vld [vmem:[#allocation2 + $0x90] sm:$0xe]
      %v964 = vld [vmem:[#allocation2 + $0x9c] sm:$0xe]
      %v965 = vld [vmem:[#allocation2 + $0xa8] sm:$0xe]
      %v966 = vld [vmem:[#allocation2 + $0xb4] sm:$0xe]
      %v967 = vld [vmem:[%s788] sm:$0xf]
      %v968 = vld [vmem:[%s788 + $0x4] sm:$0xf]
      %v969 = vld [vmem:[%s788 + $0xc] sm:$0xf]
      %v970 = vld [vmem:[%s788 + $0x10] sm:$0xf]
      %v971 = vld [vmem:[%s788 + $0x18] sm:$0xf]
      %v972 = vld [vmem:[%s788 + $0x1c] sm:$0xf]
      %v973 = vld [vmem:[%s788 + $0x24] sm:$0xf]
      %v974 = vld [vmem:[%s788 + $0x28] sm:$0xf]
      %v975 = vld [vmem:[%s788 + $0x30] sm:$0xf]
      %v976 = vld [vmem:[%s788 + $0x34] sm:$0xf]
      %v977 = vld [vmem:[%s788 + $0x3c] sm:$0xf]
      %v978 = vld [vmem:[%s788 + $0x40] sm:$0xf]
      %v979 = vld [vmem:[%s788 + $0x48] sm:$0xf]
      %v980 = vld [vmem:[%s788 + $0x4c] sm:$0xf]
      %v981 = vld [vmem:[%s788 + $0x54] sm:$0xf]
      %v982 = vld [vmem:[%s788 + $0x58] sm:$0xf]
      %v983 = vld [vmem:[%s788 + $0x60] sm:$0xf]
      %v984 = vld [vmem:[%s788 + $0x64] sm:$0xf]
      %v985 = vld [vmem:[%s788 + $0x6c] sm:$0xf]
      %v986 = vld [vmem:[%s788 + $0x70] sm:$0xf]
      %v987 = vld [vmem:[%s788 + $0x78] sm:$0xf]
      %v988 = vld [vmem:[%s788 + $0x7c] sm:$0xf]
      %v989 = vld [vmem:[%s788 + $0x84] sm:$0xf]
      %v990 = vld [vmem:[%s788 + $0x88] sm:$0xf]
      %v991 = vld [vmem:[%s788 + $0x90] sm:$0xf]
      %v992 = vld [vmem:[%s788 + $0x94] sm:$0xf]
      %v993 = vld [vmem:[%s788 + $0x9c] sm:$0xf]
      %v994 = vld [vmem:[%s788 + $0xa0] sm:$0xf]
      %v995 = vld [vmem:[%s788 + $0xa8] sm:$0xf]
      %v996 = vld [vmem:[%s788 + $0xac] sm:$0xf]
      %v997 = vld [vmem:[%s788 + $0xb4] sm:$0xf]
      %v998 = vld [vmem:[%s788 + $0xb8] sm:$0xf]
      %v999 = vld [vmem:[%s788 + $0x8] sm:$0x1]
      %v1000 = vld [vmem:[%s788 + $0x14] sm:$0x1]
      %v1001 = vld [vmem:[%s788 + $0x20] sm:$0x1]
      %v1002 = vld [vmem:[%s788 + $0x2c] sm:$0x1]
      %v1003 = vld [vmem:[%s788 + $0x38] sm:$0x1]
      %v1004 = vld [vmem:[%s788 + $0x44] sm:$0x1]
      %v1005 = vld [vmem:[%s788 + $0x50] sm:$0x1]
      %v1006 = vld [vmem:[%s788 + $0x5c] sm:$0x1]
      %v1007 = vld [vmem:[%s788 + $0x68] sm:$0x1]
      %v1008 = vld [vmem:[%s788 + $0x74] sm:$0x1]
      %v1009 = vld [vmem:[%s788 + $0x80] sm:$0x1]
      %v1010 = vld [vmem:[%s788 + $0x8c] sm:$0x1]
      %v1011 = vld [vmem:[%s788 + $0x98] sm:$0x1]
      %v1012 = vld [vmem:[%s788 + $0xa4] sm:$0x1]
      %v1013 = vld [vmem:[%s788 + $0xb0] sm:$0x1]
      %v1014 = vld [vmem:[%s788 + $0xbc] sm:$0x1]
      %v1015 = vld [vmem:[%s788] sm:$0xe]
      %v1016 = vld [vmem:[%s788 + $0xc] sm:$0xe]
      %v1017 = vld [vmem:[%s788 + $0x18] sm:$0xe]
      %v1018 = vld [vmem:[%s788 + $0x24] sm:$0xe]
      %v1019 = vld [vmem:[%s788 + $0x30] sm:$0xe]
      %v1020 = vld [vmem:[%s788 + $0x3c] sm:$0xe]
      %v1021 = vld [vmem:[%s788 + $0x48] sm:$0xe]
      %v1022 = vld [vmem:[%s788 + $0x54] sm:$0xe]
      %v1023 = vld [vmem:[%s788 + $0x60] sm:$0xe]
      %v1024 = vld [vmem:[%s788 + $0x6c] sm:$0xe]
      %v1025 = vld [vmem:[%s788 + $0x78] sm:$0xe]
      %v1026 = vld [vmem:[%s788 + $0x84] sm:$0xe]
      %v1027 = vld [vmem:[%s788 + $0x90] sm:$0xe]
      %v1028 = vld [vmem:[%s788 + $0x9c] sm:$0xe]
      %v1029 = vld [vmem:[%s788 + $0xa8] sm:$0xe]
      %v1030 = vld [vmem:[%s788 + $0xb4] sm:$0xe]
      %s1031 = scalar_lea.vmem [#allocation2], 24
      %v1032 = vld [vmem:[%s1031] sm:$0xf]
      %v1033 = vld [vmem:[%s1031 + $0x4] sm:$0xf]
      %v1034 = vld [vmem:[%s1031 + $0xc] sm:$0xf]
      %v1035 = vld [vmem:[%s1031 + $0x10] sm:$0xf]
      %v1036 = vld [vmem:[%s1031 + $0x18] sm:$0xf]
      %v1037 = vld [vmem:[%s1031 + $0x1c] sm:$0xf]
      %v1038 = vld [vmem:[%s1031 + $0x24] sm:$0xf]
      %v1039 = vld [vmem:[%s1031 + $0x28] sm:$0xf]
      %v1040 = vld [vmem:[%s1031 + $0x30] sm:$0xf]
      %v1041 = vld [vmem:[%s1031 + $0x34] sm:$0xf]
      %v1042 = vld [vmem:[%s1031 + $0x3c] sm:$0xf]
      %v1043 = vld [vmem:[%s1031 + $0x40] sm:$0xf]
      %v1044 = vld [vmem:[%s1031 + $0x48] sm:$0xf]
      %v1045 = vld [vmem:[%s1031 + $0x4c] sm:$0xf]
      %v1046 = vld [vmem:[%s1031 + $0x54] sm:$0xf]
      %v1047 = vld [vmem:[%s1031 + $0x58] sm:$0xf]
      %v1048 = vld [vmem:[%s1031 + $0x60] sm:$0xf]
      %v1049 = vld [vmem:[%s1031 + $0x64] sm:$0xf]
      %v1050 = vld [vmem:[%s1031 + $0x6c] sm:$0xf]
      %v1051 = vld [vmem:[%s1031 + $0x70] sm:$0xf]
      %v1052 = vld [vmem:[%s1031 + $0x78] sm:$0xf]
      %v1053 = vld [vmem:[%s1031 + $0x7c] sm:$0xf]
      %v1054 = vld [vmem:[%s1031 + $0x84] sm:$0xf]
      %v1055 = vld [vmem:[%s1031 + $0x88] sm:$0xf]
      %v1056 = vld [vmem:[%s1031 + $0x90] sm:$0xf]
      %v1057 = vld [vmem:[%s1031 + $0x94] sm:$0xf]
      %v1058 = vld [vmem:[%s1031 + $0x9c] sm:$0xf]
      %v1059 = vld [vmem:[%s1031 + $0xa0] sm:$0xf]
      %v1060 = vld [vmem:[%s1031 + $0xa8] sm:$0xf]
      %v1061 = vld [vmem:[%s1031 + $0xac] sm:$0xf]
      %v1062 = vld [vmem:[%s1031 + $0xb4] sm:$0xf]
      %v1063 = vld [vmem:[%s1031 + $0xb8] sm:$0xf]
      %v1064 = vld [vmem:[%s1031 + $0x8] sm:$0x1]
      %v1065 = vld [vmem:[%s1031 + $0x14] sm:$0x1]
      %v1066 = vld [vmem:[%s1031 + $0x20] sm:$0x1]
      %v1067 = vld [vmem:[%s1031 + $0x2c] sm:$0x1]
      %v1068 = vld [vmem:[%s1031 + $0x38] sm:$0x1]
      %v1069 = vld [vmem:[%s1031 + $0x44] sm:$0x1]
      %v1070 = vld [vmem:[%s1031 + $0x50] sm:$0x1]
      %v1071 = vld [vmem:[%s1031 + $0x5c] sm:$0x1]
      %v1072 = vld [vmem:[%s1031 + $0x68] sm:$0x1]
      %v1073 = vld [vmem:[%s1031 + $0x74] sm:$0x1]
      %v1074 = vld [vmem:[%s1031 + $0x80] sm:$0x1]
      %v1075 = vld [vmem:[%s1031 + $0x8c] sm:$0x1]
      %v1076 = vld [vmem:[%s1031 + $0x98] sm:$0x1]
      %v1077 = vld [vmem:[%s1031 + $0xa4] sm:$0x1]
      %v1078 = vld [vmem:[%s1031 + $0xb0] sm:$0x1]
      %v1079 = vld [vmem:[%s1031 + $0xbc] sm:$0x1]
      %v1080 = vld [vmem:[%s1031] sm:$0xe]
      %v1081 = vld [vmem:[%s1031 + $0xc] sm:$0xe]
      %v1082 = vld [vmem:[%s1031 + $0x18] sm:$0xe]
      %v1083 = vld [vmem:[%s1031 + $0x24] sm:$0xe]
      %v1084 = vld [vmem:[%s1031 + $0x30] sm:$0xe]
      %v1085 = vld [vmem:[%s1031 + $0x3c] sm:$0xe]
      %v1086 = vld [vmem:[%s1031 + $0x48] sm:$0xe]
      %v1087 = vld [vmem:[%s1031 + $0x54] sm:$0xe]
      %v1088 = vld [vmem:[%s1031 + $0x60] sm:$0xe]
      %v1089 = vld [vmem:[%s1031 + $0x6c] sm:$0xe]
      %v1090 = vld [vmem:[%s1031 + $0x78] sm:$0xe]
      %v1091 = vld [vmem:[%s1031 + $0x84] sm:$0xe]
      %v1092 = vld [vmem:[%s1031 + $0x90] sm:$0xe]
      %v1093 = vld [vmem:[%s1031 + $0x9c] sm:$0xe]
      %v1094 = vld [vmem:[%s1031 + $0xa8] sm:$0xe]
      %v1095 = vld [vmem:[%s1031 + $0xb4] sm:$0xe]
      %v1128 = vunpack.c.l.b16 %v903
      %v1129 = vunpack.c.l.b16 %v904
      %v1130 = vunpack.c.l.b16 %v905
      %v1131 = vunpack.c.l.b16 %v906
      %v1132 = vunpack.c.l.b16 %v907
      %v1133 = vunpack.c.l.b16 %v908
      %v1134 = vunpack.c.l.b16 %v909
      %v1135 = vunpack.c.l.b16 %v910
      %v1136 = vunpack.c.l.b16 %v911
      %v1137 = vunpack.c.l.b16 %v912
      %v1138 = vunpack.c.l.b16 %v913
      %v1139 = vunpack.c.l.b16 %v914
      %v1140 = vunpack.c.l.b16 %v915
      %v1141 = vunpack.c.l.b16 %v916
      %v1142 = vunpack.c.l.b16 %v917
      %v1143 = vunpack.c.l.b16 %v918
      %v1144 = vunpack.c.l.b16 %v919
      %v1145 = vunpack.c.l.b16 %v920
      %v1146 = vunpack.c.l.b16 %v921
      %v1147 = vunpack.c.l.b16 %v922
      %v1148 = vunpack.c.l.b16 %v923
      %v1149 = vunpack.c.l.b16 %v924
      %v1150 = vunpack.c.l.b16 %v925
      %v1151 = vunpack.c.l.b16 %v926
      %v1152 = vunpack.c.l.b16 %v927
      %v1153 = vunpack.c.l.b16 %v928
      %v1154 = vunpack.c.l.b16 %v929
      %v1155 = vunpack.c.l.b16 %v930
      %v1156 = vunpack.c.l.b16 %v931
      %v1157 = vunpack.c.l.b16 %v932
      %v1158 = vunpack.c.l.b16 %v933
      %v1159 = vunpack.c.l.b16 %v934
      %v1160 = vpack.c.b16 %v1129, %v1128
      %v1161 = vpack.c.b16 %v1131, %v1130
      %v1162 = vpack.c.b16 %v1133, %v1132
      %v1163 = vpack.c.b16 %v1135, %v1134
      %v1164 = vpack.c.b16 %v1137, %v1136
      %v1165 = vpack.c.b16 %v1139, %v1138
      %v1166 = vpack.c.b16 %v1141, %v1140
      %v1167 = vpack.c.b16 %v1143, %v1142
      %v1168 = vpack.c.b16 %v1145, %v1144
      %v1169 = vpack.c.b16 %v1147, %v1146
      %v1170 = vpack.c.b16 %v1149, %v1148
      %v1171 = vpack.c.b16 %v1151, %v1150
      %v1172 = vpack.c.b16 %v1153, %v1152
      %v1173 = vpack.c.b16 %v1155, %v1154
      %v1174 = vpack.c.b16 %v1157, %v1156
      %v1175 = vpack.c.b16 %v1159, %v1158
      %v1192 = vunpack.c.l.b16 %v935
      %v1193 = vunpack.c.l.b16 %v936
      %v1194 = vunpack.c.l.b16 %v937
      %v1195 = vunpack.c.l.b16 %v938
      %v1196 = vunpack.c.l.b16 %v939
      %v1197 = vunpack.c.l.b16 %v940
      %v1198 = vunpack.c.l.b16 %v941
      %v1199 = vunpack.c.l.b16 %v942
      %v1200 = vunpack.c.l.b16 %v943
      %v1201 = vunpack.c.l.b16 %v944
      %v1202 = vunpack.c.l.b16 %v945
      %v1203 = vunpack.c.l.b16 %v946
      %v1204 = vunpack.c.l.b16 %v947
      %v1205 = vunpack.c.l.b16 %v948
      %v1206 = vunpack.c.l.b16 %v949
      %v1207 = vunpack.c.l.b16 %v950
      %v1208 = vpack.c.b16 %v1192, %v1192
      %v1209 = vpack.c.b16 %v1193, %v1193
      %v1210 = vpack.c.b16 %v1194, %v1194
      %v1211 = vpack.c.b16 %v1195, %v1195
      %v1212 = vpack.c.b16 %v1196, %v1196
      %v1213 = vpack.c.b16 %v1197, %v1197
      %v1214 = vpack.c.b16 %v1198, %v1198
      %v1215 = vpack.c.b16 %v1199, %v1199
      %v1216 = vpack.c.b16 %v1200, %v1200
      %v1217 = vpack.c.b16 %v1201, %v1201
      %v1218 = vpack.c.b16 %v1202, %v1202
      %v1219 = vpack.c.b16 %v1203, %v1203
      %v1220 = vpack.c.b16 %v1204, %v1204
      %v1221 = vpack.c.b16 %v1205, %v1205
      %v1222 = vpack.c.b16 %v1206, %v1206
      %v1223 = vpack.c.b16 %v1207, %v1207
      %vm1224 = vsmask.f32 7424
      %v1226 = vshrl.u32 %v1160, 16
      %v1228 = vshll.u32 %v1160, 16
      %v1230 = vrot.slane %v1228, 1
      %v1231 = vor.u32 %v1226, %v1230
      %v1233 = vshll.u32 %v1208, 16
      %v1235 = vrot.slane %v1233, 1
      %v1236 = vsel %vm1224, %v1231, %v1235
      %v1238 = vshrl.u32 %v1161, 16
      %v1240 = vshll.u32 %v1161, 16
      %v1242 = vrot.slane %v1240, 1
      %v1243 = vor.u32 %v1238, %v1242
      %v1245 = vshll.u32 %v1209, 16
      %v1247 = vrot.slane %v1245, 1
      %v1248 = vsel %vm1224, %v1243, %v1247
      %v1250 = vshrl.u32 %v1162, 16
      %v1252 = vshll.u32 %v1162, 16
      %v1254 = vrot.slane %v1252, 1
      %v1255 = vor.u32 %v1250, %v1254
      %v1257 = vshll.u32 %v1210, 16
      %v1259 = vrot.slane %v1257, 1
      %v1260 = vsel %vm1224, %v1255, %v1259
      %v1262 = vshrl.u32 %v1163, 16
      %v1264 = vshll.u32 %v1163, 16
      %v1266 = vrot.slane %v1264, 1
      %v1267 = vor.u32 %v1262, %v1266
      %v1269 = vshll.u32 %v1211, 16
      %v1271 = vrot.slane %v1269, 1
      %v1272 = vsel %vm1224, %v1267, %v1271
      %v1274 = vshrl.u32 %v1164, 16
      %v1276 = vshll.u32 %v1164, 16
      %v1278 = vrot.slane %v1276, 1
      %v1279 = vor.u32 %v1274, %v1278
      %v1281 = vshll.u32 %v1212, 16
      %v1283 = vrot.slane %v1281, 1
      %v1284 = vsel %vm1224, %v1279, %v1283
      %v1286 = vshrl.u32 %v1165, 16
      %v1288 = vshll.u32 %v1165, 16
      %v1290 = vrot.slane %v1288, 1
      %v1291 = vor.u32 %v1286, %v1290
      %v1293 = vshll.u32 %v1213, 16
      %v1295 = vrot.slane %v1293, 1
      %v1296 = vsel %vm1224, %v1291, %v1295
      %v1298 = vshrl.u32 %v1166, 16
      %v1300 = vshll.u32 %v1166, 16
      %v1302 = vrot.slane %v1300, 1
      %v1303 = vor.u32 %v1298, %v1302
      %v1305 = vshll.u32 %v1214, 16
      %v1307 = vrot.slane %v1305, 1
      %v1308 = vsel %vm1224, %v1303, %v1307
      %v1310 = vshrl.u32 %v1167, 16
      %v1312 = vshll.u32 %v1167, 16
      %v1314 = vrot.slane %v1312, 1
      %v1315 = vor.u32 %v1310, %v1314
      %v1317 = vshll.u32 %v1215, 16
      %v1319 = vrot.slane %v1317, 1
      %v1320 = vsel %vm1224, %v1315, %v1319
      %v1322 = vshrl.u32 %v1168, 16
      %v1324 = vshll.u32 %v1168, 16
      %v1326 = vrot.slane %v1324, 1
      %v1327 = vor.u32 %v1322, %v1326
      %v1329 = vshll.u32 %v1216, 16
      %v1331 = vrot.slane %v1329, 1
      %v1332 = vsel %vm1224, %v1327, %v1331
      %v1334 = vshrl.u32 %v1169, 16
      %v1336 = vshll.u32 %v1169, 16
      %v1338 = vrot.slane %v1336, 1
      %v1339 = vor.u32 %v1334, %v1338
      %v1341 = vshll.u32 %v1217, 16
      %v1343 = vrot.slane %v1341, 1
      %v1344 = vsel %vm1224, %v1339, %v1343
      %v1346 = vshrl.u32 %v1170, 16
      %v1348 = vshll.u32 %v1170, 16
      %v1350 = vrot.slane %v1348, 1
      %v1351 = vor.u32 %v1346, %v1350
      %v1353 = vshll.u32 %v1218, 16
      %v1355 = vrot.slane %v1353, 1
      %v1356 = vsel %vm1224, %v1351, %v1355
      %v1358 = vshrl.u32 %v1171, 16
      %v1360 = vshll.u32 %v1171, 16
      %v1362 = vrot.slane %v1360, 1
      %v1363 = vor.u32 %v1358, %v1362
      %v1365 = vshll.u32 %v1219, 16
      %v1367 = vrot.slane %v1365, 1
      %v1368 = vsel %vm1224, %v1363, %v1367
      %v1370 = vshrl.u32 %v1172, 16
      %v1372 = vshll.u32 %v1172, 16
      %v1374 = vrot.slane %v1372, 1
      %v1375 = vor.u32 %v1370, %v1374
      %v1377 = vshll.u32 %v1220, 16
      %v1379 = vrot.slane %v1377, 1
      %v1380 = vsel %vm1224, %v1375, %v1379
      %v1382 = vshrl.u32 %v1173, 16
      %v1384 = vshll.u32 %v1173, 16
      %v1386 = vrot.slane %v1384, 1
      %v1387 = vor.u32 %v1382, %v1386
      %v1389 = vshll.u32 %v1221, 16
      %v1391 = vrot.slane %v1389, 1
      %v1392 = vsel %vm1224, %v1387, %v1391
      %v1394 = vshrl.u32 %v1174, 16
      %v1396 = vshll.u32 %v1174, 16
      %v1398 = vrot.slane %v1396, 1
      %v1399 = vor.u32 %v1394, %v1398
      %v1401 = vshll.u32 %v1222, 16
      %v1403 = vrot.slane %v1401, 1
      %v1404 = vsel %vm1224, %v1399, %v1403
      %v1406 = vshrl.u32 %v1175, 16
      %v1408 = vshll.u32 %v1175, 16
      %v1410 = vrot.slane %v1408, 1
      %v1411 = vor.u32 %v1406, %v1410
      %v1413 = vshll.u32 %v1223, 16
      %v1415 = vrot.slane %v1413, 1
      %v1416 = vsel %vm1224, %v1411, %v1415
      %1417 = vrot.lane.b32.xlu0 %v1236, 4
      %v1418 = vpop.permute.xlu0 %1417
      %1419 = vrot.lane.b32.xlu0 %v1248, 4
      %v1420 = vpop.permute.xlu0 %1419
      %1421 = vrot.lane.b32.xlu0 %v1260, 4
      %v1422 = vpop.permute.xlu0 %1421
      %1423 = vrot.lane.b32.xlu0 %v1272, 4
      %v1424 = vpop.permute.xlu0 %1423
      %1425 = vrot.lane.b32.xlu0 %v1284, 4
      %v1426 = vpop.permute.xlu0 %1425
      %1427 = vrot.lane.b32.xlu0 %v1296, 4
      %v1428 = vpop.permute.xlu0 %1427
      %1429 = vrot.lane.b32.xlu0 %v1308, 4
      %v1430 = vpop.permute.xlu0 %1429
      %1431 = vrot.lane.b32.xlu0 %v1320, 4
      %v1432 = vpop.permute.xlu0 %1431
      %1433 = vrot.lane.b32.xlu0 %v1332, 4
      %v1434 = vpop.permute.xlu0 %1433
      %1435 = vrot.lane.b32.xlu0 %v1344, 4
      %v1436 = vpop.permute.xlu0 %1435
      %1437 = vrot.lane.b32.xlu0 %v1356, 4
      %v1438 = vpop.permute.xlu0 %1437
      %1439 = vrot.lane.b32.xlu0 %v1368, 4
      %v1440 = vpop.permute.xlu0 %1439
      %1441 = vrot.lane.b32.xlu0 %v1380, 4
      %v1442 = vpop.permute.xlu0 %1441
      %1443 = vrot.lane.b32.xlu0 %v1392, 4
      %v1444 = vpop.permute.xlu0 %1443
      %1445 = vrot.lane.b32.xlu0 %v1404, 4
      %v1446 = vpop.permute.xlu0 %1445
      %1447 = vrot.lane.b32.xlu0 %v1416, 4
      %v1448 = vpop.permute.xlu0 %1447
      %v1465 = vunpack.c.l.b16 %v951
      %v1466 = vunpack.c.l.b16 %v952
      %v1467 = vunpack.c.l.b16 %v953
      %v1468 = vunpack.c.l.b16 %v954
      %v1469 = vunpack.c.l.b16 %v955
      %v1470 = vunpack.c.l.b16 %v956
      %v1471 = vunpack.c.l.b16 %v957
      %v1472 = vunpack.c.l.b16 %v958
      %v1473 = vunpack.c.l.b16 %v959
      %v1474 = vunpack.c.l.b16 %v960
      %v1475 = vunpack.c.l.b16 %v961
      %v1476 = vunpack.c.l.b16 %v962
      %v1477 = vunpack.c.l.b16 %v963
      %v1478 = vunpack.c.l.b16 %v964
      %v1479 = vunpack.c.l.b16 %v965
      %v1480 = vunpack.c.l.b16 %v966
      %v1481 = vpack.c.b16 %v1129, %v1465
      %v1482 = vpack.c.b16 %v1131, %v1466
      %v1483 = vpack.c.b16 %v1133, %v1467
      %v1484 = vpack.c.b16 %v1135, %v1468
      %v1485 = vpack.c.b16 %v1137, %v1469
      %v1486 = vpack.c.b16 %v1139, %v1470
      %v1487 = vpack.c.b16 %v1141, %v1471
      %v1488 = vpack.c.b16 %v1143, %v1472
      %v1489 = vpack.c.b16 %v1145, %v1473
      %v1490 = vpack.c.b16 %v1147, %v1474
      %v1491 = vpack.c.b16 %v1149, %v1475
      %v1492 = vpack.c.b16 %v1151, %v1476
      %v1493 = vpack.c.b16 %v1153, %v1477
      %v1494 = vpack.c.b16 %v1155, %v1478
      %v1495 = vpack.c.b16 %v1157, %v1479
      %v1496 = vpack.c.b16 %v1159, %v1480
      %vm1497 = vcmask 1046528
      %v1498 = vrot.slane %v1481, 1
      %v1499 = vrot.slane %v1208, 1
      %v1500 = vsel %vm1497, %v1498, %v1499
      %v1501 = vrot.slane %v1482, 1
      %v1502 = vrot.slane %v1209, 1
      %v1503 = vsel %vm1497, %v1501, %v1502
      %v1504 = vrot.slane %v1483, 1
      %v1505 = vrot.slane %v1210, 1
      %v1506 = vsel %vm1497, %v1504, %v1505
      %v1507 = vrot.slane %v1484, 1
      %v1508 = vrot.slane %v1211, 1
      %v1509 = vsel %vm1497, %v1507, %v1508
      %v1510 = vrot.slane %v1485, 1
      %v1511 = vrot.slane %v1212, 1
      %v1512 = vsel %vm1497, %v1510, %v1511
      %v1513 = vrot.slane %v1486, 1
      %v1514 = vrot.slane %v1213, 1
      %v1515 = vsel %vm1497, %v1513, %v1514
      %v1516 = vrot.slane %v1487, 1
      %v1517 = vrot.slane %v1214, 1
      %v1518 = vsel %vm1497, %v1516, %v1517
      %v1519 = vrot.slane %v1488, 1
      %v1520 = vrot.slane %v1215, 1
      %v1521 = vsel %vm1497, %v1519, %v1520
      %v1522 = vrot.slane %v1489, 1
      %v1523 = vrot.slane %v1216, 1
      %v1524 = vsel %vm1497, %v1522, %v1523
      %v1525 = vrot.slane %v1490, 1
      %v1526 = vrot.slane %v1217, 1
      %v1527 = vsel %vm1497, %v1525, %v1526
      %v1528 = vrot.slane %v1491, 1
      %v1529 = vrot.slane %v1218, 1
      %v1530 = vsel %vm1497, %v1528, %v1529
      %v1531 = vrot.slane %v1492, 1
      %v1532 = vrot.slane %v1219, 1
      %v1533 = vsel %vm1497, %v1531, %v1532
      %v1534 = vrot.slane %v1493, 1
      %v1535 = vrot.slane %v1220, 1
      %v1536 = vsel %vm1497, %v1534, %v1535
      %v1537 = vrot.slane %v1494, 1
      %v1538 = vrot.slane %v1221, 1
      %v1539 = vsel %vm1497, %v1537, %v1538
      %v1540 = vrot.slane %v1495, 1
      %v1541 = vrot.slane %v1222, 1
      %v1542 = vsel %vm1497, %v1540, %v1541
      %v1543 = vrot.slane %v1496, 1
      %v1544 = vrot.slane %v1223, 1
      %v1545 = vsel %vm1497, %v1543, %v1544
      %1546 = vrot.lane.b32.xlu0 %v1500, 8
      %v1547 = vpop.permute.xlu0 %1546
      %1548 = vrot.lane.b32.xlu0 %v1503, 8
      %v1549 = vpop.permute.xlu0 %1548
      %1550 = vrot.lane.b32.xlu0 %v1506, 8
      %v1551 = vpop.permute.xlu0 %1550
      %1552 = vrot.lane.b32.xlu0 %v1509, 8
      %v1553 = vpop.permute.xlu0 %1552
      %1554 = vrot.lane.b32.xlu0 %v1512, 8
      %v1555 = vpop.permute.xlu0 %1554
      %1556 = vrot.lane.b32.xlu0 %v1515, 8
      %v1557 = vpop.permute.xlu0 %1556
      %1558 = vrot.lane.b32.xlu0 %v1518, 8
      %v1559 = vpop.permute.xlu0 %1558
      %1560 = vrot.lane.b32.xlu0 %v1521, 8
      %v1561 = vpop.permute.xlu0 %1560
      %1562 = vrot.lane.b32.xlu0 %v1524, 8
      %v1563 = vpop.permute.xlu0 %1562
      %1564 = vrot.lane.b32.xlu0 %v1527, 8
      %v1565 = vpop.permute.xlu0 %1564
      %1566 = vrot.lane.b32.xlu0 %v1530, 8
      %v1567 = vpop.permute.xlu0 %1566
      %1568 = vrot.lane.b32.xlu0 %v1533, 8
      %v1569 = vpop.permute.xlu0 %1568
      %1570 = vrot.lane.b32.xlu0 %v1536, 8
      %v1571 = vpop.permute.xlu0 %1570
      %1572 = vrot.lane.b32.xlu0 %v1539, 8
      %v1573 = vpop.permute.xlu0 %1572
      %1574 = vrot.lane.b32.xlu0 %v1542, 8
      %v1575 = vpop.permute.xlu0 %1574
      %1576 = vrot.lane.b32.xlu0 %v1545, 8
      %v1577 = vpop.permute.xlu0 %1576
      %v1610 = vunpack.c.l.b16 %v967
      %v1611 = vunpack.c.l.b16 %v968
      %v1612 = vunpack.c.l.b16 %v969
      %v1613 = vunpack.c.l.b16 %v970
      %v1614 = vunpack.c.l.b16 %v971
      %v1615 = vunpack.c.l.b16 %v972
      %v1616 = vunpack.c.l.b16 %v973
      %v1617 = vunpack.c.l.b16 %v974
      %v1618 = vunpack.c.l.b16 %v975
      %v1619 = vunpack.c.l.b16 %v976
      %v1620 = vunpack.c.l.b16 %v977
      %v1621 = vunpack.c.l.b16 %v978
      %v1622 = vunpack.c.l.b16 %v979
      %v1623 = vunpack.c.l.b16 %v980
      %v1624 = vunpack.c.l.b16 %v981
      %v1625 = vunpack.c.l.b16 %v982
      %v1626 = vunpack.c.l.b16 %v983
      %v1627 = vunpack.c.l.b16 %v984
      %v1628 = vunpack.c.l.b16 %v985
      %v1629 = vunpack.c.l.b16 %v986
      %v1630 = vunpack.c.l.b16 %v987
      %v1631 = vunpack.c.l.b16 %v988
      %v1632 = vunpack.c.l.b16 %v989
      %v1633 = vunpack.c.l.b16 %v990
      %v1634 = vunpack.c.l.b16 %v991
      %v1635 = vunpack.c.l.b16 %v992
      %v1636 = vunpack.c.l.b16 %v993
      %v1637 = vunpack.c.l.b16 %v994
      %v1638 = vunpack.c.l.b16 %v995
      %v1639 = vunpack.c.l.b16 %v996
      %v1640 = vunpack.c.l.b16 %v997
      %v1641 = vunpack.c.l.b16 %v998
      %v1642 = vpack.c.b16 %v1611, %v1610
      %v1643 = vpack.c.b16 %v1613, %v1612
      %v1644 = vpack.c.b16 %v1615, %v1614
      %v1645 = vpack.c.b16 %v1617, %v1616
      %v1646 = vpack.c.b16 %v1619, %v1618
      %v1647 = vpack.c.b16 %v1621, %v1620
      %v1648 = vpack.c.b16 %v1623, %v1622
      %v1649 = vpack.c.b16 %v1625, %v1624
      %v1650 = vpack.c.b16 %v1627, %v1626
      %v1651 = vpack.c.b16 %v1629, %v1628
      %v1652 = vpack.c.b16 %v1631, %v1630
      %v1653 = vpack.c.b16 %v1633, %v1632
      %v1654 = vpack.c.b16 %v1635, %v1634
      %v1655 = vpack.c.b16 %v1637, %v1636
      %v1656 = vpack.c.b16 %v1639, %v1638
      %v1657 = vpack.c.b16 %v1641, %v1640
      %1658 = vrot.lane.b32.xlu0 %v1642, 12
      %v1659 = vpop.permute.xlu0 %1658
      %1660 = vrot.lane.b32.xlu0 %v1643, 12
      %v1661 = vpop.permute.xlu0 %1660
      %1662 = vrot.lane.b32.xlu0 %v1644, 12
      %v1663 = vpop.permute.xlu0 %1662
      %1664 = vrot.lane.b32.xlu0 %v1645, 12
      %v1665 = vpop.permute.xlu0 %1664
      %1666 = vrot.lane.b32.xlu0 %v1646, 12
      %v1667 = vpop.permute.xlu0 %1666
      %1668 = vrot.lane.b32.xlu0 %v1647, 12
      %v1669 = vpop.permute.xlu0 %1668
      %1670 = vrot.lane.b32.xlu0 %v1648, 12
      %v1671 = vpop.permute.xlu0 %1670
      %1672 = vrot.lane.b32.xlu0 %v1649, 12
      %v1673 = vpop.permute.xlu0 %1672
      %1674 = vrot.lane.b32.xlu0 %v1650, 12
      %v1675 = vpop.permute.xlu0 %1674
      %1676 = vrot.lane.b32.xlu0 %v1651, 12
      %v1677 = vpop.permute.xlu0 %1676
      %1678 = vrot.lane.b32.xlu0 %v1652, 12
      %v1679 = vpop.permute.xlu0 %1678
      %1680 = vrot.lane.b32.xlu0 %v1653, 12
      %v1681 = vpop.permute.xlu0 %1680
      %1682 = vrot.lane.b32.xlu0 %v1654, 12
      %v1683 = vpop.permute.xlu0 %1682
      %1684 = vrot.lane.b32.xlu0 %v1655, 12
      %v1685 = vpop.permute.xlu0 %1684
      %1686 = vrot.lane.b32.xlu0 %v1656, 12
      %v1687 = vpop.permute.xlu0 %1686
      %1688 = vrot.lane.b32.xlu0 %v1657, 12
      %v1689 = vpop.permute.xlu0 %1688
      %v1706 = vunpack.c.l.b16 %v999
      %v1707 = vunpack.c.l.b16 %v1000
      %v1708 = vunpack.c.l.b16 %v1001
      %v1709 = vunpack.c.l.b16 %v1002
      %v1710 = vunpack.c.l.b16 %v1003
      %v1711 = vunpack.c.l.b16 %v1004
      %v1712 = vunpack.c.l.b16 %v1005
      %v1713 = vunpack.c.l.b16 %v1006
      %v1714 = vunpack.c.l.b16 %v1007
      %v1715 = vunpack.c.l.b16 %v1008
      %v1716 = vunpack.c.l.b16 %v1009
      %v1717 = vunpack.c.l.b16 %v1010
      %v1718 = vunpack.c.l.b16 %v1011
      %v1719 = vunpack.c.l.b16 %v1012
      %v1720 = vunpack.c.l.b16 %v1013
      %v1721 = vunpack.c.l.b16 %v1014
      %v1722 = vpack.c.b16 %v1706, %v1706
      %v1723 = vpack.c.b16 %v1707, %v1707
      %v1724 = vpack.c.b16 %v1708, %v1708
      %v1725 = vpack.c.b16 %v1709, %v1709
      %v1726 = vpack.c.b16 %v1710, %v1710
      %v1727 = vpack.c.b16 %v1711, %v1711
      %v1728 = vpack.c.b16 %v1712, %v1712
      %v1729 = vpack.c.b16 %v1713, %v1713
      %v1730 = vpack.c.b16 %v1714, %v1714
      %v1731 = vpack.c.b16 %v1715, %v1715
      %v1732 = vpack.c.b16 %v1716, %v1716
      %v1733 = vpack.c.b16 %v1717, %v1717
      %v1734 = vpack.c.b16 %v1718, %v1718
      %v1735 = vpack.c.b16 %v1719, %v1719
      %v1736 = vpack.c.b16 %v1720, %v1720
      %v1737 = vpack.c.b16 %v1721, %v1721
      %v1739 = vshrl.u32 %v1642, 16
      %v1741 = vshll.u32 %v1642, 16
      %v1743 = vrot.slane %v1741, 1
      %v1744 = vor.u32 %v1739, %v1743
      %v1746 = vshll.u32 %v1722, 16
      %v1748 = vrot.slane %v1746, 1
      %v1749 = vsel %vm1224, %v1744, %v1748
      %v1751 = vshrl.u32 %v1643, 16
      %v1753 = vshll.u32 %v1643, 16
      %v1755 = vrot.slane %v1753, 1
      %v1756 = vor.u32 %v1751, %v1755
      %v1758 = vshll.u32 %v1723, 16
      %v1760 = vrot.slane %v1758, 1
      %v1761 = vsel %vm1224, %v1756, %v1760
      %v1763 = vshrl.u32 %v1644, 16
      %v1765 = vshll.u32 %v1644, 16
      %v1767 = vrot.slane %v1765, 1
      %v1768 = vor.u32 %v1763, %v1767
      %v1770 = vshll.u32 %v1724, 16
      %v1772 = vrot.slane %v1770, 1
      %v1773 = vsel %vm1224, %v1768, %v1772
      %v1775 = vshrl.u32 %v1645, 16
      %v1777 = vshll.u32 %v1645, 16
      %v1779 = vrot.slane %v1777, 1
      %v1780 = vor.u32 %v1775, %v1779
      %v1782 = vshll.u32 %v1725, 16
      %v1784 = vrot.slane %v1782, 1
      %v1785 = vsel %vm1224, %v1780, %v1784
      %v1787 = vshrl.u32 %v1646, 16
      %v1789 = vshll.u32 %v1646, 16
      %v1791 = vrot.slane %v1789, 1
      %v1792 = vor.u32 %v1787, %v1791
      %v1794 = vshll.u32 %v1726, 16
      %v1796 = vrot.slane %v1794, 1
      %v1797 = vsel %vm1224, %v1792, %v1796
      %v1799 = vshrl.u32 %v1647, 16
      %v1801 = vshll.u32 %v1647, 16
      %v1803 = vrot.slane %v1801, 1
      %v1804 = vor.u32 %v1799, %v1803
      %v1806 = vshll.u32 %v1727, 16
      %v1808 = vrot.slane %v1806, 1
      %v1809 = vsel %vm1224, %v1804, %v1808
      %v1811 = vshrl.u32 %v1648, 16
      %v1813 = vshll.u32 %v1648, 16
      %v1815 = vrot.slane %v1813, 1
      %v1816 = vor.u32 %v1811, %v1815
      %v1818 = vshll.u32 %v1728, 16
      %v1820 = vrot.slane %v1818, 1
      %v1821 = vsel %vm1224, %v1816, %v1820
      %v1823 = vshrl.u32 %v1649, 16
      %v1825 = vshll.u32 %v1649, 16
      %v1827 = vrot.slane %v1825, 1
      %v1828 = vor.u32 %v1823, %v1827
      %v1830 = vshll.u32 %v1729, 16
      %v1832 = vrot.slane %v1830, 1
      %v1833 = vsel %vm1224, %v1828, %v1832
      %v1835 = vshrl.u32 %v1650, 16
      %v1837 = vshll.u32 %v1650, 16
      %v1839 = vrot.slane %v1837, 1
      %v1840 = vor.u32 %v1835, %v1839
      %v1842 = vshll.u32 %v1730, 16
      %v1844 = vrot.slane %v1842, 1
      %v1845 = vsel %vm1224, %v1840, %v1844
      %v1847 = vshrl.u32 %v1651, 16
      %v1849 = vshll.u32 %v1651, 16
      %v1851 = vrot.slane %v1849, 1
      %v1852 = vor.u32 %v1847, %v1851
      %v1854 = vshll.u32 %v1731, 16
      %v1856 = vrot.slane %v1854, 1
      %v1857 = vsel %vm1224, %v1852, %v1856
      %v1859 = vshrl.u32 %v1652, 16
      %v1861 = vshll.u32 %v1652, 16
      %v1863 = vrot.slane %v1861, 1
      %v1864 = vor.u32 %v1859, %v1863
      %v1866 = vshll.u32 %v1732, 16
      %v1868 = vrot.slane %v1866, 1
      %v1869 = vsel %vm1224, %v1864, %v1868
      %v1871 = vshrl.u32 %v1653, 16
      %v1873 = vshll.u32 %v1653, 16
      %v1875 = vrot.slane %v1873, 1
      %v1876 = vor.u32 %v1871, %v1875
      %v1878 = vshll.u32 %v1733, 16
      %v1880 = vrot.slane %v1878, 1
      %v1881 = vsel %vm1224, %v1876, %v1880
      %v1883 = vshrl.u32 %v1654, 16
      %v1885 = vshll.u32 %v1654, 16
      %v1887 = vrot.slane %v1885, 1
      %v1888 = vor.u32 %v1883, %v1887
      %v1890 = vshll.u32 %v1734, 16
      %v1892 = vrot.slane %v1890, 1
      %v1893 = vsel %vm1224, %v1888, %v1892
      %v1895 = vshrl.u32 %v1655, 16
      %v1897 = vshll.u32 %v1655, 16
      %v1899 = vrot.slane %v1897, 1
      %v1900 = vor.u32 %v1895, %v1899
      %v1902 = vshll.u32 %v1735, 16
      %v1904 = vrot.slane %v1902, 1
      %v1905 = vsel %vm1224, %v1900, %v1904
      %v1907 = vshrl.u32 %v1656, 16
      %v1909 = vshll.u32 %v1656, 16
      %v1911 = vrot.slane %v1909, 1
      %v1912 = vor.u32 %v1907, %v1911
      %v1914 = vshll.u32 %v1736, 16
      %v1916 = vrot.slane %v1914, 1
      %v1917 = vsel %vm1224, %v1912, %v1916
      %v1919 = vshrl.u32 %v1657, 16
      %v1921 = vshll.u32 %v1657, 16
      %v1923 = vrot.slane %v1921, 1
      %v1924 = vor.u32 %v1919, %v1923
      %v1926 = vshll.u32 %v1737, 16
      %v1928 = vrot.slane %v1926, 1
      %v1929 = vsel %vm1224, %v1924, %v1928
      %1930 = vrot.lane.b32.xlu0 %v1749, 16
      %v1931 = vpop.permute.xlu0 %1930
      %1932 = vrot.lane.b32.xlu0 %v1761, 16
      %v1933 = vpop.permute.xlu0 %1932
      %1934 = vrot.lane.b32.xlu0 %v1773, 16
      %v1935 = vpop.permute.xlu0 %1934
      %1936 = vrot.lane.b32.xlu0 %v1785, 16
      %v1937 = vpop.permute.xlu0 %1936
      %1938 = vrot.lane.b32.xlu0 %v1797, 16
      %v1939 = vpop.permute.xlu0 %1938
      %1940 = vrot.lane.b32.xlu0 %v1809, 16
      %v1941 = vpop.permute.xlu0 %1940
      %1942 = vrot.lane.b32.xlu0 %v1821, 16
      %v1943 = vpop.permute.xlu0 %1942
      %1944 = vrot.lane.b32.xlu0 %v1833, 16
      %v1945 = vpop.permute.xlu0 %1944
      %1946 = vrot.lane.b32.xlu0 %v1845, 16
      %v1947 = vpop.permute.xlu0 %1946
      %1948 = vrot.lane.b32.xlu0 %v1857, 16
      %v1949 = vpop.permute.xlu0 %1948
      %1950 = vrot.lane.b32.xlu0 %v1869, 16
      %v1951 = vpop.permute.xlu0 %1950
      %1952 = vrot.lane.b32.xlu0 %v1881, 16
      %v1953 = vpop.permute.xlu0 %1952
      %1954 = vrot.lane.b32.xlu0 %v1893, 16
      %v1955 = vpop.permute.xlu0 %1954
      %1956 = vrot.lane.b32.xlu0 %v1905, 16
      %v1957 = vpop.permute.xlu0 %1956
      %1958 = vrot.lane.b32.xlu0 %v1917, 16
      %v1959 = vpop.permute.xlu0 %1958
      %1960 = vrot.lane.b32.xlu0 %v1929, 16
      %v1961 = vpop.permute.xlu0 %1960
      %v1978 = vunpack.c.l.b16 %v1015
      %v1979 = vunpack.c.l.b16 %v1016
      %v1980 = vunpack.c.l.b16 %v1017
      %v1981 = vunpack.c.l.b16 %v1018
      %v1982 = vunpack.c.l.b16 %v1019
      %v1983 = vunpack.c.l.b16 %v1020
      %v1984 = vunpack.c.l.b16 %v1021
      %v1985 = vunpack.c.l.b16 %v1022
      %v1986 = vunpack.c.l.b16 %v1023
      %v1987 = vunpack.c.l.b16 %v1024
      %v1988 = vunpack.c.l.b16 %v1025
      %v1989 = vunpack.c.l.b16 %v1026
      %v1990 = vunpack.c.l.b16 %v1027
      %v1991 = vunpack.c.l.b16 %v1028
      %v1992 = vunpack.c.l.b16 %v1029
      %v1993 = vunpack.c.l.b16 %v1030
      %v1994 = vpack.c.b16 %v1611, %v1978
      %v1995 = vpack.c.b16 %v1613, %v1979
      %v1996 = vpack.c.b16 %v1615, %v1980
      %v1997 = vpack.c.b16 %v1617, %v1981
      %v1998 = vpack.c.b16 %v1619, %v1982
      %v1999 = vpack.c.b16 %v1621, %v1983
      %v2000 = vpack.c.b16 %v1623, %v1984
      %v2001 = vpack.c.b16 %v1625, %v1985
      %v2002 = vpack.c.b16 %v1627, %v1986
      %v2003 = vpack.c.b16 %v1629, %v1987
      %v2004 = vpack.c.b16 %v1631, %v1988
      %v2005 = vpack.c.b16 %v1633, %v1989
      %v2006 = vpack.c.b16 %v1635, %v1990
      %v2007 = vpack.c.b16 %v1637, %v1991
      %v2008 = vpack.c.b16 %v1639, %v1992
      %v2009 = vpack.c.b16 %v1641, %v1993
      %v2010 = vrot.slane %v1994, 1
      %v2011 = vrot.slane %v1722, 1
      %v2012 = vsel %vm1497, %v2010, %v2011
      %v2013 = vrot.slane %v1995, 1
      %v2014 = vrot.slane %v1723, 1
      %v2015 = vsel %vm1497, %v2013, %v2014
      %v2016 = vrot.slane %v1996, 1
      %v2017 = vrot.slane %v1724, 1
      %v2018 = vsel %vm1497, %v2016, %v2017
      %v2019 = vrot.slane %v1997, 1
      %v2020 = vrot.slane %v1725, 1
      %v2021 = vsel %vm1497, %v2019, %v2020
      %v2022 = vrot.slane %v1998, 1
      %v2023 = vrot.slane %v1726, 1
      %v2024 = vsel %vm1497, %v2022, %v2023
      %v2025 = vrot.slane %v1999, 1
      %v2026 = vrot.slane %v1727, 1
      %v2027 = vsel %vm1497, %v2025, %v2026
      %v2028 = vrot.slane %v2000, 1
      %v2029 = vrot.slane %v1728, 1
      %v2030 = vsel %vm1497, %v2028, %v2029
      %v2031 = vrot.slane %v2001, 1
      %v2032 = vrot.slane %v1729, 1
      %v2033 = vsel %vm1497, %v2031, %v2032
      %v2034 = vrot.slane %v2002, 1
      %v2035 = vrot.slane %v1730, 1
      %v2036 = vsel %vm1497, %v2034, %v2035
      %v2037 = vrot.slane %v2003, 1
      %v2038 = vrot.slane %v1731, 1
      %v2039 = vsel %vm1497, %v2037, %v2038
      %v2040 = vrot.slane %v2004, 1
      %v2041 = vrot.slane %v1732, 1
      %v2042 = vsel %vm1497, %v2040, %v2041
      %v2043 = vrot.slane %v2005, 1
      %v2044 = vrot.slane %v1733, 1
      %v2045 = vsel %vm1497, %v2043, %v2044
      %v2046 = vrot.slane %v2006, 1
      %v2047 = vrot.slane %v1734, 1
      %v2048 = vsel %vm1497, %v2046, %v2047
      %v2049 = vrot.slane %v2007, 1
      %v2050 = vrot.slane %v1735, 1
      %v2051 = vsel %vm1497, %v2049, %v2050
      %v2052 = vrot.slane %v2008, 1
      %v2053 = vrot.slane %v1736, 1
      %v2054 = vsel %vm1497, %v2052, %v2053
      %v2055 = vrot.slane %v2009, 1
      %v2056 = vrot.slane %v1737, 1
      %v2057 = vsel %vm1497, %v2055, %v2056
      %2058 = vrot.lane.b32.xlu0 %v2012, 20
      %v2059 = vpop.permute.xlu0 %2058
      %2060 = vrot.lane.b32.xlu0 %v2015, 20
      %v2061 = vpop.permute.xlu0 %2060
      %2062 = vrot.lane.b32.xlu0 %v2018, 20
      %v2063 = vpop.permute.xlu0 %2062
      %2064 = vrot.lane.b32.xlu0 %v2021, 20
      %v2065 = vpop.permute.xlu0 %2064
      %2066 = vrot.lane.b32.xlu0 %v2024, 20
      %v2067 = vpop.permute.xlu0 %2066
      %2068 = vrot.lane.b32.xlu0 %v2027, 20
      %v2069 = vpop.permute.xlu0 %2068
      %2070 = vrot.lane.b32.xlu0 %v2030, 20
      %v2071 = vpop.permute.xlu0 %2070
      %2072 = vrot.lane.b32.xlu0 %v2033, 20
      %v2073 = vpop.permute.xlu0 %2072
      %2074 = vrot.lane.b32.xlu0 %v2036, 20
      %v2075 = vpop.permute.xlu0 %2074
      %2076 = vrot.lane.b32.xlu0 %v2039, 20
      %v2077 = vpop.permute.xlu0 %2076
      %2078 = vrot.lane.b32.xlu0 %v2042, 20
      %v2079 = vpop.permute.xlu0 %2078
      %2080 = vrot.lane.b32.xlu0 %v2045, 20
      %v2081 = vpop.permute.xlu0 %2080
      %2082 = vrot.lane.b32.xlu0 %v2048, 20
      %v2083 = vpop.permute.xlu0 %2082
      %2084 = vrot.lane.b32.xlu0 %v2051, 20
      %v2085 = vpop.permute.xlu0 %2084
      %2086 = vrot.lane.b32.xlu0 %v2054, 20
      %v2087 = vpop.permute.xlu0 %2086
      %2088 = vrot.lane.b32.xlu0 %v2057, 20
      %v2089 = vpop.permute.xlu0 %2088
      %v2122 = vunpack.c.l.b16 %v1032
      %v2123 = vunpack.c.l.b16 %v1033
      %v2124 = vunpack.c.l.b16 %v1034
      %v2125 = vunpack.c.l.b16 %v1035
      %v2126 = vunpack.c.l.b16 %v1036
      %v2127 = vunpack.c.l.b16 %v1037
      %v2128 = vunpack.c.l.b16 %v1038
      %v2129 = vunpack.c.l.b16 %v1039
      %v2130 = vunpack.c.l.b16 %v1040
      %v2131 = vunpack.c.l.b16 %v1041
      %v2132 = vunpack.c.l.b16 %v1042
      %v2133 = vunpack.c.l.b16 %v1043
      %v2134 = vunpack.c.l.b16 %v1044
      %v2135 = vunpack.c.l.b16 %v1045
      %v2136 = vunpack.c.l.b16 %v1046
      %v2137 = vunpack.c.l.b16 %v1047
      %v2138 = vunpack.c.l.b16 %v1048
      %v2139 = vunpack.c.l.b16 %v1049
      %v2140 = vunpack.c.l.b16 %v1050
      %v2141 = vunpack.c.l.b16 %v1051
      %v2142 = vunpack.c.l.b16 %v1052
      %v2143 = vunpack.c.l.b16 %v1053
      %v2144 = vunpack.c.l.b16 %v1054
      %v2145 = vunpack.c.l.b16 %v1055
      %v2146 = vunpack.c.l.b16 %v1056
      %v2147 = vunpack.c.l.b16 %v1057
      %v2148 = vunpack.c.l.b16 %v1058
      %v2149 = vunpack.c.l.b16 %v1059
      %v2150 = vunpack.c.l.b16 %v1060
      %v2151 = vunpack.c.l.b16 %v1061
      %v2152 = vunpack.c.l.b16 %v1062
      %v2153 = vunpack.c.l.b16 %v1063
      %v2154 = vpack.c.b16 %v2123, %v2122
      %v2155 = vpack.c.b16 %v2125, %v2124
      %v2156 = vpack.c.b16 %v2127, %v2126
      %v2157 = vpack.c.b16 %v2129, %v2128
      %v2158 = vpack.c.b16 %v2131, %v2130
      %v2159 = vpack.c.b16 %v2133, %v2132
      %v2160 = vpack.c.b16 %v2135, %v2134
      %v2161 = vpack.c.b16 %v2137, %v2136
      %v2162 = vpack.c.b16 %v2139, %v2138
      %v2163 = vpack.c.b16 %v2141, %v2140
      %v2164 = vpack.c.b16 %v2143, %v2142
      %v2165 = vpack.c.b16 %v2145, %v2144
      %v2166 = vpack.c.b16 %v2147, %v2146
      %v2167 = vpack.c.b16 %v2149, %v2148
      %v2168 = vpack.c.b16 %v2151, %v2150
      %v2169 = vpack.c.b16 %v2153, %v2152
      %2170 = vrot.lane.b32.xlu0 %v2154, 24
      %v2171 = vpop.permute.xlu0 %2170
      %2172 = vrot.lane.b32.xlu0 %v2155, 24
      %v2173 = vpop.permute.xlu0 %2172
      %2174 = vrot.lane.b32.xlu0 %v2156, 24
      %v2175 = vpop.permute.xlu0 %2174
      %2176 = vrot.lane.b32.xlu0 %v2157, 24
      %v2177 = vpop.permute.xlu0 %2176
      %2178 = vrot.lane.b32.xlu0 %v2158, 24
      %v2179 = vpop.permute.xlu0 %2178
      %2180 = vrot.lane.b32.xlu0 %v2159, 24
      %v2181 = vpop.permute.xlu0 %2180
      %2182 = vrot.lane.b32.xlu0 %v2160, 24
      %v2183 = vpop.permute.xlu0 %2182
      %2184 = vrot.lane.b32.xlu0 %v2161, 24
      %v2185 = vpop.permute.xlu0 %2184
      %2186 = vrot.lane.b32.xlu0 %v2162, 24
      %v2187 = vpop.permute.xlu0 %2186
      %2188 = vrot.lane.b32.xlu0 %v2163, 24
      %v2189 = vpop.permute.xlu0 %2188
      %2190 = vrot.lane.b32.xlu0 %v2164, 24
      %v2191 = vpop.permute.xlu0 %2190
      %2192 = vrot.lane.b32.xlu0 %v2165, 24
      %v2193 = vpop.permute.xlu0 %2192
      %2194 = vrot.lane.b32.xlu0 %v2166, 24
      %v2195 = vpop.permute.xlu0 %2194
      %2196 = vrot.lane.b32.xlu0 %v2167, 24
      %v2197 = vpop.permute.xlu0 %2196
      %2198 = vrot.lane.b32.xlu0 %v2168, 24
      %v2199 = vpop.permute.xlu0 %2198
      %2200 = vrot.lane.b32.xlu0 %v2169, 24
      %v2201 = vpop.permute.xlu0 %2200
      %v2218 = vunpack.c.l.b16 %v1064
      %v2219 = vunpack.c.l.b16 %v1065
      %v2220 = vunpack.c.l.b16 %v1066
      %v2221 = vunpack.c.l.b16 %v1067
      %v2222 = vunpack.c.l.b16 %v1068
      %v2223 = vunpack.c.l.b16 %v1069
      %v2224 = vunpack.c.l.b16 %v1070
      %v2225 = vunpack.c.l.b16 %v1071
      %v2226 = vunpack.c.l.b16 %v1072
      %v2227 = vunpack.c.l.b16 %v1073
      %v2228 = vunpack.c.l.b16 %v1074
      %v2229 = vunpack.c.l.b16 %v1075
      %v2230 = vunpack.c.l.b16 %v1076
      %v2231 = vunpack.c.l.b16 %v1077
      %v2232 = vunpack.c.l.b16 %v1078
      %v2233 = vunpack.c.l.b16 %v1079
      %v2234 = vpack.c.b16 %v2218, %v2218
      %v2235 = vpack.c.b16 %v2219, %v2219
      %v2236 = vpack.c.b16 %v2220, %v2220
      %v2237 = vpack.c.b16 %v2221, %v2221
      %v2238 = vpack.c.b16 %v2222, %v2222
      %v2239 = vpack.c.b16 %v2223, %v2223
      %v2240 = vpack.c.b16 %v2224, %v2224
      %v2241 = vpack.c.b16 %v2225, %v2225
      %v2242 = vpack.c.b16 %v2226, %v2226
      %v2243 = vpack.c.b16 %v2227, %v2227
      %v2244 = vpack.c.b16 %v2228, %v2228
      %v2245 = vpack.c.b16 %v2229, %v2229
      %v2246 = vpack.c.b16 %v2230, %v2230
      %v2247 = vpack.c.b16 %v2231, %v2231
      %v2248 = vpack.c.b16 %v2232, %v2232
      %v2249 = vpack.c.b16 %v2233, %v2233
      %v2251 = vshrl.u32 %v2154, 16
      %v2253 = vshll.u32 %v2154, 16
      %v2255 = vrot.slane %v2253, 1
      %v2256 = vor.u32 %v2251, %v2255
      %v2258 = vshll.u32 %v2234, 16
      %v2260 = vrot.slane %v2258, 1
      %v2261 = vsel %vm1224, %v2256, %v2260
      %v2263 = vshrl.u32 %v2155, 16
      %v2265 = vshll.u32 %v2155, 16
      %v2267 = vrot.slane %v2265, 1
      %v2268 = vor.u32 %v2263, %v2267
      %v2270 = vshll.u32 %v2235, 16
      %v2272 = vrot.slane %v2270, 1
      %v2273 = vsel %vm1224, %v2268, %v2272
      %v2275 = vshrl.u32 %v2156, 16
      %v2277 = vshll.u32 %v2156, 16
      %v2279 = vrot.slane %v2277, 1
      %v2280 = vor.u32 %v2275, %v2279
      %v2282 = vshll.u32 %v2236, 16
      %v2284 = vrot.slane %v2282, 1
      %v2285 = vsel %vm1224, %v2280, %v2284
      %v2287 = vshrl.u32 %v2157, 16
      %v2289 = vshll.u32 %v2157, 16
      %v2291 = vrot.slane %v2289, 1
      %v2292 = vor.u32 %v2287, %v2291
      %v2294 = vshll.u32 %v2237, 16
      %v2296 = vrot.slane %v2294, 1
      %v2297 = vsel %vm1224, %v2292, %v2296
      %v2299 = vshrl.u32 %v2158, 16
      %v2301 = vshll.u32 %v2158, 16
      %v2303 = vrot.slane %v2301, 1
      %v2304 = vor.u32 %v2299, %v2303
      %v2306 = vshll.u32 %v2238, 16
      %v2308 = vrot.slane %v2306, 1
      %v2309 = vsel %vm1224, %v2304, %v2308
      %v2311 = vshrl.u32 %v2159, 16
      %v2313 = vshll.u32 %v2159, 16
      %v2315 = vrot.slane %v2313, 1
      %v2316 = vor.u32 %v2311, %v2315
      %v2318 = vshll.u32 %v2239, 16
      %v2320 = vrot.slane %v2318, 1
      %v2321 = vsel %vm1224, %v2316, %v2320
      %v2323 = vshrl.u32 %v2160, 16
      %v2325 = vshll.u32 %v2160, 16
      %v2327 = vrot.slane %v2325, 1
      %v2328 = vor.u32 %v2323, %v2327
      %v2330 = vshll.u32 %v2240, 16
      %v2332 = vrot.slane %v2330, 1
      %v2333 = vsel %vm1224, %v2328, %v2332
      %v2335 = vshrl.u32 %v2161, 16
      %v2337 = vshll.u32 %v2161, 16
      %v2339 = vrot.slane %v2337, 1
      %v2340 = vor.u32 %v2335, %v2339
      %v2342 = vshll.u32 %v2241, 16
      %v2344 = vrot.slane %v2342, 1
      %v2345 = vsel %vm1224, %v2340, %v2344
      %v2347 = vshrl.u32 %v2162, 16
      %v2349 = vshll.u32 %v2162, 16
      %v2351 = vrot.slane %v2349, 1
      %v2352 = vor.u32 %v2347, %v2351
      %v2354 = vshll.u32 %v2242, 16
      %v2356 = vrot.slane %v2354, 1
      %v2357 = vsel %vm1224, %v2352, %v2356
      %v2359 = vshrl.u32 %v2163, 16
      %v2361 = vshll.u32 %v2163, 16
      %v2363 = vrot.slane %v2361, 1
      %v2364 = vor.u32 %v2359, %v2363
      %v2366 = vshll.u32 %v2243, 16
      %v2368 = vrot.slane %v2366, 1
      %v2369 = vsel %vm1224, %v2364, %v2368
      %v2371 = vshrl.u32 %v2164, 16
      %v2373 = vshll.u32 %v2164, 16
      %v2375 = vrot.slane %v2373, 1
      %v2376 = vor.u32 %v2371, %v2375
      %v2378 = vshll.u32 %v2244, 16
      %v2380 = vrot.slane %v2378, 1
      %v2381 = vsel %vm1224, %v2376, %v2380
      %v2383 = vshrl.u32 %v2165, 16
      %v2385 = vshll.u32 %v2165, 16
      %v2387 = vrot.slane %v2385, 1
      %v2388 = vor.u32 %v2383, %v2387
      %v2390 = vshll.u32 %v2245, 16
      %v2392 = vrot.slane %v2390, 1
      %v2393 = vsel %vm1224, %v2388, %v2392
      %v2395 = vshrl.u32 %v2166, 16
      %v2397 = vshll.u32 %v2166, 16
      %v2399 = vrot.slane %v2397, 1
      %v2400 = vor.u32 %v2395, %v2399
      %v2402 = vshll.u32 %v2246, 16
      %v2404 = vrot.slane %v2402, 1
      %v2405 = vsel %vm1224, %v2400, %v2404
      %v2407 = vshrl.u32 %v2167, 16
      %v2409 = vshll.u32 %v2167, 16
      %v2411 = vrot.slane %v2409, 1
      %v2412 = vor.u32 %v2407, %v2411
      %v2414 = vshll.u32 %v2247, 16
      %v2416 = vrot.slane %v2414, 1
      %v2417 = vsel %vm1224, %v2412, %v2416
      %v2419 = vshrl.u32 %v2168, 16
      %v2421 = vshll.u32 %v2168, 16
      %v2423 = vrot.slane %v2421, 1
      %v2424 = vor.u32 %v2419, %v2423
      %v2426 = vshll.u32 %v2248, 16
      %v2428 = vrot.slane %v2426, 1
      %v2429 = vsel %vm1224, %v2424, %v2428
      %v2431 = vshrl.u32 %v2169, 16
      %v2433 = vshll.u32 %v2169, 16
      %v2435 = vrot.slane %v2433, 1
      %v2436 = vor.u32 %v2431, %v2435
      %v2438 = vshll.u32 %v2249, 16
      %v2440 = vrot.slane %v2438, 1
      %v2441 = vsel %vm1224, %v2436, %v2440
      %2442 = vrot.lane.b32.xlu0 %v2261, 28
      %v2443 = vpop.permute.xlu0 %2442
      %2444 = vrot.lane.b32.xlu0 %v2273, 28
      %v2445 = vpop.permute.xlu0 %2444
      %2446 = vrot.lane.b32.xlu0 %v2285, 28
      %v2447 = vpop.permute.xlu0 %2446
      %2448 = vrot.lane.b32.xlu0 %v2297, 28
      %v2449 = vpop.permute.xlu0 %2448
      %2450 = vrot.lane.b32.xlu0 %v2309, 28
      %v2451 = vpop.permute.xlu0 %2450
      %2452 = vrot.lane.b32.xlu0 %v2321, 28
      %v2453 = vpop.permute.xlu0 %2452
      %2454 = vrot.lane.b32.xlu0 %v2333, 28
      %v2455 = vpop.permute.xlu0 %2454
      %2456 = vrot.lane.b32.xlu0 %v2345, 28
      %v2457 = vpop.permute.xlu0 %2456
      %2458 = vrot.lane.b32.xlu0 %v2357, 28
      %v2459 = vpop.permute.xlu0 %2458
      %2460 = vrot.lane.b32.xlu0 %v2369, 28
      %v2461 = vpop.permute.xlu0 %2460
      %2462 = vrot.lane.b32.xlu0 %v2381, 28
      %v2463 = vpop.permute.xlu0 %2462
      %2464 = vrot.lane.b32.xlu0 %v2393, 28
      %v2465 = vpop.permute.xlu0 %2464
      %2466 = vrot.lane.b32.xlu0 %v2405, 28
      %v2467 = vpop.permute.xlu0 %2466
      %2468 = vrot.lane.b32.xlu0 %v2417, 28
      %v2469 = vpop.permute.xlu0 %2468
      %2470 = vrot.lane.b32.xlu0 %v2429, 28
      %v2471 = vpop.permute.xlu0 %2470
      %2472 = vrot.lane.b32.xlu0 %v2441, 28
      %v2473 = vpop.permute.xlu0 %2472
      %v2490 = vunpack.c.l.b16 %v1080
      %v2491 = vunpack.c.l.b16 %v1081
      %v2492 = vunpack.c.l.b16 %v1082
      %v2493 = vunpack.c.l.b16 %v1083
      %v2494 = vunpack.c.l.b16 %v1084
      %v2495 = vunpack.c.l.b16 %v1085
      %v2496 = vunpack.c.l.b16 %v1086
      %v2497 = vunpack.c.l.b16 %v1087
      %v2498 = vunpack.c.l.b16 %v1088
      %v2499 = vunpack.c.l.b16 %v1089
      %v2500 = vunpack.c.l.b16 %v1090
      %v2501 = vunpack.c.l.b16 %v1091
      %v2502 = vunpack.c.l.b16 %v1092
      %v2503 = vunpack.c.l.b16 %v1093
      %v2504 = vunpack.c.l.b16 %v1094
      %v2505 = vunpack.c.l.b16 %v1095
      %v2506 = vpack.c.b16 %v2123, %v2490
      %v2507 = vpack.c.b16 %v2125, %v2491
      %v2508 = vpack.c.b16 %v2127, %v2492
      %v2509 = vpack.c.b16 %v2129, %v2493
      %v2510 = vpack.c.b16 %v2131, %v2494
      %v2511 = vpack.c.b16 %v2133, %v2495
      %v2512 = vpack.c.b16 %v2135, %v2496
      %v2513 = vpack.c.b16 %v2137, %v2497
      %v2514 = vpack.c.b16 %v2139, %v2498
      %v2515 = vpack.c.b16 %v2141, %v2499
      %v2516 = vpack.c.b16 %v2143, %v2500
      %v2517 = vpack.c.b16 %v2145, %v2501
      %v2518 = vpack.c.b16 %v2147, %v2502
      %v2519 = vpack.c.b16 %v2149, %v2503
      %v2520 = vpack.c.b16 %v2151, %v2504
      %v2521 = vpack.c.b16 %v2153, %v2505
      %v2522 = vrot.slane %v2506, 1
      %v2523 = vrot.slane %v2234, 1
      %v2524 = vsel %vm1497, %v2522, %v2523
      %v2525 = vrot.slane %v2507, 1
      %v2526 = vrot.slane %v2235, 1
      %v2527 = vsel %vm1497, %v2525, %v2526
      %v2528 = vrot.slane %v2508, 1
      %v2529 = vrot.slane %v2236, 1
      %v2530 = vsel %vm1497, %v2528, %v2529
      %v2531 = vrot.slane %v2509, 1
      %v2532 = vrot.slane %v2237, 1
      %v2533 = vsel %vm1497, %v2531, %v2532
      %v2534 = vrot.slane %v2510, 1
      %v2535 = vrot.slane %v2238, 1
      %v2536 = vsel %vm1497, %v2534, %v2535
      %v2537 = vrot.slane %v2511, 1
      %v2538 = vrot.slane %v2239, 1
      %v2539 = vsel %vm1497, %v2537, %v2538
      %v2540 = vrot.slane %v2512, 1
      %v2541 = vrot.slane %v2240, 1
      %v2542 = vsel %vm1497, %v2540, %v2541
      %v2543 = vrot.slane %v2513, 1
      %v2544 = vrot.slane %v2241, 1
      %v2545 = vsel %vm1497, %v2543, %v2544
      %v2546 = vrot.slane %v2514, 1
      %v2547 = vrot.slane %v2242, 1
      %v2548 = vsel %vm1497, %v2546, %v2547
      %v2549 = vrot.slane %v2515, 1
      %v2550 = vrot.slane %v2243, 1
      %v2551 = vsel %vm1497, %v2549, %v2550
      %v2552 = vrot.slane %v2516, 1
      %v2553 = vrot.slane %v2244, 1
      %v2554 = vsel %vm1497, %v2552, %v2553
      %v2555 = vrot.slane %v2517, 1
      %v2556 = vrot.slane %v2245, 1
      %v2557 = vsel %vm1497, %v2555, %v2556
      %v2558 = vrot.slane %v2518, 1
      %v2559 = vrot.slane %v2246, 1
      %v2560 = vsel %vm1497, %v2558, %v2559
      %v2561 = vrot.slane %v2519, 1
      %v2562 = vrot.slane %v2247, 1
      %v2563 = vsel %vm1497, %v2561, %v2562
      %v2564 = vrot.slane %v2520, 1
      %v2565 = vrot.slane %v2248, 1
      %v2566 = vsel %vm1497, %v2564, %v2565
      %v2567 = vrot.slane %v2521, 1
      %v2568 = vrot.slane %v2249, 1
      %v2569 = vsel %vm1497, %v2567, %v2568
      %2570 = vrot.lane.b32.xlu0 %v2524, 32
      %v2571 = vpop.permute.xlu0 %2570
      %2572 = vrot.lane.b32.xlu0 %v2527, 32
      %v2573 = vpop.permute.xlu0 %2572
      %2574 = vrot.lane.b32.xlu0 %v2530, 32
      %v2575 = vpop.permute.xlu0 %2574
      %2576 = vrot.lane.b32.xlu0 %v2533, 32
      %v2577 = vpop.permute.xlu0 %2576
      %2578 = vrot.lane.b32.xlu0 %v2536, 32
      %v2579 = vpop.permute.xlu0 %2578
      %2580 = vrot.lane.b32.xlu0 %v2539, 32
      %v2581 = vpop.permute.xlu0 %2580
      %2582 = vrot.lane.b32.xlu0 %v2542, 32
      %v2583 = vpop.permute.xlu0 %2582
      %2584 = vrot.lane.b32.xlu0 %v2545, 32
      %v2585 = vpop.permute.xlu0 %2584
      %2586 = vrot.lane.b32.xlu0 %v2548, 32
      %v2587 = vpop.permute.xlu0 %2586
      %2588 = vrot.lane.b32.xlu0 %v2551, 32
      %v2589 = vpop.permute.xlu0 %2588
      %2590 = vrot.lane.b32.xlu0 %v2554, 32
      %v2591 = vpop.permute.xlu0 %2590
      %2592 = vrot.lane.b32.xlu0 %v2557, 32
      %v2593 = vpop.permute.xlu0 %2592
      %2594 = vrot.lane.b32.xlu0 %v2560, 32
      %v2595 = vpop.permute.xlu0 %2594
      %2596 = vrot.lane.b32.xlu0 %v2563, 32
      %v2597 = vpop.permute.xlu0 %2596
      %2598 = vrot.lane.b32.xlu0 %v2566, 32
      %v2599 = vpop.permute.xlu0 %2598
      %2600 = vrot.lane.b32.xlu0 %v2569, 32
      %v2601 = vpop.permute.xlu0 %2600
      %vm2602 = vcmask 31744
      %v2604 = vsel %vm2602, %v1160, %v1418
      %v2606 = vsel %vm2602, %v1161, %v1420
      %v2608 = vsel %vm2602, %v1162, %v1422
      %v2610 = vsel %vm2602, %v1163, %v1424
      %v2612 = vsel %vm2602, %v1164, %v1426
      %v2614 = vsel %vm2602, %v1165, %v1428
      %v2616 = vsel %vm2602, %v1166, %v1430
      %v2618 = vsel %vm2602, %v1167, %v1432
      %v2620 = vsel %vm2602, %v1168, %v1434
      %v2622 = vsel %vm2602, %v1169, %v1436
      %v2624 = vsel %vm2602, %v1170, %v1438
      %v2626 = vsel %vm2602, %v1171, %v1440
      %v2628 = vsel %vm2602, %v1172, %v1442
      %v2630 = vsel %vm2602, %v1173, %v1444
      %v2632 = vsel %vm2602, %v1174, %v1446
      %v2634 = vsel %vm2602, %v1175, %v1448
      %vm2635 = vcmask 64512
      %v2637 = vsel %vm2635, %v2604, %v1547
      %v2639 = vsel %vm2635, %v2606, %v1549
      %v2641 = vsel %vm2635, %v2608, %v1551
      %v2643 = vsel %vm2635, %v2610, %v1553
      %v2645 = vsel %vm2635, %v2612, %v1555
      %v2647 = vsel %vm2635, %v2614, %v1557
      %v2649 = vsel %vm2635, %v2616, %v1559
      %v2651 = vsel %vm2635, %v2618, %v1561
      %v2653 = vsel %vm2635, %v2620, %v1563
      %v2655 = vsel %vm2635, %v2622, %v1565
      %v2657 = vsel %vm2635, %v2624, %v1567
      %v2659 = vsel %vm2635, %v2626, %v1569
      %v2661 = vsel %vm2635, %v2628, %v1571
      %v2663 = vsel %vm2635, %v2630, %v1573
      %v2665 = vsel %vm2635, %v2632, %v1575
      %v2667 = vsel %vm2635, %v2634, %v1577
      %vm2668 = vcmask 97280
      %v2670 = vsel %vm2668, %v2637, %v1659
      %v2672 = vsel %vm2668, %v2639, %v1661
      %v2674 = vsel %vm2668, %v2641, %v1663
      %v2676 = vsel %vm2668, %v2643, %v1665
      %v2678 = vsel %vm2668, %v2645, %v1667
      %v2680 = vsel %vm2668, %v2647, %v1669
      %v2682 = vsel %vm2668, %v2649, %v1671
      %v2684 = vsel %vm2668, %v2651, %v1673
      %v2686 = vsel %vm2668, %v2653, %v1675
      %v2688 = vsel %vm2668, %v2655, %v1677
      %v2690 = vsel %vm2668, %v2657, %v1679
      %v2692 = vsel %vm2668, %v2659, %v1681
      %v2694 = vsel %vm2668, %v2661, %v1683
      %v2696 = vsel %vm2668, %v2663, %v1685
      %v2698 = vsel %vm2668, %v2665, %v1687
      %v2700 = vsel %vm2668, %v2667, %v1689
      %vm2701 = vcmask 130048
      %v2703 = vsel %vm2701, %v2670, %v1931
      %v2705 = vsel %vm2701, %v2672, %v1933
      %v2707 = vsel %vm2701, %v2674, %v1935
      %v2709 = vsel %vm2701, %v2676, %v1937
      %v2711 = vsel %vm2701, %v2678, %v1939
      %v2713 = vsel %vm2701, %v2680, %v1941
      %v2715 = vsel %vm2701, %v2682, %v1943
      %v2717 = vsel %vm2701, %v2684, %v1945
      %v2719 = vsel %vm2701, %v2686, %v1947
      %v2721 = vsel %vm2701, %v2688, %v1949
      %v2723 = vsel %vm2701, %v2690, %v1951
      %v2725 = vsel %vm2701, %v2692, %v1953
      %v2727 = vsel %vm2701, %v2694, %v1955
      %v2729 = vsel %vm2701, %v2696, %v1957
      %v2731 = vsel %vm2701, %v2698, %v1959
      %v2733 = vsel %vm2701, %v2700, %v1961
      %vm2734 = vcmask 162816
      %v2736 = vsel %vm2734, %v2703, %v2059
      %v2738 = vsel %vm2734, %v2705, %v2061
      %v2740 = vsel %vm2734, %v2707, %v2063
      %v2742 = vsel %vm2734, %v2709, %v2065
      %v2744 = vsel %vm2734, %v2711, %v2067
      %v2746 = vsel %vm2734, %v2713, %v2069
      %v2748 = vsel %vm2734, %v2715, %v2071
      %v2750 = vsel %vm2734, %v2717, %v2073
      %v2752 = vsel %vm2734, %v2719, %v2075
      %v2754 = vsel %vm2734, %v2721, %v2077
      %v2756 = vsel %vm2734, %v2723, %v2079
      %v2758 = vsel %vm2734, %v2725, %v2081
      %v2760 = vsel %vm2734, %v2727, %v2083
      %v2762 = vsel %vm2734, %v2729, %v2085
      %v2764 = vsel %vm2734, %v2731, %v2087
      %v2766 = vsel %vm2734, %v2733, %v2089
      %vm2767 = vcmask 195584
      %v2769 = vsel %vm2767, %v2736, %v2171
      %v2771 = vsel %vm2767, %v2738, %v2173
      %v2773 = vsel %vm2767, %v2740, %v2175
      %v2775 = vsel %vm2767, %v2742, %v2177
      %v2777 = vsel %vm2767, %v2744, %v2179
      %v2779 = vsel %vm2767, %v2746, %v2181
      %v2781 = vsel %vm2767, %v2748, %v2183
      %v2783 = vsel %vm2767, %v2750, %v2185
      %v2785 = vsel %vm2767, %v2752, %v2187
      %v2787 = vsel %vm2767, %v2754, %v2189
      %v2789 = vsel %vm2767, %v2756, %v2191
      %v2791 = vsel %vm2767, %v2758, %v2193
      %v2793 = vsel %vm2767, %v2760, %v2195
      %v2795 = vsel %vm2767, %v2762, %v2197
      %v2797 = vsel %vm2767, %v2764, %v2199
      %v2799 = vsel %vm2767, %v2766, %v2201
      %vm2800 = vcmask 228352
      %v2802 = vsel %vm2800, %v2769, %v2443
      %v2804 = vsel %vm2800, %v2771, %v2445
      %v2806 = vsel %vm2800, %v2773, %v2447
      %v2808 = vsel %vm2800, %v2775, %v2449
      %v2810 = vsel %vm2800, %v2777, %v2451
      %v2812 = vsel %vm2800, %v2779, %v2453
      %v2814 = vsel %vm2800, %v2781, %v2455
      %v2816 = vsel %vm2800, %v2783, %v2457
      %v2818 = vsel %vm2800, %v2785, %v2459
      %v2820 = vsel %vm2800, %v2787, %v2461
      %v2822 = vsel %vm2800, %v2789, %v2463
      %v2824 = vsel %vm2800, %v2791, %v2465
      %v2826 = vsel %vm2800, %v2793, %v2467
      %v2828 = vsel %vm2800, %v2795, %v2469
      %v2830 = vsel %vm2800, %v2797, %v2471
      %v2832 = vsel %vm2800, %v2799, %v2473
      %vm2833 = vcmask 261120
      %v2835 = vsel %vm2833, %v2802, %v2571
      %v2837 = vsel %vm2833, %v2804, %v2573
      %v2839 = vsel %vm2833, %v2806, %v2575
      %v2841 = vsel %vm2833, %v2808, %v2577
      %v2843 = vsel %vm2833, %v2810, %v2579
      %v2845 = vsel %vm2833, %v2812, %v2581
      %v2847 = vsel %vm2833, %v2814, %v2583
      %v2849 = vsel %vm2833, %v2816, %v2585
      %v2851 = vsel %vm2833, %v2818, %v2587
      %v2853 = vsel %vm2833, %v2820, %v2589
      %v2855 = vsel %vm2833, %v2822, %v2591
      %v2857 = vsel %vm2833, %v2824, %v2593
      %v2859 = vsel %vm2833, %v2826, %v2595
      %v2861 = vsel %vm2833, %v2828, %v2597
      %v2863 = vsel %vm2833, %v2830, %v2599
      %v2865 = vsel %vm2833, %v2832, %v2601
      %v2866 = vld [vmem:[%s1] sm:$0xf]
      %v2867 = vld [vmem:[%s1 + $0x4] sm:$0xf]
      %v2868 = vld [vmem:[%s1 + $0x8] sm:$0xf]
      %v2869 = vld [vmem:[%s1 + $0xc] sm:$0xf]
      %v2870 = vld [vmem:[%s1 + $0x10] sm:$0x3]
      %v2876 = vunpack.c.l.b16 %v2866
      %v2877 = vunpack.c.l.b16 %v2867
      %v2878 = vunpack.c.l.b16 %v2868
      %v2879 = vunpack.c.l.b16 %v2869
      %v2880 = vunpack.c.l.b16 %v2870
      %v2881 = vpack.c.b16 %v2877, %v2876
      %v2882 = vpack.c.b16 %v2879, %v2878
      %v2883 = vpack.c.b16 %v2880, %v2880
      %vm2886 = vcmask 293888
      %v2887 = vsel %vm2886, %v2835, 0
      %v2889 = vsel %vm2886, %v2837, 0
      %v2891 = vsel %vm2886, %v2839, 0
      %v2893 = vsel %vm2886, %v2841, 0
      %v2895 = vsel %vm2886, %v2843, 0
      %v2897 = vsel %vm2886, %v2845, 0
      %v2899 = vsel %vm2886, %v2847, 0
      %v2901 = vsel %vm2886, %v2849, 0
      %v2903 = vsel %vm2886, %v2851, 0
      %v2905 = vsel %vm2886, %v2853, 0
      %v2907 = vsel %vm2886, %v2855, 0
      %v2909 = vsel %vm2886, %v2857, 0
      %v2911 = vsel %vm2886, %v2859, 0
      %v2913 = vsel %vm2886, %v2861, 0
      %v2915 = vsel %vm2886, %v2863, 0
      %v2917 = vsel %vm2886, %v2865, 0
      %vm2919 = vcmask 1041408
      %v2921 = vsel %vm2919, %v2883, 0
      %2923 = vmatpush.bf16.msra.mxu0 0
      %2924 = vmatpush.bf16.msra.mxu0 0
      %2925 = vmatpush.bf16.msra.mxu0 0
      %2926 = vmatpush.bf16.msra.mxu0 0
      %2927 = vmatpush.bf16.msra.mxu0 0
      %2928 = vmatpush.bf16.msra.mxu0 %v2921
      %2929 = vmatpush.bf16.msra.mxu0 %v2882
      %2930 = vmatpush.bf16.msra.mxu0 %v2881
      %2931 = vmatmul.bf16.gmra.mxu0 %v2887
      %v2932 = vpop.f32.mrf.mxu0
      %v2933 = vadd.f32 0.0, %v2932
      %v2934 = vpop.f32.mrf.mxu0
      %v2935 = vadd.f32 0.0, %v2934
      %2936 = vmatmul.bf16.gmra.mxu0 %v2889
      %v2937 = vpop.f32.mrf.mxu0
      %v2938 = vadd.f32 0.0, %v2937
      %v2939 = vpop.f32.mrf.mxu0
      %v2940 = vadd.f32 0.0, %v2939
      %2941 = vmatmul.bf16.gmra.mxu0 %v2891
      %v2942 = vpop.f32.mrf.mxu0
      %v2943 = vadd.f32 0.0, %v2942
      %v2944 = vpop.f32.mrf.mxu0
      %v2945 = vadd.f32 0.0, %v2944
      %2946 = vmatmul.bf16.gmra.mxu0 %v2893
      %v2947 = vpop.f32.mrf.mxu0
      %v2948 = vadd.f32 0.0, %v2947
      %v2949 = vpop.f32.mrf.mxu0
      %v2950 = vadd.f32 0.0, %v2949
      %2951 = vmatmul.bf16.gmra.mxu0 %v2895
      %v2952 = vpop.f32.mrf.mxu0
      %v2953 = vadd.f32 0.0, %v2952
      %v2954 = vpop.f32.mrf.mxu0
      %v2955 = vadd.f32 0.0, %v2954
      %2956 = vmatmul.bf16.gmra.mxu0 %v2897
      %v2957 = vpop.f32.mrf.mxu0
      %v2958 = vadd.f32 0.0, %v2957
      %v2959 = vpop.f32.mrf.mxu0
      %v2960 = vadd.f32 0.0, %v2959
      %2961 = vmatmul.bf16.gmra.mxu0 %v2899
      %v2962 = vpop.f32.mrf.mxu0
      %v2963 = vadd.f32 0.0, %v2962
      %v2964 = vpop.f32.mrf.mxu0
      %v2965 = vadd.f32 0.0, %v2964
      %2966 = vmatmul.bf16.gmra.mxu0 %v2901
      %v2967 = vpop.f32.mrf.mxu0
      %v2968 = vadd.f32 0.0, %v2967
      %v2969 = vpop.f32.mrf.mxu0
      %v2970 = vadd.f32 0.0, %v2969
      %2971 = vmatmul.bf16.gmra.mxu0 %v2903
      %v2972 = vpop.f32.mrf.mxu0
      %v2973 = vadd.f32 0.0, %v2972
      %v2974 = vpop.f32.mrf.mxu0
      %v2975 = vadd.f32 0.0, %v2974
      %2976 = vmatmul.bf16.gmra.mxu0 %v2905
      %v2977 = vpop.f32.mrf.mxu0
      %v2978 = vadd.f32 0.0, %v2977
      %v2979 = vpop.f32.mrf.mxu0
      %v2980 = vadd.f32 0.0, %v2979
      %2981 = vmatmul.bf16.gmra.mxu0 %v2907
      %v2982 = vpop.f32.mrf.mxu0
      %v2983 = vadd.f32 0.0, %v2982
      %v2984 = vpop.f32.mrf.mxu0
      %v2985 = vadd.f32 0.0, %v2984
      %2986 = vmatmul.bf16.gmra.mxu0 %v2909
      %v2987 = vpop.f32.mrf.mxu0
      %v2988 = vadd.f32 0.0, %v2987
      %v2989 = vpop.f32.mrf.mxu0
      %v2990 = vadd.f32 0.0, %v2989
      %2991 = vmatmul.bf16.gmra.mxu0 %v2911
      %v2992 = vpop.f32.mrf.mxu0
      %v2993 = vadd.f32 0.0, %v2992
      %v2994 = vpop.f32.mrf.mxu0
      %v2995 = vadd.f32 0.0, %v2994
      %2996 = vmatmul.bf16.gmra.mxu0 %v2913
      %v2997 = vpop.f32.mrf.mxu0
      %v2998 = vadd.f32 0.0, %v2997
      %v2999 = vpop.f32.mrf.mxu0
      %v3000 = vadd.f32 0.0, %v2999
      %3001 = vmatmul.bf16.gmra.mxu0 %v2915
      %v3002 = vpop.f32.mrf.mxu0
      %v3003 = vadd.f32 0.0, %v3002
      %v3004 = vpop.f32.mrf.mxu0
      %v3005 = vadd.f32 0.0, %v3004
      %3006 = vmatmul.bf16.gmra.mxu0 %v2917
      %v3007 = vpop.f32.mrf.mxu0
      %v3008 = vadd.f32 0.0, %v3007
      %v3009 = vpop.f32.mrf.mxu0
      %v3010 = vadd.f32 0.0, %v3009
      %3011 = vdwg.mxu0
      %v3012 = vld [vmem:[%s2] sm:$0x1]
      %v3014 = vperm.slane %v3012, 0
      %v3016 = vmul.f32 %v2933, %v3014
      %v3017 = vmul.f32 %v2935, %v3014
      %v3018 = vmul.f32 %v2938, %v3014
      %v3019 = vmul.f32 %v2940, %v3014
      %v3020 = vmul.f32 %v2943, %v3014
      %v3021 = vmul.f32 %v2945, %v3014
      %v3022 = vmul.f32 %v2948, %v3014
      %v3023 = vmul.f32 %v2950, %v3014
      %v3024 = vmul.f32 %v2953, %v3014
      %v3025 = vmul.f32 %v2955, %v3014
      %v3026 = vmul.f32 %v2958, %v3014
      %v3027 = vmul.f32 %v2960, %v3014
      %v3028 = vmul.f32 %v2963, %v3014
      %v3029 = vmul.f32 %v2965, %v3014
      %v3030 = vmul.f32 %v2968, %v3014
      %v3031 = vmul.f32 %v2970, %v3014
      %v3032 = vmul.f32 %v2973, %v3014
      %v3033 = vmul.f32 %v2975, %v3014
      %v3034 = vmul.f32 %v2978, %v3014
      %v3035 = vmul.f32 %v2980, %v3014
      %v3036 = vmul.f32 %v2983, %v3014
      %v3037 = vmul.f32 %v2985, %v3014
      %v3038 = vmul.f32 %v2988, %v3014
      %v3039 = vmul.f32 %v2990, %v3014
      %v3040 = vmul.f32 %v2993, %v3014
      %v3041 = vmul.f32 %v2995, %v3014
      %v3042 = vmul.f32 %v2998, %v3014
      %v3043 = vmul.f32 %v3000, %v3014
      %v3044 = vmul.f32 %v3003, %v3014
      %v3045 = vmul.f32 %v3005, %v3014
      %v3046 = vmul.f32 %v3008, %v3014
      %v3047 = vmul.f32 %v3010, %v3014
      %v3048 = vld [vmem:[%s3] sm:$0x1]
      %v3050 = vperm.slane %v3048, 0
      %v3052 = vadd.f32 %v3016, %v3050
      %v3053 = vadd.f32 %v3017, %v3050
      %v3054 = vadd.f32 %v3018, %v3050
      %v3055 = vadd.f32 %v3019, %v3050
      %v3056 = vadd.f32 %v3020, %v3050
      %v3057 = vadd.f32 %v3021, %v3050
      %v3058 = vadd.f32 %v3022, %v3050
      %v3059 = vadd.f32 %v3023, %v3050
      %v3060 = vadd.f32 %v3024, %v3050
      %v3061 = vadd.f32 %v3025, %v3050
      %v3062 = vadd.f32 %v3026, %v3050
      %v3063 = vadd.f32 %v3027, %v3050
      %v3064 = vadd.f32 %v3028, %v3050
      %v3065 = vadd.f32 %v3029, %v3050
      %v3066 = vadd.f32 %v3030, %v3050
      %v3067 = vadd.f32 %v3031, %v3050
      %v3068 = vadd.f32 %v3032, %v3050
      %v3069 = vadd.f32 %v3033, %v3050
      %v3070 = vadd.f32 %v3034, %v3050
      %v3071 = vadd.f32 %v3035, %v3050
      %v3072 = vadd.f32 %v3036, %v3050
      %v3073 = vadd.f32 %v3037, %v3050
      %v3074 = vadd.f32 %v3038, %v3050
      %v3075 = vadd.f32 %v3039, %v3050
      %v3076 = vadd.f32 %v3040, %v3050
      %v3077 = vadd.f32 %v3041, %v3050
      %v3078 = vadd.f32 %v3042, %v3050
      %v3079 = vadd.f32 %v3043, %v3050
      %v3080 = vadd.f32 %v3044, %v3050
      %v3081 = vadd.f32 %v3045, %v3050
      %v3082 = vadd.f32 %v3046, %v3050
      %v3083 = vadd.f32 %v3047, %v3050
      %v3084 = vmax.f32 %v3052, 0.0
      %v3085 = vmax.f32 %v3053, 0.0
      %v3086 = vmax.f32 %v3054, 0.0
      %v3087 = vmax.f32 %v3055, 0.0
      %v3088 = vmax.f32 %v3056, 0.0
      %v3089 = vmax.f32 %v3057, 0.0
      %v3090 = vmax.f32 %v3058, 0.0
      %v3091 = vmax.f32 %v3059, 0.0
      %v3092 = vmax.f32 %v3060, 0.0
      %v3093 = vmax.f32 %v3061, 0.0
      %v3094 = vmax.f32 %v3062, 0.0
      %v3095 = vmax.f32 %v3063, 0.0
      %v3096 = vmax.f32 %v3064, 0.0
      %v3097 = vmax.f32 %v3065, 0.0
      %v3098 = vmax.f32 %v3066, 0.0
      %v3099 = vmax.f32 %v3067, 0.0
      %v3100 = vmax.f32 %v3068, 0.0
      %v3101 = vmax.f32 %v3069, 0.0
      %v3102 = vmax.f32 %v3070, 0.0
      %v3103 = vmax.f32 %v3071, 0.0
      %v3104 = vmax.f32 %v3072, 0.0
      %v3105 = vmax.f32 %v3073, 0.0
      %v3106 = vmax.f32 %v3074, 0.0
      %v3107 = vmax.f32 %v3075, 0.0
      %v3108 = vmax.f32 %v3076, 0.0
      %v3109 = vmax.f32 %v3077, 0.0
      %v3110 = vmax.f32 %v3078, 0.0
      %v3111 = vmax.f32 %v3079, 0.0
      %v3112 = vmax.f32 %v3080, 0.0
      %v3113 = vmax.f32 %v3081, 0.0
      %v3114 = vmax.f32 %v3082, 0.0
      %v3115 = vmax.f32 %v3083, 0.0
      %3116 = vst.msk [vmem:[#allocation3] sm:$0xf] %vm280, 0
      %3117 = vst.msk [vmem:[#allocation3 + $0x4] sm:$0xf] %vm280, 0
      %3118 = vst.msk [vmem:[#allocation3 + $0x8] sm:$0x1] %vm283, 0
      %s3119 = scalar_lea.vmem [#allocation3], 204
      %3120 = vst.msk [vmem:[%s3119] sm:$0xf] %vm280, 0
      %3121 = vst.msk [vmem:[%s3119 + $0x4] sm:$0xf] %vm280, 0
      %3122 = vst.msk [vmem:[%s3119 + $0x8] sm:$0x1] %vm283, 0
      %v3123 = vld [vmem:[#allocation3] sm:$0x1]
      %v3124 = vsel %vm291, 0, %v3123
      %3125 = vst [vmem:[#allocation3] sm:$0x1] %v3124
      %v3126 = vld [vmem:[#allocation3 + $0xc] sm:$0x1]
      %v3127 = vsel %vm291, 0, %v3126
      %3128 = vst [vmem:[#allocation3 + $0xc] sm:$0x1] %v3127
      %v3129 = vld [vmem:[#allocation3 + $0x18] sm:$0x1]
      %v3130 = vsel %vm291, 0, %v3129
      %3131 = vst [vmem:[#allocation3 + $0x18] sm:$0x1] %v3130
      %v3132 = vld [vmem:[#allocation3 + $0x24] sm:$0x1]
      %v3133 = vsel %vm291, 0, %v3132
      %3134 = vst [vmem:[#allocation3 + $0x24] sm:$0x1] %v3133
      %v3135 = vld [vmem:[#allocation3 + $0x30] sm:$0x1]
      %v3136 = vsel %vm291, 0, %v3135
      %3137 = vst [vmem:[#allocation3 + $0x30] sm:$0x1] %v3136
      %v3138 = vld [vmem:[#allocation3 + $0x3c] sm:$0x1]
      %v3139 = vsel %vm291, 0, %v3138
      %3140 = vst [vmem:[#allocation3 + $0x3c] sm:$0x1] %v3139
      %v3141 = vld [vmem:[#allocation3 + $0x48] sm:$0x1]
      %v3142 = vsel %vm291, 0, %v3141
      %3143 = vst [vmem:[#allocation3 + $0x48] sm:$0x1] %v3142
      %v3144 = vld [vmem:[#allocation3 + $0x54] sm:$0x1]
      %v3145 = vsel %vm291, 0, %v3144
      %3146 = vst [vmem:[#allocation3 + $0x54] sm:$0x1] %v3145
      %v3147 = vld [vmem:[#allocation3 + $0x60] sm:$0x1]
      %v3148 = vsel %vm291, 0, %v3147
      %3149 = vst [vmem:[#allocation3 + $0x60] sm:$0x1] %v3148
      %v3150 = vld [vmem:[#allocation3 + $0x6c] sm:$0x1]
      %v3151 = vsel %vm291, 0, %v3150
      %3152 = vst [vmem:[#allocation3 + $0x6c] sm:$0x1] %v3151
      %v3153 = vld [vmem:[#allocation3 + $0x78] sm:$0x1]
      %v3154 = vsel %vm291, 0, %v3153
      %3155 = vst [vmem:[#allocation3 + $0x78] sm:$0x1] %v3154
      %v3156 = vld [vmem:[#allocation3 + $0x84] sm:$0x1]
      %v3157 = vsel %vm291, 0, %v3156
      %3158 = vst [vmem:[#allocation3 + $0x84] sm:$0x1] %v3157
      %v3159 = vld [vmem:[#allocation3 + $0x90] sm:$0x1]
      %v3160 = vsel %vm291, 0, %v3159
      %3161 = vst [vmem:[#allocation3 + $0x90] sm:$0x1] %v3160
      %v3162 = vld [vmem:[#allocation3 + $0x9c] sm:$0x1]
      %v3163 = vsel %vm291, 0, %v3162
      %3164 = vst [vmem:[#allocation3 + $0x9c] sm:$0x1] %v3163
      %v3165 = vld [vmem:[#allocation3 + $0xa8] sm:$0x1]
      %v3166 = vsel %vm291, 0, %v3165
      %3167 = vst [vmem:[#allocation3 + $0xa8] sm:$0x1] %v3166
      %v3168 = vld [vmem:[#allocation3 + $0xb4] sm:$0x1]
      %v3169 = vsel %vm291, 0, %v3168
      %3170 = vst [vmem:[#allocation3 + $0xb4] sm:$0x1] %v3169
      %v3171 = vld [vmem:[#allocation3 + $0xc0] sm:$0x1]
      %v3172 = vsel %vm291, 0, %v3171
      %3173 = vst [vmem:[#allocation3 + $0xc0] sm:$0x1] %v3172
      %v3174 = vld [vmem:[#allocation3 + $0xcc] sm:$0x1]
      %v3175 = vsel %vm291, 0, %v3174
      %3176 = vst [vmem:[#allocation3 + $0xcc] sm:$0x1] %v3175
      %v3177 = vld [vmem:[#allocation3 + $0x8] sm:$0x1]
      %v3178 = vsel %vm347, 0, %v3177
      %3179 = vst [vmem:[#allocation3 + $0x8] sm:$0x1] %v3178
      %v3180 = vld [vmem:[#allocation3 + $0x14] sm:$0x1]
      %v3181 = vsel %vm347, 0, %v3180
      %3182 = vst [vmem:[#allocation3 + $0x14] sm:$0x1] %v3181
      %v3183 = vld [vmem:[#allocation3 + $0x20] sm:$0x1]
      %v3184 = vsel %vm347, 0, %v3183
      %3185 = vst [vmem:[#allocation3 + $0x20] sm:$0x1] %v3184
      %v3186 = vld [vmem:[#allocation3 + $0x2c] sm:$0x1]
      %v3187 = vsel %vm347, 0, %v3186
      %3188 = vst [vmem:[#allocation3 + $0x2c] sm:$0x1] %v3187
      %v3189 = vld [vmem:[#allocation3 + $0x38] sm:$0x1]
      %v3190 = vsel %vm347, 0, %v3189
      %3191 = vst [vmem:[#allocation3 + $0x38] sm:$0x1] %v3190
      %v3192 = vld [vmem:[#allocation3 + $0x44] sm:$0x1]
      %v3193 = vsel %vm347, 0, %v3192
      %3194 = vst [vmem:[#allocation3 + $0x44] sm:$0x1] %v3193
      %v3195 = vld [vmem:[#allocation3 + $0x50] sm:$0x1]
      %v3196 = vsel %vm347, 0, %v3195
      %3197 = vst [vmem:[#allocation3 + $0x50] sm:$0x1] %v3196
      %v3198 = vld [vmem:[#allocation3 + $0x5c] sm:$0x1]
      %v3199 = vsel %vm347, 0, %v3198
      %3200 = vst [vmem:[#allocation3 + $0x5c] sm:$0x1] %v3199
      %v3201 = vld [vmem:[#allocation3 + $0x68] sm:$0x1]
      %v3202 = vsel %vm347, 0, %v3201
      %3203 = vst [vmem:[#allocation3 + $0x68] sm:$0x1] %v3202
      %v3204 = vld [vmem:[#allocation3 + $0x74] sm:$0x1]
      %v3205 = vsel %vm347, 0, %v3204
      %3206 = vst [vmem:[#allocation3 + $0x74] sm:$0x1] %v3205
      %v3207 = vld [vmem:[#allocation3 + $0x80] sm:$0x1]
      %v3208 = vsel %vm347, 0, %v3207
      %3209 = vst [vmem:[#allocation3 + $0x80] sm:$0x1] %v3208
      %v3210 = vld [vmem:[#allocation3 + $0x8c] sm:$0x1]
      %v3211 = vsel %vm347, 0, %v3210
      %3212 = vst [vmem:[#allocation3 + $0x8c] sm:$0x1] %v3211
      %v3213 = vld [vmem:[#allocation3 + $0x98] sm:$0x1]
      %v3214 = vsel %vm347, 0, %v3213
      %3215 = vst [vmem:[#allocation3 + $0x98] sm:$0x1] %v3214
      %v3216 = vld [vmem:[#allocation3 + $0xa4] sm:$0x1]
      %v3217 = vsel %vm347, 0, %v3216
      %3218 = vst [vmem:[#allocation3 + $0xa4] sm:$0x1] %v3217
      %v3219 = vld [vmem:[#allocation3 + $0xb0] sm:$0x1]
      %v3220 = vsel %vm347, 0, %v3219
      %3221 = vst [vmem:[#allocation3 + $0xb0] sm:$0x1] %v3220
      %v3222 = vld [vmem:[#allocation3 + $0xbc] sm:$0x1]
      %v3223 = vsel %vm347, 0, %v3222
      %3224 = vst [vmem:[#allocation3 + $0xbc] sm:$0x1] %v3223
      %v3225 = vld [vmem:[#allocation3 + $0xc8] sm:$0x1]
      %v3226 = vsel %vm347, 0, %v3225
      %3227 = vst [vmem:[#allocation3 + $0xc8] sm:$0x1] %v3226
      %v3228 = vld [vmem:[#allocation3 + $0xd4] sm:$0x1]
      %v3229 = vsel %vm347, 0, %v3228
      %3230 = vst [vmem:[#allocation3 + $0xd4] sm:$0x1] %v3229
      %v3231 = vpack.c.bf16 %v3084, %v3084
      %v3232 = vpack.c.bf16 %v3085, %v3085
      %v3233 = vpack.c.bf16 %v3086, %v3086
      %v3234 = vpack.c.bf16 %v3087, %v3087
      %v3235 = vpack.c.bf16 %v3088, %v3088
      %v3236 = vpack.c.bf16 %v3089, %v3089
      %v3237 = vpack.c.bf16 %v3090, %v3090
      %v3238 = vpack.c.bf16 %v3091, %v3091
      %v3239 = vpack.c.bf16 %v3092, %v3092
      %v3240 = vpack.c.bf16 %v3093, %v3093
      %v3241 = vpack.c.bf16 %v3094, %v3094
      %v3242 = vpack.c.bf16 %v3095, %v3095
      %v3243 = vpack.c.bf16 %v3096, %v3096
      %v3244 = vpack.c.bf16 %v3097, %v3097
      %v3245 = vpack.c.bf16 %v3098, %v3098
      %v3246 = vpack.c.bf16 %v3099, %v3099
      %v3247 = vpack.c.bf16 %v3100, %v3100
      %v3248 = vpack.c.bf16 %v3101, %v3101
      %v3249 = vpack.c.bf16 %v3102, %v3102
      %v3250 = vpack.c.bf16 %v3103, %v3103
      %v3251 = vpack.c.bf16 %v3104, %v3104
      %v3252 = vpack.c.bf16 %v3105, %v3105
      %v3253 = vpack.c.bf16 %v3106, %v3106
      %v3254 = vpack.c.bf16 %v3107, %v3107
      %v3255 = vpack.c.bf16 %v3108, %v3108
      %v3256 = vpack.c.bf16 %v3109, %v3109
      %v3257 = vpack.c.bf16 %v3110, %v3110
      %v3258 = vpack.c.bf16 %v3111, %v3111
      %v3259 = vpack.c.bf16 %v3112, %v3112
      %v3260 = vpack.c.bf16 %v3113, %v3113
      %v3261 = vpack.c.bf16 %v3114, %v3114
      %v3262 = vpack.c.bf16 %v3115, %v3115
      %v3264 = vshrl.u32 %v3231, 16
      %v3266 = vrot.slane %v3264, 7
      %v3267 = vshll.u32 %v3231, 16
      %v3269 = vor.u32 %v3266, %v3267
      %v3270 = vrot.slane %v3266, 4
      %v3272 = vshrl.u32 %v3232, 16
      %v3274 = vrot.slane %v3272, 7
      %v3275 = vshll.u32 %v3232, 16
      %v3277 = vor.u32 %v3274, %v3275
      %v3278 = vsel %vm467, %v3270, %v3277
      %v3279 = vrot.slane %v3274, 4
      %v3281 = vshrl.u32 %v3233, 16
      %v3283 = vrot.slane %v3281, 7
      %v3284 = vshll.u32 %v3233, 16
      %v3286 = vor.u32 %v3283, %v3284
      %v3287 = vrot.slane %v3283, 4
      %v3289 = vshrl.u32 %v3234, 16
      %v3291 = vrot.slane %v3289, 7
      %v3292 = vshll.u32 %v3234, 16
      %v3294 = vor.u32 %v3291, %v3292
      %v3295 = vsel %vm467, %v3287, %v3294
      %v3296 = vrot.slane %v3291, 4
      %v3298 = vshrl.u32 %v3235, 16
      %v3300 = vrot.slane %v3298, 7
      %v3301 = vshll.u32 %v3235, 16
      %v3303 = vor.u32 %v3300, %v3301
      %v3304 = vrot.slane %v3300, 4
      %v3306 = vshrl.u32 %v3236, 16
      %v3308 = vrot.slane %v3306, 7
      %v3309 = vshll.u32 %v3236, 16
      %v3311 = vor.u32 %v3308, %v3309
      %v3312 = vsel %vm467, %v3304, %v3311
      %v3313 = vrot.slane %v3308, 4
      %v3315 = vshrl.u32 %v3237, 16
      %v3317 = vrot.slane %v3315, 7
      %v3318 = vshll.u32 %v3237, 16
      %v3320 = vor.u32 %v3317, %v3318
      %v3321 = vrot.slane %v3317, 4
      %v3323 = vshrl.u32 %v3238, 16
      %v3325 = vrot.slane %v3323, 7
      %v3326 = vshll.u32 %v3238, 16
      %v3328 = vor.u32 %v3325, %v3326
      %v3329 = vsel %vm467, %v3321, %v3328
      %v3330 = vrot.slane %v3325, 4
      %v3332 = vshrl.u32 %v3239, 16
      %v3334 = vrot.slane %v3332, 7
      %v3335 = vshll.u32 %v3239, 16
      %v3337 = vor.u32 %v3334, %v3335
      %v3338 = vrot.slane %v3334, 4
      %v3340 = vshrl.u32 %v3240, 16
      %v3342 = vrot.slane %v3340, 7
      %v3343 = vshll.u32 %v3240, 16
      %v3345 = vor.u32 %v3342, %v3343
      %v3346 = vsel %vm467, %v3338, %v3345
      %v3347 = vrot.slane %v3342, 4
      %v3349 = vshrl.u32 %v3241, 16
      %v3351 = vrot.slane %v3349, 7
      %v3352 = vshll.u32 %v3241, 16
      %v3354 = vor.u32 %v3351, %v3352
      %v3355 = vrot.slane %v3351, 4
      %v3357 = vshrl.u32 %v3242, 16
      %v3359 = vrot.slane %v3357, 7
      %v3360 = vshll.u32 %v3242, 16
      %v3362 = vor.u32 %v3359, %v3360
      %v3363 = vsel %vm467, %v3355, %v3362
      %v3364 = vrot.slane %v3359, 4
      %v3366 = vshrl.u32 %v3243, 16
      %v3368 = vrot.slane %v3366, 7
      %v3369 = vshll.u32 %v3243, 16
      %v3371 = vor.u32 %v3368, %v3369
      %v3372 = vrot.slane %v3368, 4
      %v3374 = vshrl.u32 %v3244, 16
      %v3376 = vrot.slane %v3374, 7
      %v3377 = vshll.u32 %v3244, 16
      %v3379 = vor.u32 %v3376, %v3377
      %v3380 = vsel %vm467, %v3372, %v3379
      %v3381 = vrot.slane %v3376, 4
      %v3383 = vshrl.u32 %v3245, 16
      %v3385 = vrot.slane %v3383, 7
      %v3386 = vshll.u32 %v3245, 16
      %v3388 = vor.u32 %v3385, %v3386
      %v3389 = vrot.slane %v3385, 4
      %v3391 = vshrl.u32 %v3246, 16
      %v3393 = vrot.slane %v3391, 7
      %v3394 = vshll.u32 %v3246, 16
      %v3396 = vor.u32 %v3393, %v3394
      %v3397 = vsel %vm467, %v3389, %v3396
      %v3398 = vrot.slane %v3393, 4
      %v3400 = vshrl.u32 %v3247, 16
      %v3402 = vrot.slane %v3400, 7
      %v3403 = vshll.u32 %v3247, 16
      %v3405 = vor.u32 %v3402, %v3403
      %v3406 = vrot.slane %v3402, 4
      %v3408 = vshrl.u32 %v3248, 16
      %v3410 = vrot.slane %v3408, 7
      %v3411 = vshll.u32 %v3248, 16
      %v3413 = vor.u32 %v3410, %v3411
      %v3414 = vsel %vm467, %v3406, %v3413
      %v3415 = vrot.slane %v3410, 4
      %v3417 = vshrl.u32 %v3249, 16
      %v3419 = vrot.slane %v3417, 7
      %v3420 = vshll.u32 %v3249, 16
      %v3422 = vor.u32 %v3419, %v3420
      %v3423 = vrot.slane %v3419, 4
      %v3425 = vshrl.u32 %v3250, 16
      %v3427 = vrot.slane %v3425, 7
      %v3428 = vshll.u32 %v3250, 16
      %v3430 = vor.u32 %v3427, %v3428
      %v3431 = vsel %vm467, %v3423, %v3430
      %v3432 = vrot.slane %v3427, 4
      %v3434 = vshrl.u32 %v3251, 16
      %v3436 = vrot.slane %v3434, 7
      %v3437 = vshll.u32 %v3251, 16
      %v3439 = vor.u32 %v3436, %v3437
      %v3440 = vrot.slane %v3436, 4
      %v3442 = vshrl.u32 %v3252, 16
      %v3444 = vrot.slane %v3442, 7
      %v3445 = vshll.u32 %v3252, 16
      %v3447 = vor.u32 %v3444, %v3445
      %v3448 = vsel %vm467, %v3440, %v3447
      %v3449 = vrot.slane %v3444, 4
      %v3451 = vshrl.u32 %v3253, 16
      %v3453 = vrot.slane %v3451, 7
      %v3454 = vshll.u32 %v3253, 16
      %v3456 = vor.u32 %v3453, %v3454
      %v3457 = vrot.slane %v3453, 4
      %v3459 = vshrl.u32 %v3254, 16
      %v3461 = vrot.slane %v3459, 7
      %v3462 = vshll.u32 %v3254, 16
      %v3464 = vor.u32 %v3461, %v3462
      %v3465 = vsel %vm467, %v3457, %v3464
      %v3466 = vrot.slane %v3461, 4
      %v3468 = vshrl.u32 %v3255, 16
      %v3470 = vrot.slane %v3468, 7
      %v3471 = vshll.u32 %v3255, 16
      %v3473 = vor.u32 %v3470, %v3471
      %v3474 = vrot.slane %v3470, 4
      %v3476 = vshrl.u32 %v3256, 16
      %v3478 = vrot.slane %v3476, 7
      %v3479 = vshll.u32 %v3256, 16
      %v3481 = vor.u32 %v3478, %v3479
      %v3482 = vsel %vm467, %v3474, %v3481
      %v3483 = vrot.slane %v3478, 4
      %v3485 = vshrl.u32 %v3257, 16
      %v3487 = vrot.slane %v3485, 7
      %v3488 = vshll.u32 %v3257, 16
      %v3490 = vor.u32 %v3487, %v3488
      %v3491 = vrot.slane %v3487, 4
      %v3493 = vshrl.u32 %v3258, 16
      %v3495 = vrot.slane %v3493, 7
      %v3496 = vshll.u32 %v3258, 16
      %v3498 = vor.u32 %v3495, %v3496
      %v3499 = vsel %vm467, %v3491, %v3498
      %v3500 = vrot.slane %v3495, 4
      %v3502 = vshrl.u32 %v3259, 16
      %v3504 = vrot.slane %v3502, 7
      %v3505 = vshll.u32 %v3259, 16
      %v3507 = vor.u32 %v3504, %v3505
      %v3508 = vrot.slane %v3504, 4
      %v3510 = vshrl.u32 %v3260, 16
      %v3512 = vrot.slane %v3510, 7
      %v3513 = vshll.u32 %v3260, 16
      %v3515 = vor.u32 %v3512, %v3513
      %v3516 = vsel %vm467, %v3508, %v3515
      %v3517 = vrot.slane %v3512, 4
      %v3519 = vshrl.u32 %v3261, 16
      %v3521 = vrot.slane %v3519, 7
      %v3522 = vshll.u32 %v3261, 16
      %v3524 = vor.u32 %v3521, %v3522
      %v3525 = vrot.slane %v3521, 4
      %v3527 = vshrl.u32 %v3262, 16
      %v3529 = vrot.slane %v3527, 7
      %v3530 = vshll.u32 %v3262, 16
      %v3532 = vor.u32 %v3529, %v3530
      %v3533 = vsel %vm467, %v3525, %v3532
      %v3534 = vrot.slane %v3529, 4
      %s3583 = scalar_lea.vmem [#allocation3], 12
      %v3584 = vld [vmem:[%s3583] sm:$0xf]
      %v3585 = vsel %vm790, %v3269, %v3584
      %3586 = vst [vmem:[%s3583] sm:$0xf] %v3585
      %3587 = vst.msk [vmem:[%s3583 + $0x4] sm:$0xf] %vm280, %v3278
      %v3588 = vld [vmem:[%s3583 + $0x8] sm:$0x1]
      %v3589 = vsel %vm291, %v3279, %v3588
      %3590 = vst [vmem:[%s3583 + $0x8] sm:$0x1] %v3589
      %v3591 = vld [vmem:[%s3583 + $0xc] sm:$0xf]
      %v3592 = vsel %vm790, %v3286, %v3591
      %3593 = vst [vmem:[%s3583 + $0xc] sm:$0xf] %v3592
      %3594 = vst.msk [vmem:[%s3583 + $0x10] sm:$0xf] %vm280, %v3295
      %v3595 = vld [vmem:[%s3583 + $0x14] sm:$0x1]
      %v3596 = vsel %vm291, %v3296, %v3595
      %3597 = vst [vmem:[%s3583 + $0x14] sm:$0x1] %v3596
      %v3598 = vld [vmem:[%s3583 + $0x18] sm:$0xf]
      %v3599 = vsel %vm790, %v3303, %v3598
      %3600 = vst [vmem:[%s3583 + $0x18] sm:$0xf] %v3599
      %3601 = vst.msk [vmem:[%s3583 + $0x1c] sm:$0xf] %vm280, %v3312
      %v3602 = vld [vmem:[%s3583 + $0x20] sm:$0x1]
      %v3603 = vsel %vm291, %v3313, %v3602
      %3604 = vst [vmem:[%s3583 + $0x20] sm:$0x1] %v3603
      %v3605 = vld [vmem:[%s3583 + $0x24] sm:$0xf]
      %v3606 = vsel %vm790, %v3320, %v3605
      %3607 = vst [vmem:[%s3583 + $0x24] sm:$0xf] %v3606
      %3608 = vst.msk [vmem:[%s3583 + $0x28] sm:$0xf] %vm280, %v3329
      %v3609 = vld [vmem:[%s3583 + $0x2c] sm:$0x1]
      %v3610 = vsel %vm291, %v3330, %v3609
      %3611 = vst [vmem:[%s3583 + $0x2c] sm:$0x1] %v3610
      %v3612 = vld [vmem:[%s3583 + $0x30] sm:$0xf]
      %v3613 = vsel %vm790, %v3337, %v3612
      %3614 = vst [vmem:[%s3583 + $0x30] sm:$0xf] %v3613
      %3615 = vst.msk [vmem:[%s3583 + $0x34] sm:$0xf] %vm280, %v3346
      %v3616 = vld [vmem:[%s3583 + $0x38] sm:$0x1]
      %v3617 = vsel %vm291, %v3347, %v3616
      %3618 = vst [vmem:[%s3583 + $0x38] sm:$0x1] %v3617
      %v3619 = vld [vmem:[%s3583 + $0x3c] sm:$0xf]
      %v3620 = vsel %vm790, %v3354, %v3619
      %3621 = vst [vmem:[%s3583 + $0x3c] sm:$0xf] %v3620
      %3622 = vst.msk [vmem:[%s3583 + $0x40] sm:$0xf] %vm280, %v3363
      %v3623 = vld [vmem:[%s3583 + $0x44] sm:$0x1]
      %v3624 = vsel %vm291, %v3364, %v3623
      %3625 = vst [vmem:[%s3583 + $0x44] sm:$0x1] %v3624
      %v3626 = vld [vmem:[%s3583 + $0x48] sm:$0xf]
      %v3627 = vsel %vm790, %v3371, %v3626
      %3628 = vst [vmem:[%s3583 + $0x48] sm:$0xf] %v3627
      %3629 = vst.msk [vmem:[%s3583 + $0x4c] sm:$0xf] %vm280, %v3380
      %v3630 = vld [vmem:[%s3583 + $0x50] sm:$0x1]
      %v3631 = vsel %vm291, %v3381, %v3630
      %3632 = vst [vmem:[%s3583 + $0x50] sm:$0x1] %v3631
      %v3633 = vld [vmem:[%s3583 + $0x54] sm:$0xf]
      %v3634 = vsel %vm790, %v3388, %v3633
      %3635 = vst [vmem:[%s3583 + $0x54] sm:$0xf] %v3634
      %3636 = vst.msk [vmem:[%s3583 + $0x58] sm:$0xf] %vm280, %v3397
      %v3637 = vld [vmem:[%s3583 + $0x5c] sm:$0x1]
      %v3638 = vsel %vm291, %v3398, %v3637
      %3639 = vst [vmem:[%s3583 + $0x5c] sm:$0x1] %v3638
      %v3640 = vld [vmem:[%s3583 + $0x60] sm:$0xf]
      %v3641 = vsel %vm790, %v3405, %v3640
      %3642 = vst [vmem:[%s3583 + $0x60] sm:$0xf] %v3641
      %3643 = vst.msk [vmem:[%s3583 + $0x64] sm:$0xf] %vm280, %v3414
      %v3644 = vld [vmem:[%s3583 + $0x68] sm:$0x1]
      %v3645 = vsel %vm291, %v3415, %v3644
      %3646 = vst [vmem:[%s3583 + $0x68] sm:$0x1] %v3645
      %v3647 = vld [vmem:[%s3583 + $0x6c] sm:$0xf]
      %v3648 = vsel %vm790, %v3422, %v3647
      %3649 = vst [vmem:[%s3583 + $0x6c] sm:$0xf] %v3648
      %3650 = vst.msk [vmem:[%s3583 + $0x70] sm:$0xf] %vm280, %v3431
      %v3651 = vld [vmem:[%s3583 + $0x74] sm:$0x1]
      %v3652 = vsel %vm291, %v3432, %v3651
      %3653 = vst [vmem:[%s3583 + $0x74] sm:$0x1] %v3652
      %v3654 = vld [vmem:[%s3583 + $0x78] sm:$0xf]
      %v3655 = vsel %vm790, %v3439, %v3654
      %3656 = vst [vmem:[%s3583 + $0x78] sm:$0xf] %v3655
      %3657 = vst.msk [vmem:[%s3583 + $0x7c] sm:$0xf] %vm280, %v3448
      %v3658 = vld [vmem:[%s3583 + $0x80] sm:$0x1]
      %v3659 = vsel %vm291, %v3449, %v3658
      %3660 = vst [vmem:[%s3583 + $0x80] sm:$0x1] %v3659
      %v3661 = vld [vmem:[%s3583 + $0x84] sm:$0xf]
      %v3662 = vsel %vm790, %v3456, %v3661
      %3663 = vst [vmem:[%s3583 + $0x84] sm:$0xf] %v3662
      %3664 = vst.msk [vmem:[%s3583 + $0x88] sm:$0xf] %vm280, %v3465
      %v3665 = vld [vmem:[%s3583 + $0x8c] sm:$0x1]
      %v3666 = vsel %vm291, %v3466, %v3665
      %3667 = vst [vmem:[%s3583 + $0x8c] sm:$0x1] %v3666
      %v3668 = vld [vmem:[%s3583 + $0x90] sm:$0xf]
      %v3669 = vsel %vm790, %v3473, %v3668
      %3670 = vst [vmem:[%s3583 + $0x90] sm:$0xf] %v3669
      %3671 = vst.msk [vmem:[%s3583 + $0x94] sm:$0xf] %vm280, %v3482
      %v3672 = vld [vmem:[%s3583 + $0x98] sm:$0x1]
      %v3673 = vsel %vm291, %v3483, %v3672
      %3674 = vst [vmem:[%s3583 + $0x98] sm:$0x1] %v3673
      %v3675 = vld [vmem:[%s3583 + $0x9c] sm:$0xf]
      %v3676 = vsel %vm790, %v3490, %v3675
      %3677 = vst [vmem:[%s3583 + $0x9c] sm:$0xf] %v3676
      %3678 = vst.msk [vmem:[%s3583 + $0xa0] sm:$0xf] %vm280, %v3499
      %v3679 = vld [vmem:[%s3583 + $0xa4] sm:$0x1]
      %v3680 = vsel %vm291, %v3500, %v3679
      %3681 = vst [vmem:[%s3583 + $0xa4] sm:$0x1] %v3680
      %v3682 = vld [vmem:[%s3583 + $0xa8] sm:$0xf]
      %v3683 = vsel %vm790, %v3507, %v3682
      %3684 = vst [vmem:[%s3583 + $0xa8] sm:$0xf] %v3683
      %3685 = vst.msk [vmem:[%s3583 + $0xac] sm:$0xf] %vm280, %v3516
      %v3686 = vld [vmem:[%s3583 + $0xb0] sm:$0x1]
      %v3687 = vsel %vm291, %v3517, %v3686
      %3688 = vst [vmem:[%s3583 + $0xb0] sm:$0x1] %v3687
      %v3689 = vld [vmem:[%s3583 + $0xb4] sm:$0xf]
      %v3690 = vsel %vm790, %v3524, %v3689
      %3691 = vst [vmem:[%s3583 + $0xb4] sm:$0xf] %v3690
      %3692 = vst.msk [vmem:[%s3583 + $0xb8] sm:$0xf] %vm280, %v3533
      %v3693 = vld [vmem:[%s3583 + $0xbc] sm:$0x1]
      %v3694 = vsel %vm291, %v3534, %v3693
      %3695 = vst [vmem:[%s3583 + $0xbc] sm:$0x1] %v3694
      %v3696 = vld [vmem:[#allocation3] sm:$0xf]
      %v3697 = vld [vmem:[#allocation3 + $0x4] sm:$0xf]
      %v3698 = vld [vmem:[#allocation3 + $0xc] sm:$0xf]
      %v3699 = vld [vmem:[#allocation3 + $0x10] sm:$0xf]
      %v3700 = vld [vmem:[#allocation3 + $0x18] sm:$0xf]
      %v3701 = vld [vmem:[#allocation3 + $0x1c] sm:$0xf]
      %v3702 = vld [vmem:[#allocation3 + $0x24] sm:$0xf]
      %v3703 = vld [vmem:[#allocation3 + $0x28] sm:$0xf]
      %v3704 = vld [vmem:[#allocation3 + $0x30] sm:$0xf]
      %v3705 = vld [vmem:[#allocation3 + $0x34] sm:$0xf]
      %v3706 = vld [vmem:[#allocation3 + $0x3c] sm:$0xf]
      %v3707 = vld [vmem:[#allocation3 + $0x40] sm:$0xf]
      %v3708 = vld [vmem:[#allocation3 + $0x48] sm:$0xf]
      %v3709 = vld [vmem:[#allocation3 + $0x4c] sm:$0xf]
      %v3710 = vld [vmem:[#allocation3 + $0x54] sm:$0xf]
      %v3711 = vld [vmem:[#allocation3 + $0x58] sm:$0xf]
      %v3712 = vld [vmem:[#allocation3 + $0x60] sm:$0xf]
      %v3713 = vld [vmem:[#allocation3 + $0x64] sm:$0xf]
      %v3714 = vld [vmem:[#allocation3 + $0x6c] sm:$0xf]
      %v3715 = vld [vmem:[#allocation3 + $0x70] sm:$0xf]
      %v3716 = vld [vmem:[#allocation3 + $0x78] sm:$0xf]
      %v3717 = vld [vmem:[#allocation3 + $0x7c] sm:$0xf]
      %v3718 = vld [vmem:[#allocation3 + $0x84] sm:$0xf]
      %v3719 = vld [vmem:[#allocation3 + $0x88] sm:$0xf]
      %v3720 = vld [vmem:[#allocation3 + $0x90] sm:$0xf]
      %v3721 = vld [vmem:[#allocation3 + $0x94] sm:$0xf]
      %v3722 = vld [vmem:[#allocation3 + $0x9c] sm:$0xf]
      %v3723 = vld [vmem:[#allocation3 + $0xa0] sm:$0xf]
      %v3724 = vld [vmem:[#allocation3 + $0xa8] sm:$0xf]
      %v3725 = vld [vmem:[#allocation3 + $0xac] sm:$0xf]
      %v3726 = vld [vmem:[#allocation3 + $0xb4] sm:$0xf]
      %v3727 = vld [vmem:[#allocation3 + $0xb8] sm:$0xf]
      %v3728 = vld [vmem:[#allocation3 + $0x8] sm:$0x1]
      %v3729 = vld [vmem:[#allocation3 + $0x14] sm:$0x1]
      %v3730 = vld [vmem:[#allocation3 + $0x20] sm:$0x1]
      %v3731 = vld [vmem:[#allocation3 + $0x2c] sm:$0x1]
      %v3732 = vld [vmem:[#allocation3 + $0x38] sm:$0x1]
      %v3733 = vld [vmem:[#allocation3 + $0x44] sm:$0x1]
      %v3734 = vld [vmem:[#allocation3 + $0x50] sm:$0x1]
      %v3735 = vld [vmem:[#allocation3 + $0x5c] sm:$0x1]
      %v3736 = vld [vmem:[#allocation3 + $0x68] sm:$0x1]
      %v3737 = vld [vmem:[#allocation3 + $0x74] sm:$0x1]
      %v3738 = vld [vmem:[#allocation3 + $0x80] sm:$0x1]
      %v3739 = vld [vmem:[#allocation3 + $0x8c] sm:$0x1]
      %v3740 = vld [vmem:[#allocation3 + $0x98] sm:$0x1]
      %v3741 = vld [vmem:[#allocation3 + $0xa4] sm:$0x1]
      %v3742 = vld [vmem:[#allocation3 + $0xb0] sm:$0x1]
      %v3743 = vld [vmem:[#allocation3 + $0xbc] sm:$0x1]
      %v3744 = vld [vmem:[#allocation3] sm:$0xe]
      %v3745 = vld [vmem:[#allocation3 + $0xc] sm:$0xe]
      %v3746 = vld [vmem:[#allocation3 + $0x18] sm:$0xe]
      %v3747 = vld [vmem:[#allocation3 + $0x24] sm:$0xe]
      %v3748 = vld [vmem:[#allocation3 + $0x30] sm:$0xe]
      %v3749 = vld [vmem:[#allocation3 + $0x3c] sm:$0xe]
      %v3750 = vld [vmem:[#allocation3 + $0x48] sm:$0xe]
      %v3751 = vld [vmem:[#allocation3 + $0x54] sm:$0xe]
      %v3752 = vld [vmem:[#allocation3 + $0x60] sm:$0xe]
      %v3753 = vld [vmem:[#allocation3 + $0x6c] sm:$0xe]
      %v3754 = vld [vmem:[#allocation3 + $0x78] sm:$0xe]
      %v3755 = vld [vmem:[#allocation3 + $0x84] sm:$0xe]
      %v3756 = vld [vmem:[#allocation3 + $0x90] sm:$0xe]
      %v3757 = vld [vmem:[#allocation3 + $0x9c] sm:$0xe]
      %v3758 = vld [vmem:[#allocation3 + $0xa8] sm:$0xe]
      %v3759 = vld [vmem:[#allocation3 + $0xb4] sm:$0xe]
      %v3760 = vld [vmem:[%s3583] sm:$0xf]
      %v3761 = vld [vmem:[%s3583 + $0x4] sm:$0xf]
      %v3762 = vld [vmem:[%s3583 + $0xc] sm:$0xf]
      %v3763 = vld [vmem:[%s3583 + $0x10] sm:$0xf]
      %v3764 = vld [vmem:[%s3583 + $0x18] sm:$0xf]
      %v3765 = vld [vmem:[%s3583 + $0x1c] sm:$0xf]
      %v3766 = vld [vmem:[%s3583 + $0x24] sm:$0xf]
      %v3767 = vld [vmem:[%s3583 + $0x28] sm:$0xf]
      %v3768 = vld [vmem:[%s3583 + $0x30] sm:$0xf]
      %v3769 = vld [vmem:[%s3583 + $0x34] sm:$0xf]
      %v3770 = vld [vmem:[%s3583 + $0x3c] sm:$0xf]
      %v3771 = vld [vmem:[%s3583 + $0x40] sm:$0xf]
      %v3772 = vld [vmem:[%s3583 + $0x48] sm:$0xf]
      %v3773 = vld [vmem:[%s3583 + $0x4c] sm:$0xf]
      %v3774 = vld [vmem:[%s3583 + $0x54] sm:$0xf]
      %v3775 = vld [vmem:[%s3583 + $0x58] sm:$0xf]
      %v3776 = vld [vmem:[%s3583 + $0x60] sm:$0xf]
      %v3777 = vld [vmem:[%s3583 + $0x64] sm:$0xf]
      %v3778 = vld [vmem:[%s3583 + $0x6c] sm:$0xf]
      %v3779 = vld [vmem:[%s3583 + $0x70] sm:$0xf]
      %v3780 = vld [vmem:[%s3583 + $0x78] sm:$0xf]
      %v3781 = vld [vmem:[%s3583 + $0x7c] sm:$0xf]
      %v3782 = vld [vmem:[%s3583 + $0x84] sm:$0xf]
      %v3783 = vld [vmem:[%s3583 + $0x88] sm:$0xf]
      %v3784 = vld [vmem:[%s3583 + $0x90] sm:$0xf]
      %v3785 = vld [vmem:[%s3583 + $0x94] sm:$0xf]
      %v3786 = vld [vmem:[%s3583 + $0x9c] sm:$0xf]
      %v3787 = vld [vmem:[%s3583 + $0xa0] sm:$0xf]
      %v3788 = vld [vmem:[%s3583 + $0xa8] sm:$0xf]
      %v3789 = vld [vmem:[%s3583 + $0xac] sm:$0xf]
      %v3790 = vld [vmem:[%s3583 + $0xb4] sm:$0xf]
      %v3791 = vld [vmem:[%s3583 + $0xb8] sm:$0xf]
      %v3792 = vld [vmem:[%s3583 + $0x8] sm:$0x1]
      %v3793 = vld [vmem:[%s3583 + $0x14] sm:$0x1]
      %v3794 = vld [vmem:[%s3583 + $0x20] sm:$0x1]
      %v3795 = vld [vmem:[%s3583 + $0x2c] sm:$0x1]
      %v3796 = vld [vmem:[%s3583 + $0x38] sm:$0x1]
      %v3797 = vld [vmem:[%s3583 + $0x44] sm:$0x1]
      %v3798 = vld [vmem:[%s3583 + $0x50] sm:$0x1]
      %v3799 = vld [vmem:[%s3583 + $0x5c] sm:$0x1]
      %v3800 = vld [vmem:[%s3583 + $0x68] sm:$0x1]
      %v3801 = vld [vmem:[%s3583 + $0x74] sm:$0x1]
      %v3802 = vld [vmem:[%s3583 + $0x80] sm:$0x1]
      %v3803 = vld [vmem:[%s3583 + $0x8c] sm:$0x1]
      %v3804 = vld [vmem:[%s3583 + $0x98] sm:$0x1]
      %v3805 = vld [vmem:[%s3583 + $0xa4] sm:$0x1]
      %v3806 = vld [vmem:[%s3583 + $0xb0] sm:$0x1]
      %v3807 = vld [vmem:[%s3583 + $0xbc] sm:$0x1]
      %v3808 = vld [vmem:[%s3583] sm:$0xe]
      %v3809 = vld [vmem:[%s3583 + $0xc] sm:$0xe]
      %v3810 = vld [vmem:[%s3583 + $0x18] sm:$0xe]
      %v3811 = vld [vmem:[%s3583 + $0x24] sm:$0xe]
      %v3812 = vld [vmem:[%s3583 + $0x30] sm:$0xe]
      %v3813 = vld [vmem:[%s3583 + $0x3c] sm:$0xe]
      %v3814 = vld [vmem:[%s3583 + $0x48] sm:$0xe]
      %v3815 = vld [vmem:[%s3583 + $0x54] sm:$0xe]
      %v3816 = vld [vmem:[%s3583 + $0x60] sm:$0xe]
      %v3817 = vld [vmem:[%s3583 + $0x6c] sm:$0xe]
      %v3818 = vld [vmem:[%s3583 + $0x78] sm:$0xe]
      %v3819 = vld [vmem:[%s3583 + $0x84] sm:$0xe]
      %v3820 = vld [vmem:[%s3583 + $0x90] sm:$0xe]
      %v3821 = vld [vmem:[%s3583 + $0x9c] sm:$0xe]
      %v3822 = vld [vmem:[%s3583 + $0xa8] sm:$0xe]
      %v3823 = vld [vmem:[%s3583 + $0xb4] sm:$0xe]
      %s3824 = scalar_lea.vmem [#allocation3], 24
      %v3825 = vld [vmem:[%s3824] sm:$0xf]
      %v3826 = vld [vmem:[%s3824 + $0x4] sm:$0xf]
      %v3827 = vld [vmem:[%s3824 + $0xc] sm:$0xf]
      %v3828 = vld [vmem:[%s3824 + $0x10] sm:$0xf]
      %v3829 = vld [vmem:[%s3824 + $0x18] sm:$0xf]
      %v3830 = vld [vmem:[%s3824 + $0x1c] sm:$0xf]
      %v3831 = vld [vmem:[%s3824 + $0x24] sm:$0xf]
      %v3832 = vld [vmem:[%s3824 + $0x28] sm:$0xf]
      %v3833 = vld [vmem:[%s3824 + $0x30] sm:$0xf]
      %v3834 = vld [vmem:[%s3824 + $0x34] sm:$0xf]
      %v3835 = vld [vmem:[%s3824 + $0x3c] sm:$0xf]
      %v3836 = vld [vmem:[%s3824 + $0x40] sm:$0xf]
      %v3837 = vld [vmem:[%s3824 + $0x48] sm:$0xf]
      %v3838 = vld [vmem:[%s3824 + $0x4c] sm:$0xf]
      %v3839 = vld [vmem:[%s3824 + $0x54] sm:$0xf]
      %v3840 = vld [vmem:[%s3824 + $0x58] sm:$0xf]
      %v3841 = vld [vmem:[%s3824 + $0x60] sm:$0xf]
      %v3842 = vld [vmem:[%s3824 + $0x64] sm:$0xf]
      %v3843 = vld [vmem:[%s3824 + $0x6c] sm:$0xf]
      %v3844 = vld [vmem:[%s3824 + $0x70] sm:$0xf]
      %v3845 = vld [vmem:[%s3824 + $0x78] sm:$0xf]
      %v3846 = vld [vmem:[%s3824 + $0x7c] sm:$0xf]
      %v3847 = vld [vmem:[%s3824 + $0x84] sm:$0xf]
      %v3848 = vld [vmem:[%s3824 + $0x88] sm:$0xf]
      %v3849 = vld [vmem:[%s3824 + $0x90] sm:$0xf]
      %v3850 = vld [vmem:[%s3824 + $0x94] sm:$0xf]
      %v3851 = vld [vmem:[%s3824 + $0x9c] sm:$0xf]
      %v3852 = vld [vmem:[%s3824 + $0xa0] sm:$0xf]
      %v3853 = vld [vmem:[%s3824 + $0xa8] sm:$0xf]
      %v3854 = vld [vmem:[%s3824 + $0xac] sm:$0xf]
      %v3855 = vld [vmem:[%s3824 + $0xb4] sm:$0xf]
      %v3856 = vld [vmem:[%s3824 + $0xb8] sm:$0xf]
      %v3857 = vld [vmem:[%s3824 + $0x8] sm:$0x1]
      %v3858 = vld [vmem:[%s3824 + $0x14] sm:$0x1]
      %v3859 = vld [vmem:[%s3824 + $0x20] sm:$0x1]
      %v3860 = vld [vmem:[%s3824 + $0x2c] sm:$0x1]
      %v3861 = vld [vmem:[%s3824 + $0x38] sm:$0x1]
      %v3862 = vld [vmem:[%s3824 + $0x44] sm:$0x1]
      %v3863 = vld [vmem:[%s3824 + $0x50] sm:$0x1]
      %v3864 = vld [vmem:[%s3824 + $0x5c] sm:$0x1]
      %v3865 = vld [vmem:[%s3824 + $0x68] sm:$0x1]
      %v3866 = vld [vmem:[%s3824 + $0x74] sm:$0x1]
      %v3867 = vld [vmem:[%s3824 + $0x80] sm:$0x1]
      %v3868 = vld [vmem:[%s3824 + $0x8c] sm:$0x1]
      %v3869 = vld [vmem:[%s3824 + $0x98] sm:$0x1]
      %v3870 = vld [vmem:[%s3824 + $0xa4] sm:$0x1]
      %v3871 = vld [vmem:[%s3824 + $0xb0] sm:$0x1]
      %v3872 = vld [vmem:[%s3824 + $0xbc] sm:$0x1]
      %v3873 = vld [vmem:[%s3824] sm:$0xe]
      %v3874 = vld [vmem:[%s3824 + $0xc] sm:$0xe]
      %v3875 = vld [vmem:[%s3824 + $0x18] sm:$0xe]
      %v3876 = vld [vmem:[%s3824 + $0x24] sm:$0xe]
      %v3877 = vld [vmem:[%s3824 + $0x30] sm:$0xe]
      %v3878 = vld [vmem:[%s3824 + $0x3c] sm:$0xe]
      %v3879 = vld [vmem:[%s3824 + $0x48] sm:$0xe]
      %v3880 = vld [vmem:[%s3824 + $0x54] sm:$0xe]
      %v3881 = vld [vmem:[%s3824 + $0x60] sm:$0xe]
      %v3882 = vld [vmem:[%s3824 + $0x6c] sm:$0xe]
      %v3883 = vld [vmem:[%s3824 + $0x78] sm:$0xe]
      %v3884 = vld [vmem:[%s3824 + $0x84] sm:$0xe]
      %v3885 = vld [vmem:[%s3824 + $0x90] sm:$0xe]
      %v3886 = vld [vmem:[%s3824 + $0x9c] sm:$0xe]
      %v3887 = vld [vmem:[%s3824 + $0xa8] sm:$0xe]
      %v3888 = vld [vmem:[%s3824 + $0xb4] sm:$0xe]
      %v3921 = vunpack.c.l.b16 %v3696
      %v3922 = vunpack.c.l.b16 %v3697
      %v3923 = vunpack.c.l.b16 %v3698
      %v3924 = vunpack.c.l.b16 %v3699
      %v3925 = vunpack.c.l.b16 %v3700
      %v3926 = vunpack.c.l.b16 %v3701
      %v3927 = vunpack.c.l.b16 %v3702
      %v3928 = vunpack.c.l.b16 %v3703
      %v3929 = vunpack.c.l.b16 %v3704
      %v3930 = vunpack.c.l.b16 %v3705
      %v3931 = vunpack.c.l.b16 %v3706
      %v3932 = vunpack.c.l.b16 %v3707
      %v3933 = vunpack.c.l.b16 %v3708
      %v3934 = vunpack.c.l.b16 %v3709
      %v3935 = vunpack.c.l.b16 %v3710
      %v3936 = vunpack.c.l.b16 %v3711
      %v3937 = vunpack.c.l.b16 %v3712
      %v3938 = vunpack.c.l.b16 %v3713
      %v3939 = vunpack.c.l.b16 %v3714
      %v3940 = vunpack.c.l.b16 %v3715
      %v3941 = vunpack.c.l.b16 %v3716
      %v3942 = vunpack.c.l.b16 %v3717
      %v3943 = vunpack.c.l.b16 %v3718
      %v3944 = vunpack.c.l.b16 %v3719
      %v3945 = vunpack.c.l.b16 %v3720
      %v3946 = vunpack.c.l.b16 %v3721
      %v3947 = vunpack.c.l.b16 %v3722
      %v3948 = vunpack.c.l.b16 %v3723
      %v3949 = vunpack.c.l.b16 %v3724
      %v3950 = vunpack.c.l.b16 %v3725
      %v3951 = vunpack.c.l.b16 %v3726
      %v3952 = vunpack.c.l.b16 %v3727
      %v3953 = vpack.c.b16 %v3922, %v3921
      %v3954 = vpack.c.b16 %v3924, %v3923
      %v3955 = vpack.c.b16 %v3926, %v3925
      %v3956 = vpack.c.b16 %v3928, %v3927
      %v3957 = vpack.c.b16 %v3930, %v3929
      %v3958 = vpack.c.b16 %v3932, %v3931
      %v3959 = vpack.c.b16 %v3934, %v3933
      %v3960 = vpack.c.b16 %v3936, %v3935
      %v3961 = vpack.c.b16 %v3938, %v3937
      %v3962 = vpack.c.b16 %v3940, %v3939
      %v3963 = vpack.c.b16 %v3942, %v3941
      %v3964 = vpack.c.b16 %v3944, %v3943
      %v3965 = vpack.c.b16 %v3946, %v3945
      %v3966 = vpack.c.b16 %v3948, %v3947
      %v3967 = vpack.c.b16 %v3950, %v3949
      %v3968 = vpack.c.b16 %v3952, %v3951
      %v3985 = vunpack.c.l.b16 %v3728
      %v3986 = vunpack.c.l.b16 %v3729
      %v3987 = vunpack.c.l.b16 %v3730
      %v3988 = vunpack.c.l.b16 %v3731
      %v3989 = vunpack.c.l.b16 %v3732
      %v3990 = vunpack.c.l.b16 %v3733
      %v3991 = vunpack.c.l.b16 %v3734
      %v3992 = vunpack.c.l.b16 %v3735
      %v3993 = vunpack.c.l.b16 %v3736
      %v3994 = vunpack.c.l.b16 %v3737
      %v3995 = vunpack.c.l.b16 %v3738
      %v3996 = vunpack.c.l.b16 %v3739
      %v3997 = vunpack.c.l.b16 %v3740
      %v3998 = vunpack.c.l.b16 %v3741
      %v3999 = vunpack.c.l.b16 %v3742
      %v4000 = vunpack.c.l.b16 %v3743
      %v4001 = vpack.c.b16 %v3985, %v3985
      %v4002 = vpack.c.b16 %v3986, %v3986
      %v4003 = vpack.c.b16 %v3987, %v3987
      %v4004 = vpack.c.b16 %v3988, %v3988
      %v4005 = vpack.c.b16 %v3989, %v3989
      %v4006 = vpack.c.b16 %v3990, %v3990
      %v4007 = vpack.c.b16 %v3991, %v3991
      %v4008 = vpack.c.b16 %v3992, %v3992
      %v4009 = vpack.c.b16 %v3993, %v3993
      %v4010 = vpack.c.b16 %v3994, %v3994
      %v4011 = vpack.c.b16 %v3995, %v3995
      %v4012 = vpack.c.b16 %v3996, %v3996
      %v4013 = vpack.c.b16 %v3997, %v3997
      %v4014 = vpack.c.b16 %v3998, %v3998
      %v4015 = vpack.c.b16 %v3999, %v3999
      %v4016 = vpack.c.b16 %v4000, %v4000
      %v4018 = vshrl.u32 %v3953, 16
      %v4020 = vshll.u32 %v3953, 16
      %v4022 = vrot.slane %v4020, 1
      %v4023 = vor.u32 %v4018, %v4022
      %v4025 = vshll.u32 %v4001, 16
      %v4027 = vrot.slane %v4025, 1
      %v4028 = vsel %vm1224, %v4023, %v4027
      %v4030 = vshrl.u32 %v3954, 16
      %v4032 = vshll.u32 %v3954, 16
      %v4034 = vrot.slane %v4032, 1
      %v4035 = vor.u32 %v4030, %v4034
      %v4037 = vshll.u32 %v4002, 16
      %v4039 = vrot.slane %v4037, 1
      %v4040 = vsel %vm1224, %v4035, %v4039
      %v4042 = vshrl.u32 %v3955, 16
      %v4044 = vshll.u32 %v3955, 16
      %v4046 = vrot.slane %v4044, 1
      %v4047 = vor.u32 %v4042, %v4046
      %v4049 = vshll.u32 %v4003, 16
      %v4051 = vrot.slane %v4049, 1
      %v4052 = vsel %vm1224, %v4047, %v4051
      %v4054 = vshrl.u32 %v3956, 16
      %v4056 = vshll.u32 %v3956, 16
      %v4058 = vrot.slane %v4056, 1
      %v4059 = vor.u32 %v4054, %v4058
      %v4061 = vshll.u32 %v4004, 16
      %v4063 = vrot.slane %v4061, 1
      %v4064 = vsel %vm1224, %v4059, %v4063
      %v4066 = vshrl.u32 %v3957, 16
      %v4068 = vshll.u32 %v3957, 16
      %v4070 = vrot.slane %v4068, 1
      %v4071 = vor.u32 %v4066, %v4070
      %v4073 = vshll.u32 %v4005, 16
      %v4075 = vrot.slane %v4073, 1
      %v4076 = vsel %vm1224, %v4071, %v4075
      %v4078 = vshrl.u32 %v3958, 16
      %v4080 = vshll.u32 %v3958, 16
      %v4082 = vrot.slane %v4080, 1
      %v4083 = vor.u32 %v4078, %v4082
      %v4085 = vshll.u32 %v4006, 16
      %v4087 = vrot.slane %v4085, 1
      %v4088 = vsel %vm1224, %v4083, %v4087
      %v4090 = vshrl.u32 %v3959, 16
      %v4092 = vshll.u32 %v3959, 16
      %v4094 = vrot.slane %v4092, 1
      %v4095 = vor.u32 %v4090, %v4094
      %v4097 = vshll.u32 %v4007, 16
      %v4099 = vrot.slane %v4097, 1
      %v4100 = vsel %vm1224, %v4095, %v4099
      %v4102 = vshrl.u32 %v3960, 16
      %v4104 = vshll.u32 %v3960, 16
      %v4106 = vrot.slane %v4104, 1
      %v4107 = vor.u32 %v4102, %v4106
      %v4109 = vshll.u32 %v4008, 16
      %v4111 = vrot.slane %v4109, 1
      %v4112 = vsel %vm1224, %v4107, %v4111
      %v4114 = vshrl.u32 %v3961, 16
      %v4116 = vshll.u32 %v3961, 16
      %v4118 = vrot.slane %v4116, 1
      %v4119 = vor.u32 %v4114, %v4118
      %v4121 = vshll.u32 %v4009, 16
      %v4123 = vrot.slane %v4121, 1
      %v4124 = vsel %vm1224, %v4119, %v4123
      %v4126 = vshrl.u32 %v3962, 16
      %v4128 = vshll.u32 %v3962, 16
      %v4130 = vrot.slane %v4128, 1
      %v4131 = vor.u32 %v4126, %v4130
      %v4133 = vshll.u32 %v4010, 16
      %v4135 = vrot.slane %v4133, 1
      %v4136 = vsel %vm1224, %v4131, %v4135
      %v4138 = vshrl.u32 %v3963, 16
      %v4140 = vshll.u32 %v3963, 16
      %v4142 = vrot.slane %v4140, 1
      %v4143 = vor.u32 %v4138, %v4142
      %v4145 = vshll.u32 %v4011, 16
      %v4147 = vrot.slane %v4145, 1
      %v4148 = vsel %vm1224, %v4143, %v4147
      %v4150 = vshrl.u32 %v3964, 16
      %v4152 = vshll.u32 %v3964, 16
      %v4154 = vrot.slane %v4152, 1
      %v4155 = vor.u32 %v4150, %v4154
      %v4157 = vshll.u32 %v4012, 16
      %v4159 = vrot.slane %v4157, 1
      %v4160 = vsel %vm1224, %v4155, %v4159
      %v4162 = vshrl.u32 %v3965, 16
      %v4164 = vshll.u32 %v3965, 16
      %v4166 = vrot.slane %v4164, 1
      %v4167 = vor.u32 %v4162, %v4166
      %v4169 = vshll.u32 %v4013, 16
      %v4171 = vrot.slane %v4169, 1
      %v4172 = vsel %vm1224, %v4167, %v4171
      %v4174 = vshrl.u32 %v3966, 16
      %v4176 = vshll.u32 %v3966, 16
      %v4178 = vrot.slane %v4176, 1
      %v4179 = vor.u32 %v4174, %v4178
      %v4181 = vshll.u32 %v4014, 16
      %v4183 = vrot.slane %v4181, 1
      %v4184 = vsel %vm1224, %v4179, %v4183
      %v4186 = vshrl.u32 %v3967, 16
      %v4188 = vshll.u32 %v3967, 16
      %v4190 = vrot.slane %v4188, 1
      %v4191 = vor.u32 %v4186, %v4190
      %v4193 = vshll.u32 %v4015, 16
      %v4195 = vrot.slane %v4193, 1
      %v4196 = vsel %vm1224, %v4191, %v4195
      %v4198 = vshrl.u32 %v3968, 16
      %v4200 = vshll.u32 %v3968, 16
      %v4202 = vrot.slane %v4200, 1
      %v4203 = vor.u32 %v4198, %v4202
      %v4205 = vshll.u32 %v4016, 16
      %v4207 = vrot.slane %v4205, 1
      %v4208 = vsel %vm1224, %v4203, %v4207
      %4209 = vrot.lane.b32.xlu0 %v4028, 4
      %v4210 = vpop.permute.xlu0 %4209
      %4211 = vrot.lane.b32.xlu0 %v4040, 4
      %v4212 = vpop.permute.xlu0 %4211
      %4213 = vrot.lane.b32.xlu0 %v4052, 4
      %v4214 = vpop.permute.xlu0 %4213
      %4215 = vrot.lane.b32.xlu0 %v4064, 4
      %v4216 = vpop.permute.xlu0 %4215
      %4217 = vrot.lane.b32.xlu0 %v4076, 4
      %v4218 = vpop.permute.xlu0 %4217
      %4219 = vrot.lane.b32.xlu0 %v4088, 4
      %v4220 = vpop.permute.xlu0 %4219
      %4221 = vrot.lane.b32.xlu0 %v4100, 4
      %v4222 = vpop.permute.xlu0 %4221
      %4223 = vrot.lane.b32.xlu0 %v4112, 4
      %v4224 = vpop.permute.xlu0 %4223
      %4225 = vrot.lane.b32.xlu0 %v4124, 4
      %v4226 = vpop.permute.xlu0 %4225
      %4227 = vrot.lane.b32.xlu0 %v4136, 4
      %v4228 = vpop.permute.xlu0 %4227
      %4229 = vrot.lane.b32.xlu0 %v4148, 4
      %v4230 = vpop.permute.xlu0 %4229
      %4231 = vrot.lane.b32.xlu0 %v4160, 4
      %v4232 = vpop.permute.xlu0 %4231
      %4233 = vrot.lane.b32.xlu0 %v4172, 4
      %v4234 = vpop.permute.xlu0 %4233
      %4235 = vrot.lane.b32.xlu0 %v4184, 4
      %v4236 = vpop.permute.xlu0 %4235
      %4237 = vrot.lane.b32.xlu0 %v4196, 4
      %v4238 = vpop.permute.xlu0 %4237
      %4239 = vrot.lane.b32.xlu0 %v4208, 4
      %v4240 = vpop.permute.xlu0 %4239
      %v4257 = vunpack.c.l.b16 %v3744
      %v4258 = vunpack.c.l.b16 %v3745
      %v4259 = vunpack.c.l.b16 %v3746
      %v4260 = vunpack.c.l.b16 %v3747
      %v4261 = vunpack.c.l.b16 %v3748
      %v4262 = vunpack.c.l.b16 %v3749
      %v4263 = vunpack.c.l.b16 %v3750
      %v4264 = vunpack.c.l.b16 %v3751
      %v4265 = vunpack.c.l.b16 %v3752
      %v4266 = vunpack.c.l.b16 %v3753
      %v4267 = vunpack.c.l.b16 %v3754
      %v4268 = vunpack.c.l.b16 %v3755
      %v4269 = vunpack.c.l.b16 %v3756
      %v4270 = vunpack.c.l.b16 %v3757
      %v4271 = vunpack.c.l.b16 %v3758
      %v4272 = vunpack.c.l.b16 %v3759
      %v4273 = vpack.c.b16 %v3922, %v4257
      %v4274 = vpack.c.b16 %v3924, %v4258
      %v4275 = vpack.c.b16 %v3926, %v4259
      %v4276 = vpack.c.b16 %v3928, %v4260
      %v4277 = vpack.c.b16 %v3930, %v4261
      %v4278 = vpack.c.b16 %v3932, %v4262
      %v4279 = vpack.c.b16 %v3934, %v4263
      %v4280 = vpack.c.b16 %v3936, %v4264
      %v4281 = vpack.c.b16 %v3938, %v4265
      %v4282 = vpack.c.b16 %v3940, %v4266
      %v4283 = vpack.c.b16 %v3942, %v4267
      %v4284 = vpack.c.b16 %v3944, %v4268
      %v4285 = vpack.c.b16 %v3946, %v4269
      %v4286 = vpack.c.b16 %v3948, %v4270
      %v4287 = vpack.c.b16 %v3950, %v4271
      %v4288 = vpack.c.b16 %v3952, %v4272
      %v4289 = vrot.slane %v4273, 1
      %v4290 = vrot.slane %v4001, 1
      %v4291 = vsel %vm1497, %v4289, %v4290
      %v4292 = vrot.slane %v4274, 1
      %v4293 = vrot.slane %v4002, 1
      %v4294 = vsel %vm1497, %v4292, %v4293
      %v4295 = vrot.slane %v4275, 1
      %v4296 = vrot.slane %v4003, 1
      %v4297 = vsel %vm1497, %v4295, %v4296
      %v4298 = vrot.slane %v4276, 1
      %v4299 = vrot.slane %v4004, 1
      %v4300 = vsel %vm1497, %v4298, %v4299
      %v4301 = vrot.slane %v4277, 1
      %v4302 = vrot.slane %v4005, 1
      %v4303 = vsel %vm1497, %v4301, %v4302
      %v4304 = vrot.slane %v4278, 1
      %v4305 = vrot.slane %v4006, 1
      %v4306 = vsel %vm1497, %v4304, %v4305
      %v4307 = vrot.slane %v4279, 1
      %v4308 = vrot.slane %v4007, 1
      %v4309 = vsel %vm1497, %v4307, %v4308
      %v4310 = vrot.slane %v4280, 1
      %v4311 = vrot.slane %v4008, 1
      %v4312 = vsel %vm1497, %v4310, %v4311
      %v4313 = vrot.slane %v4281, 1
      %v4314 = vrot.slane %v4009, 1
      %v4315 = vsel %vm1497, %v4313, %v4314
      %v4316 = vrot.slane %v4282, 1
      %v4317 = vrot.slane %v4010, 1
      %v4318 = vsel %vm1497, %v4316, %v4317
      %v4319 = vrot.slane %v4283, 1
      %v4320 = vrot.slane %v4011, 1
      %v4321 = vsel %vm1497, %v4319, %v4320
      %v4322 = vrot.slane %v4284, 1
      %v4323 = vrot.slane %v4012, 1
      %v4324 = vsel %vm1497, %v4322, %v4323
      %v4325 = vrot.slane %v4285, 1
      %v4326 = vrot.slane %v4013, 1
      %v4327 = vsel %vm1497, %v4325, %v4326
      %v4328 = vrot.slane %v4286, 1
      %v4329 = vrot.slane %v4014, 1
      %v4330 = vsel %vm1497, %v4328, %v4329
      %v4331 = vrot.slane %v4287, 1
      %v4332 = vrot.slane %v4015, 1
      %v4333 = vsel %vm1497, %v4331, %v4332
      %v4334 = vrot.slane %v4288, 1
      %v4335 = vrot.slane %v4016, 1
      %v4336 = vsel %vm1497, %v4334, %v4335
      %4337 = vrot.lane.b32.xlu0 %v4291, 8
      %v4338 = vpop.permute.xlu0 %4337
      %4339 = vrot.lane.b32.xlu0 %v4294, 8
      %v4340 = vpop.permute.xlu0 %4339
      %4341 = vrot.lane.b32.xlu0 %v4297, 8
      %v4342 = vpop.permute.xlu0 %4341
      %4343 = vrot.lane.b32.xlu0 %v4300, 8
      %v4344 = vpop.permute.xlu0 %4343
      %4345 = vrot.lane.b32.xlu0 %v4303, 8
      %v4346 = vpop.permute.xlu0 %4345
      %4347 = vrot.lane.b32.xlu0 %v4306, 8
      %v4348 = vpop.permute.xlu0 %4347
      %4349 = vrot.lane.b32.xlu0 %v4309, 8
      %v4350 = vpop.permute.xlu0 %4349
      %4351 = vrot.lane.b32.xlu0 %v4312, 8
      %v4352 = vpop.permute.xlu0 %4351
      %4353 = vrot.lane.b32.xlu0 %v4315, 8
      %v4354 = vpop.permute.xlu0 %4353
      %4355 = vrot.lane.b32.xlu0 %v4318, 8
      %v4356 = vpop.permute.xlu0 %4355
      %4357 = vrot.lane.b32.xlu0 %v4321, 8
      %v4358 = vpop.permute.xlu0 %4357
      %4359 = vrot.lane.b32.xlu0 %v4324, 8
      %v4360 = vpop.permute.xlu0 %4359
      %4361 = vrot.lane.b32.xlu0 %v4327, 8
      %v4362 = vpop.permute.xlu0 %4361
      %4363 = vrot.lane.b32.xlu0 %v4330, 8
      %v4364 = vpop.permute.xlu0 %4363
      %4365 = vrot.lane.b32.xlu0 %v4333, 8
      %v4366 = vpop.permute.xlu0 %4365
      %4367 = vrot.lane.b32.xlu0 %v4336, 8
      %v4368 = vpop.permute.xlu0 %4367
      %v4401 = vunpack.c.l.b16 %v3760
      %v4402 = vunpack.c.l.b16 %v3761
      %v4403 = vunpack.c.l.b16 %v3762
      %v4404 = vunpack.c.l.b16 %v3763
      %v4405 = vunpack.c.l.b16 %v3764
      %v4406 = vunpack.c.l.b16 %v3765
      %v4407 = vunpack.c.l.b16 %v3766
      %v4408 = vunpack.c.l.b16 %v3767
      %v4409 = vunpack.c.l.b16 %v3768
      %v4410 = vunpack.c.l.b16 %v3769
      %v4411 = vunpack.c.l.b16 %v3770
      %v4412 = vunpack.c.l.b16 %v3771
      %v4413 = vunpack.c.l.b16 %v3772
      %v4414 = vunpack.c.l.b16 %v3773
      %v4415 = vunpack.c.l.b16 %v3774
      %v4416 = vunpack.c.l.b16 %v3775
      %v4417 = vunpack.c.l.b16 %v3776
      %v4418 = vunpack.c.l.b16 %v3777
      %v4419 = vunpack.c.l.b16 %v3778
      %v4420 = vunpack.c.l.b16 %v3779
      %v4421 = vunpack.c.l.b16 %v3780
      %v4422 = vunpack.c.l.b16 %v3781
      %v4423 = vunpack.c.l.b16 %v3782
      %v4424 = vunpack.c.l.b16 %v3783
      %v4425 = vunpack.c.l.b16 %v3784
      %v4426 = vunpack.c.l.b16 %v3785
      %v4427 = vunpack.c.l.b16 %v3786
      %v4428 = vunpack.c.l.b16 %v3787
      %v4429 = vunpack.c.l.b16 %v3788
      %v4430 = vunpack.c.l.b16 %v3789
      %v4431 = vunpack.c.l.b16 %v3790
      %v4432 = vunpack.c.l.b16 %v3791
      %v4433 = vpack.c.b16 %v4402, %v4401
      %v4434 = vpack.c.b16 %v4404, %v4403
      %v4435 = vpack.c.b16 %v4406, %v4405
      %v4436 = vpack.c.b16 %v4408, %v4407
      %v4437 = vpack.c.b16 %v4410, %v4409
      %v4438 = vpack.c.b16 %v4412, %v4411
      %v4439 = vpack.c.b16 %v4414, %v4413
      %v4440 = vpack.c.b16 %v4416, %v4415
      %v4441 = vpack.c.b16 %v4418, %v4417
      %v4442 = vpack.c.b16 %v4420, %v4419
      %v4443 = vpack.c.b16 %v4422, %v4421
      %v4444 = vpack.c.b16 %v4424, %v4423
      %v4445 = vpack.c.b16 %v4426, %v4425
      %v4446 = vpack.c.b16 %v4428, %v4427
      %v4447 = vpack.c.b16 %v4430, %v4429
      %v4448 = vpack.c.b16 %v4432, %v4431
      %4449 = vrot.lane.b32.xlu0 %v4433, 12
      %v4450 = vpop.permute.xlu0 %4449
      %4451 = vrot.lane.b32.xlu0 %v4434, 12
      %v4452 = vpop.permute.xlu0 %4451
      %4453 = vrot.lane.b32.xlu0 %v4435, 12
      %v4454 = vpop.permute.xlu0 %4453
      %4455 = vrot.lane.b32.xlu0 %v4436, 12
      %v4456 = vpop.permute.xlu0 %4455
      %4457 = vrot.lane.b32.xlu0 %v4437, 12
      %v4458 = vpop.permute.xlu0 %4457
      %4459 = vrot.lane.b32.xlu0 %v4438, 12
      %v4460 = vpop.permute.xlu0 %4459
      %4461 = vrot.lane.b32.xlu0 %v4439, 12
      %v4462 = vpop.permute.xlu0 %4461
      %4463 = vrot.lane.b32.xlu0 %v4440, 12
      %v4464 = vpop.permute.xlu0 %4463
      %4465 = vrot.lane.b32.xlu0 %v4441, 12
      %v4466 = vpop.permute.xlu0 %4465
      %4467 = vrot.lane.b32.xlu0 %v4442, 12
      %v4468 = vpop.permute.xlu0 %4467
      %4469 = vrot.lane.b32.xlu0 %v4443, 12
      %v4470 = vpop.permute.xlu0 %4469
      %4471 = vrot.lane.b32.xlu0 %v4444, 12
      %v4472 = vpop.permute.xlu0 %4471
      %4473 = vrot.lane.b32.xlu0 %v4445, 12
      %v4474 = vpop.permute.xlu0 %4473
      %4475 = vrot.lane.b32.xlu0 %v4446, 12
      %v4476 = vpop.permute.xlu0 %4475
      %4477 = vrot.lane.b32.xlu0 %v4447, 12
      %v4478 = vpop.permute.xlu0 %4477
      %4479 = vrot.lane.b32.xlu0 %v4448, 12
      %v4480 = vpop.permute.xlu0 %4479
      %v4497 = vunpack.c.l.b16 %v3792
      %v4498 = vunpack.c.l.b16 %v3793
      %v4499 = vunpack.c.l.b16 %v3794
      %v4500 = vunpack.c.l.b16 %v3795
      %v4501 = vunpack.c.l.b16 %v3796
      %v4502 = vunpack.c.l.b16 %v3797
      %v4503 = vunpack.c.l.b16 %v3798
      %v4504 = vunpack.c.l.b16 %v3799
      %v4505 = vunpack.c.l.b16 %v3800
      %v4506 = vunpack.c.l.b16 %v3801
      %v4507 = vunpack.c.l.b16 %v3802
      %v4508 = vunpack.c.l.b16 %v3803
      %v4509 = vunpack.c.l.b16 %v3804
      %v4510 = vunpack.c.l.b16 %v3805
      %v4511 = vunpack.c.l.b16 %v3806
      %v4512 = vunpack.c.l.b16 %v3807
      %v4513 = vpack.c.b16 %v4497, %v4497
      %v4514 = vpack.c.b16 %v4498, %v4498
      %v4515 = vpack.c.b16 %v4499, %v4499
      %v4516 = vpack.c.b16 %v4500, %v4500
      %v4517 = vpack.c.b16 %v4501, %v4501
      %v4518 = vpack.c.b16 %v4502, %v4502
      %v4519 = vpack.c.b16 %v4503, %v4503
      %v4520 = vpack.c.b16 %v4504, %v4504
      %v4521 = vpack.c.b16 %v4505, %v4505
      %v4522 = vpack.c.b16 %v4506, %v4506
      %v4523 = vpack.c.b16 %v4507, %v4507
      %v4524 = vpack.c.b16 %v4508, %v4508
      %v4525 = vpack.c.b16 %v4509, %v4509
      %v4526 = vpack.c.b16 %v4510, %v4510
      %v4527 = vpack.c.b16 %v4511, %v4511
      %v4528 = vpack.c.b16 %v4512, %v4512
      %v4530 = vshrl.u32 %v4433, 16
      %v4532 = vshll.u32 %v4433, 16
      %v4534 = vrot.slane %v4532, 1
      %v4535 = vor.u32 %v4530, %v4534
      %v4537 = vshll.u32 %v4513, 16
      %v4539 = vrot.slane %v4537, 1
      %v4540 = vsel %vm1224, %v4535, %v4539
      %v4542 = vshrl.u32 %v4434, 16
      %v4544 = vshll.u32 %v4434, 16
      %v4546 = vrot.slane %v4544, 1
      %v4547 = vor.u32 %v4542, %v4546
      %v4549 = vshll.u32 %v4514, 16
      %v4551 = vrot.slane %v4549, 1
      %v4552 = vsel %vm1224, %v4547, %v4551
      %v4554 = vshrl.u32 %v4435, 16
      %v4556 = vshll.u32 %v4435, 16
      %v4558 = vrot.slane %v4556, 1
      %v4559 = vor.u32 %v4554, %v4558
      %v4561 = vshll.u32 %v4515, 16
      %v4563 = vrot.slane %v4561, 1
      %v4564 = vsel %vm1224, %v4559, %v4563
      %v4566 = vshrl.u32 %v4436, 16
      %v4568 = vshll.u32 %v4436, 16
      %v4570 = vrot.slane %v4568, 1
      %v4571 = vor.u32 %v4566, %v4570
      %v4573 = vshll.u32 %v4516, 16
      %v4575 = vrot.slane %v4573, 1
      %v4576 = vsel %vm1224, %v4571, %v4575
      %v4578 = vshrl.u32 %v4437, 16
      %v4580 = vshll.u32 %v4437, 16
      %v4582 = vrot.slane %v4580, 1
      %v4583 = vor.u32 %v4578, %v4582
      %v4585 = vshll.u32 %v4517, 16
      %v4587 = vrot.slane %v4585, 1
      %v4588 = vsel %vm1224, %v4583, %v4587
      %v4590 = vshrl.u32 %v4438, 16
      %v4592 = vshll.u32 %v4438, 16
      %v4594 = vrot.slane %v4592, 1
      %v4595 = vor.u32 %v4590, %v4594
      %v4597 = vshll.u32 %v4518, 16
      %v4599 = vrot.slane %v4597, 1
      %v4600 = vsel %vm1224, %v4595, %v4599
      %v4602 = vshrl.u32 %v4439, 16
      %v4604 = vshll.u32 %v4439, 16
      %v4606 = vrot.slane %v4604, 1
      %v4607 = vor.u32 %v4602, %v4606
      %v4609 = vshll.u32 %v4519, 16
      %v4611 = vrot.slane %v4609, 1
      %v4612 = vsel %vm1224, %v4607, %v4611
      %v4614 = vshrl.u32 %v4440, 16
      %v4616 = vshll.u32 %v4440, 16
      %v4618 = vrot.slane %v4616, 1
      %v4619 = vor.u32 %v4614, %v4618
      %v4621 = vshll.u32 %v4520, 16
      %v4623 = vrot.slane %v4621, 1
      %v4624 = vsel %vm1224, %v4619, %v4623
      %v4626 = vshrl.u32 %v4441, 16
      %v4628 = vshll.u32 %v4441, 16
      %v4630 = vrot.slane %v4628, 1
      %v4631 = vor.u32 %v4626, %v4630
      %v4633 = vshll.u32 %v4521, 16
      %v4635 = vrot.slane %v4633, 1
      %v4636 = vsel %vm1224, %v4631, %v4635
      %v4638 = vshrl.u32 %v4442, 16
      %v4640 = vshll.u32 %v4442, 16
      %v4642 = vrot.slane %v4640, 1
      %v4643 = vor.u32 %v4638, %v4642
      %v4645 = vshll.u32 %v4522, 16
      %v4647 = vrot.slane %v4645, 1
      %v4648 = vsel %vm1224, %v4643, %v4647
      %v4650 = vshrl.u32 %v4443, 16
      %v4652 = vshll.u32 %v4443, 16
      %v4654 = vrot.slane %v4652, 1
      %v4655 = vor.u32 %v4650, %v4654
      %v4657 = vshll.u32 %v4523, 16
      %v4659 = vrot.slane %v4657, 1
      %v4660 = vsel %vm1224, %v4655, %v4659
      %v4662 = vshrl.u32 %v4444, 16
      %v4664 = vshll.u32 %v4444, 16
      %v4666 = vrot.slane %v4664, 1
      %v4667 = vor.u32 %v4662, %v4666
      %v4669 = vshll.u32 %v4524, 16
      %v4671 = vrot.slane %v4669, 1
      %v4672 = vsel %vm1224, %v4667, %v4671
      %v4674 = vshrl.u32 %v4445, 16
      %v4676 = vshll.u32 %v4445, 16
      %v4678 = vrot.slane %v4676, 1
      %v4679 = vor.u32 %v4674, %v4678
      %v4681 = vshll.u32 %v4525, 16
      %v4683 = vrot.slane %v4681, 1
      %v4684 = vsel %vm1224, %v4679, %v4683
      %v4686 = vshrl.u32 %v4446, 16
      %v4688 = vshll.u32 %v4446, 16
      %v4690 = vrot.slane %v4688, 1
      %v4691 = vor.u32 %v4686, %v4690
      %v4693 = vshll.u32 %v4526, 16
      %v4695 = vrot.slane %v4693, 1
      %v4696 = vsel %vm1224, %v4691, %v4695
      %v4698 = vshrl.u32 %v4447, 16
      %v4700 = vshll.u32 %v4447, 16
      %v4702 = vrot.slane %v4700, 1
      %v4703 = vor.u32 %v4698, %v4702
      %v4705 = vshll.u32 %v4527, 16
      %v4707 = vrot.slane %v4705, 1
      %v4708 = vsel %vm1224, %v4703, %v4707
      %v4710 = vshrl.u32 %v4448, 16
      %v4712 = vshll.u32 %v4448, 16
      %v4714 = vrot.slane %v4712, 1
      %v4715 = vor.u32 %v4710, %v4714
      %v4717 = vshll.u32 %v4528, 16
      %v4719 = vrot.slane %v4717, 1
      %v4720 = vsel %vm1224, %v4715, %v4719
      %4721 = vrot.lane.b32.xlu0 %v4540, 16
      %v4722 = vpop.permute.xlu0 %4721
      %4723 = vrot.lane.b32.xlu0 %v4552, 16
      %v4724 = vpop.permute.xlu0 %4723
      %4725 = vrot.lane.b32.xlu0 %v4564, 16
      %v4726 = vpop.permute.xlu0 %4725
      %4727 = vrot.lane.b32.xlu0 %v4576, 16
      %v4728 = vpop.permute.xlu0 %4727
      %4729 = vrot.lane.b32.xlu0 %v4588, 16
      %v4730 = vpop.permute.xlu0 %4729
      %4731 = vrot.lane.b32.xlu0 %v4600, 16
      %v4732 = vpop.permute.xlu0 %4731
      %4733 = vrot.lane.b32.xlu0 %v4612, 16
      %v4734 = vpop.permute.xlu0 %4733
      %4735 = vrot.lane.b32.xlu0 %v4624, 16
      %v4736 = vpop.permute.xlu0 %4735
      %4737 = vrot.lane.b32.xlu0 %v4636, 16
      %v4738 = vpop.permute.xlu0 %4737
      %4739 = vrot.lane.b32.xlu0 %v4648, 16
      %v4740 = vpop.permute.xlu0 %4739
      %4741 = vrot.lane.b32.xlu0 %v4660, 16
      %v4742 = vpop.permute.xlu0 %4741
      %4743 = vrot.lane.b32.xlu0 %v4672, 16
      %v4744 = vpop.permute.xlu0 %4743
      %4745 = vrot.lane.b32.xlu0 %v4684, 16
      %v4746 = vpop.permute.xlu0 %4745
      %4747 = vrot.lane.b32.xlu0 %v4696, 16
      %v4748 = vpop.permute.xlu0 %4747
      %4749 = vrot.lane.b32.xlu0 %v4708, 16
      %v4750 = vpop.permute.xlu0 %4749
      %4751 = vrot.lane.b32.xlu0 %v4720, 16
      %v4752 = vpop.permute.xlu0 %4751
      %v4769 = vunpack.c.l.b16 %v3808
      %v4770 = vunpack.c.l.b16 %v3809
      %v4771 = vunpack.c.l.b16 %v3810
      %v4772 = vunpack.c.l.b16 %v3811
      %v4773 = vunpack.c.l.b16 %v3812
      %v4774 = vunpack.c.l.b16 %v3813
      %v4775 = vunpack.c.l.b16 %v3814
      %v4776 = vunpack.c.l.b16 %v3815
      %v4777 = vunpack.c.l.b16 %v3816
      %v4778 = vunpack.c.l.b16 %v3817
      %v4779 = vunpack.c.l.b16 %v3818
      %v4780 = vunpack.c.l.b16 %v3819
      %v4781 = vunpack.c.l.b16 %v3820
      %v4782 = vunpack.c.l.b16 %v3821
      %v4783 = vunpack.c.l.b16 %v3822
      %v4784 = vunpack.c.l.b16 %v3823
      %v4785 = vpack.c.b16 %v4402, %v4769
      %v4786 = vpack.c.b16 %v4404, %v4770
      %v4787 = vpack.c.b16 %v4406, %v4771
      %v4788 = vpack.c.b16 %v4408, %v4772
      %v4789 = vpack.c.b16 %v4410, %v4773
      %v4790 = vpack.c.b16 %v4412, %v4774
      %v4791 = vpack.c.b16 %v4414, %v4775
      %v4792 = vpack.c.b16 %v4416, %v4776
      %v4793 = vpack.c.b16 %v4418, %v4777
      %v4794 = vpack.c.b16 %v4420, %v4778
      %v4795 = vpack.c.b16 %v4422, %v4779
      %v4796 = vpack.c.b16 %v4424, %v4780
      %v4797 = vpack.c.b16 %v4426, %v4781
      %v4798 = vpack.c.b16 %v4428, %v4782
      %v4799 = vpack.c.b16 %v4430, %v4783
      %v4800 = vpack.c.b16 %v4432, %v4784
      %v4801 = vrot.slane %v4785, 1
      %v4802 = vrot.slane %v4513, 1
      %v4803 = vsel %vm1497, %v4801, %v4802
      %v4804 = vrot.slane %v4786, 1
      %v4805 = vrot.slane %v4514, 1
      %v4806 = vsel %vm1497, %v4804, %v4805
      %v4807 = vrot.slane %v4787, 1
      %v4808 = vrot.slane %v4515, 1
      %v4809 = vsel %vm1497, %v4807, %v4808
      %v4810 = vrot.slane %v4788, 1
      %v4811 = vrot.slane %v4516, 1
      %v4812 = vsel %vm1497, %v4810, %v4811
      %v4813 = vrot.slane %v4789, 1
      %v4814 = vrot.slane %v4517, 1
      %v4815 = vsel %vm1497, %v4813, %v4814
      %v4816 = vrot.slane %v4790, 1
      %v4817 = vrot.slane %v4518, 1
      %v4818 = vsel %vm1497, %v4816, %v4817
      %v4819 = vrot.slane %v4791, 1
      %v4820 = vrot.slane %v4519, 1
      %v4821 = vsel %vm1497, %v4819, %v4820
      %v4822 = vrot.slane %v4792, 1
      %v4823 = vrot.slane %v4520, 1
      %v4824 = vsel %vm1497, %v4822, %v4823
      %v4825 = vrot.slane %v4793, 1
      %v4826 = vrot.slane %v4521, 1
      %v4827 = vsel %vm1497, %v4825, %v4826
      %v4828 = vrot.slane %v4794, 1
      %v4829 = vrot.slane %v4522, 1
      %v4830 = vsel %vm1497, %v4828, %v4829
      %v4831 = vrot.slane %v4795, 1
      %v4832 = vrot.slane %v4523, 1
      %v4833 = vsel %vm1497, %v4831, %v4832
      %v4834 = vrot.slane %v4796, 1
      %v4835 = vrot.slane %v4524, 1
      %v4836 = vsel %vm1497, %v4834, %v4835
      %v4837 = vrot.slane %v4797, 1
      %v4838 = vrot.slane %v4525, 1
      %v4839 = vsel %vm1497, %v4837, %v4838
      %v4840 = vrot.slane %v4798, 1
      %v4841 = vrot.slane %v4526, 1
      %v4842 = vsel %vm1497, %v4840, %v4841
      %v4843 = vrot.slane %v4799, 1
      %v4844 = vrot.slane %v4527, 1
      %v4845 = vsel %vm1497, %v4843, %v4844
      %v4846 = vrot.slane %v4800, 1
      %v4847 = vrot.slane %v4528, 1
      %v4848 = vsel %vm1497, %v4846, %v4847
      %4849 = vrot.lane.b32.xlu0 %v4803, 20
      %v4850 = vpop.permute.xlu0 %4849
      %4851 = vrot.lane.b32.xlu0 %v4806, 20
      %v4852 = vpop.permute.xlu0 %4851
      %4853 = vrot.lane.b32.xlu0 %v4809, 20
      %v4854 = vpop.permute.xlu0 %4853
      %4855 = vrot.lane.b32.xlu0 %v4812, 20
      %v4856 = vpop.permute.xlu0 %4855
      %4857 = vrot.lane.b32.xlu0 %v4815, 20
      %v4858 = vpop.permute.xlu0 %4857
      %4859 = vrot.lane.b32.xlu0 %v4818, 20
      %v4860 = vpop.permute.xlu0 %4859
      %4861 = vrot.lane.b32.xlu0 %v4821, 20
      %v4862 = vpop.permute.xlu0 %4861
      %4863 = vrot.lane.b32.xlu0 %v4824, 20
      %v4864 = vpop.permute.xlu0 %4863
      %4865 = vrot.lane.b32.xlu0 %v4827, 20
      %v4866 = vpop.permute.xlu0 %4865
      %4867 = vrot.lane.b32.xlu0 %v4830, 20
      %v4868 = vpop.permute.xlu0 %4867
      %4869 = vrot.lane.b32.xlu0 %v4833, 20
      %v4870 = vpop.permute.xlu0 %4869
      %4871 = vrot.lane.b32.xlu0 %v4836, 20
      %v4872 = vpop.permute.xlu0 %4871
      %4873 = vrot.lane.b32.xlu0 %v4839, 20
      %v4874 = vpop.permute.xlu0 %4873
      %4875 = vrot.lane.b32.xlu0 %v4842, 20
      %v4876 = vpop.permute.xlu0 %4875
      %4877 = vrot.lane.b32.xlu0 %v4845, 20
      %v4878 = vpop.permute.xlu0 %4877
      %4879 = vrot.lane.b32.xlu0 %v4848, 20
      %v4880 = vpop.permute.xlu0 %4879
      %v4913 = vunpack.c.l.b16 %v3825
      %v4914 = vunpack.c.l.b16 %v3826
      %v4915 = vunpack.c.l.b16 %v3827
      %v4916 = vunpack.c.l.b16 %v3828
      %v4917 = vunpack.c.l.b16 %v3829
      %v4918 = vunpack.c.l.b16 %v3830
      %v4919 = vunpack.c.l.b16 %v3831
      %v4920 = vunpack.c.l.b16 %v3832
      %v4921 = vunpack.c.l.b16 %v3833
      %v4922 = vunpack.c.l.b16 %v3834
      %v4923 = vunpack.c.l.b16 %v3835
      %v4924 = vunpack.c.l.b16 %v3836
      %v4925 = vunpack.c.l.b16 %v3837
      %v4926 = vunpack.c.l.b16 %v3838
      %v4927 = vunpack.c.l.b16 %v3839
      %v4928 = vunpack.c.l.b16 %v3840
      %v4929 = vunpack.c.l.b16 %v3841
      %v4930 = vunpack.c.l.b16 %v3842
      %v4931 = vunpack.c.l.b16 %v3843
      %v4932 = vunpack.c.l.b16 %v3844
      %v4933 = vunpack.c.l.b16 %v3845
      %v4934 = vunpack.c.l.b16 %v3846
      %v4935 = vunpack.c.l.b16 %v3847
      %v4936 = vunpack.c.l.b16 %v3848
      %v4937 = vunpack.c.l.b16 %v3849
      %v4938 = vunpack.c.l.b16 %v3850
      %v4939 = vunpack.c.l.b16 %v3851
      %v4940 = vunpack.c.l.b16 %v3852
      %v4941 = vunpack.c.l.b16 %v3853
      %v4942 = vunpack.c.l.b16 %v3854
      %v4943 = vunpack.c.l.b16 %v3855
      %v4944 = vunpack.c.l.b16 %v3856
      %v4945 = vpack.c.b16 %v4914, %v4913
      %v4946 = vpack.c.b16 %v4916, %v4915
      %v4947 = vpack.c.b16 %v4918, %v4917
      %v4948 = vpack.c.b16 %v4920, %v4919
      %v4949 = vpack.c.b16 %v4922, %v4921
      %v4950 = vpack.c.b16 %v4924, %v4923
      %v4951 = vpack.c.b16 %v4926, %v4925
      %v4952 = vpack.c.b16 %v4928, %v4927
      %v4953 = vpack.c.b16 %v4930, %v4929
      %v4954 = vpack.c.b16 %v4932, %v4931
      %v4955 = vpack.c.b16 %v4934, %v4933
      %v4956 = vpack.c.b16 %v4936, %v4935
      %v4957 = vpack.c.b16 %v4938, %v4937
      %v4958 = vpack.c.b16 %v4940, %v4939
      %v4959 = vpack.c.b16 %v4942, %v4941
      %v4960 = vpack.c.b16 %v4944, %v4943
      %4961 = vrot.lane.b32.xlu0 %v4945, 24
      %v4962 = vpop.permute.xlu0 %4961
      %4963 = vrot.lane.b32.xlu0 %v4946, 24
      %v4964 = vpop.permute.xlu0 %4963
      %4965 = vrot.lane.b32.xlu0 %v4947, 24
      %v4966 = vpop.permute.xlu0 %4965
      %4967 = vrot.lane.b32.xlu0 %v4948, 24
      %v4968 = vpop.permute.xlu0 %4967
      %4969 = vrot.lane.b32.xlu0 %v4949, 24
      %v4970 = vpop.permute.xlu0 %4969
      %4971 = vrot.lane.b32.xlu0 %v4950, 24
      %v4972 = vpop.permute.xlu0 %4971
      %4973 = vrot.lane.b32.xlu0 %v4951, 24
      %v4974 = vpop.permute.xlu0 %4973
      %4975 = vrot.lane.b32.xlu0 %v4952, 24
      %v4976 = vpop.permute.xlu0 %4975
      %4977 = vrot.lane.b32.xlu0 %v4953, 24
      %v4978 = vpop.permute.xlu0 %4977
      %4979 = vrot.lane.b32.xlu0 %v4954, 24
      %v4980 = vpop.permute.xlu0 %4979
      %4981 = vrot.lane.b32.xlu0 %v4955, 24
      %v4982 = vpop.permute.xlu0 %4981
      %4983 = vrot.lane.b32.xlu0 %v4956, 24
      %v4984 = vpop.permute.xlu0 %4983
      %4985 = vrot.lane.b32.xlu0 %v4957, 24
      %v4986 = vpop.permute.xlu0 %4985
      %4987 = vrot.lane.b32.xlu0 %v4958, 24
      %v4988 = vpop.permute.xlu0 %4987
      %4989 = vrot.lane.b32.xlu0 %v4959, 24
      %v4990 = vpop.permute.xlu0 %4989
      %4991 = vrot.lane.b32.xlu0 %v4960, 24
      %v4992 = vpop.permute.xlu0 %4991
      %v5009 = vunpack.c.l.b16 %v3857
      %v5010 = vunpack.c.l.b16 %v3858
      %v5011 = vunpack.c.l.b16 %v3859
      %v5012 = vunpack.c.l.b16 %v3860
      %v5013 = vunpack.c.l.b16 %v3861
      %v5014 = vunpack.c.l.b16 %v3862
      %v5015 = vunpack.c.l.b16 %v3863
      %v5016 = vunpack.c.l.b16 %v3864
      %v5017 = vunpack.c.l.b16 %v3865
      %v5018 = vunpack.c.l.b16 %v3866
      %v5019 = vunpack.c.l.b16 %v3867
      %v5020 = vunpack.c.l.b16 %v3868
      %v5021 = vunpack.c.l.b16 %v3869
      %v5022 = vunpack.c.l.b16 %v3870
      %v5023 = vunpack.c.l.b16 %v3871
      %v5024 = vunpack.c.l.b16 %v3872
      %v5025 = vpack.c.b16 %v5009, %v5009
      %v5026 = vpack.c.b16 %v5010, %v5010
      %v5027 = vpack.c.b16 %v5011, %v5011
      %v5028 = vpack.c.b16 %v5012, %v5012
      %v5029 = vpack.c.b16 %v5013, %v5013
      %v5030 = vpack.c.b16 %v5014, %v5014
      %v5031 = vpack.c.b16 %v5015, %v5015
      %v5032 = vpack.c.b16 %v5016, %v5016
      %v5033 = vpack.c.b16 %v5017, %v5017
      %v5034 = vpack.c.b16 %v5018, %v5018
      %v5035 = vpack.c.b16 %v5019, %v5019
      %v5036 = vpack.c.b16 %v5020, %v5020
      %v5037 = vpack.c.b16 %v5021, %v5021
      %v5038 = vpack.c.b16 %v5022, %v5022
      %v5039 = vpack.c.b16 %v5023, %v5023
      %v5040 = vpack.c.b16 %v5024, %v5024
      %v5042 = vshrl.u32 %v4945, 16
      %v5044 = vshll.u32 %v4945, 16
      %v5046 = vrot.slane %v5044, 1
      %v5047 = vor.u32 %v5042, %v5046
      %v5049 = vshll.u32 %v5025, 16
      %v5051 = vrot.slane %v5049, 1
      %v5052 = vsel %vm1224, %v5047, %v5051
      %v5054 = vshrl.u32 %v4946, 16
      %v5056 = vshll.u32 %v4946, 16
      %v5058 = vrot.slane %v5056, 1
      %v5059 = vor.u32 %v5054, %v5058
      %v5061 = vshll.u32 %v5026, 16
      %v5063 = vrot.slane %v5061, 1
      %v5064 = vsel %vm1224, %v5059, %v5063
      %v5066 = vshrl.u32 %v4947, 16
      %v5068 = vshll.u32 %v4947, 16
      %v5070 = vrot.slane %v5068, 1
      %v5071 = vor.u32 %v5066, %v5070
      %v5073 = vshll.u32 %v5027, 16
      %v5075 = vrot.slane %v5073, 1
      %v5076 = vsel %vm1224, %v5071, %v5075
      %v5078 = vshrl.u32 %v4948, 16
      %v5080 = vshll.u32 %v4948, 16
      %v5082 = vrot.slane %v5080, 1
      %v5083 = vor.u32 %v5078, %v5082
      %v5085 = vshll.u32 %v5028, 16
      %v5087 = vrot.slane %v5085, 1
      %v5088 = vsel %vm1224, %v5083, %v5087
      %v5090 = vshrl.u32 %v4949, 16
      %v5092 = vshll.u32 %v4949, 16
      %v5094 = vrot.slane %v5092, 1
      %v5095 = vor.u32 %v5090, %v5094
      %v5097 = vshll.u32 %v5029, 16
      %v5099 = vrot.slane %v5097, 1
      %v5100 = vsel %vm1224, %v5095, %v5099
      %v5102 = vshrl.u32 %v4950, 16
      %v5104 = vshll.u32 %v4950, 16
      %v5106 = vrot.slane %v5104, 1
      %v5107 = vor.u32 %v5102, %v5106
      %v5109 = vshll.u32 %v5030, 16
      %v5111 = vrot.slane %v5109, 1
      %v5112 = vsel %vm1224, %v5107, %v5111
      %v5114 = vshrl.u32 %v4951, 16
      %v5116 = vshll.u32 %v4951, 16
      %v5118 = vrot.slane %v5116, 1
      %v5119 = vor.u32 %v5114, %v5118
      %v5121 = vshll.u32 %v5031, 16
      %v5123 = vrot.slane %v5121, 1
      %v5124 = vsel %vm1224, %v5119, %v5123
      %v5126 = vshrl.u32 %v4952, 16
      %v5128 = vshll.u32 %v4952, 16
      %v5130 = vrot.slane %v5128, 1
      %v5131 = vor.u32 %v5126, %v5130
      %v5133 = vshll.u32 %v5032, 16
      %v5135 = vrot.slane %v5133, 1
      %v5136 = vsel %vm1224, %v5131, %v5135
      %v5138 = vshrl.u32 %v4953, 16
      %v5140 = vshll.u32 %v4953, 16
      %v5142 = vrot.slane %v5140, 1
      %v5143 = vor.u32 %v5138, %v5142
      %v5145 = vshll.u32 %v5033, 16
      %v5147 = vrot.slane %v5145, 1
      %v5148 = vsel %vm1224, %v5143, %v5147
      %v5150 = vshrl.u32 %v4954, 16
      %v5152 = vshll.u32 %v4954, 16
      %v5154 = vrot.slane %v5152, 1
      %v5155 = vor.u32 %v5150, %v5154
      %v5157 = vshll.u32 %v5034, 16
      %v5159 = vrot.slane %v5157, 1
      %v5160 = vsel %vm1224, %v5155, %v5159
      %v5162 = vshrl.u32 %v4955, 16
      %v5164 = vshll.u32 %v4955, 16
      %v5166 = vrot.slane %v5164, 1
      %v5167 = vor.u32 %v5162, %v5166
      %v5169 = vshll.u32 %v5035, 16
      %v5171 = vrot.slane %v5169, 1
      %v5172 = vsel %vm1224, %v5167, %v5171
      %v5174 = vshrl.u32 %v4956, 16
      %v5176 = vshll.u32 %v4956, 16
      %v5178 = vrot.slane %v5176, 1
      %v5179 = vor.u32 %v5174, %v5178
      %v5181 = vshll.u32 %v5036, 16
      %v5183 = vrot.slane %v5181, 1
      %v5184 = vsel %vm1224, %v5179, %v5183
      %v5186 = vshrl.u32 %v4957, 16
      %v5188 = vshll.u32 %v4957, 16
      %v5190 = vrot.slane %v5188, 1
      %v5191 = vor.u32 %v5186, %v5190
      %v5193 = vshll.u32 %v5037, 16
      %v5195 = vrot.slane %v5193, 1
      %v5196 = vsel %vm1224, %v5191, %v5195
      %v5198 = vshrl.u32 %v4958, 16
      %v5200 = vshll.u32 %v4958, 16
      %v5202 = vrot.slane %v5200, 1
      %v5203 = vor.u32 %v5198, %v5202
      %v5205 = vshll.u32 %v5038, 16
      %v5207 = vrot.slane %v5205, 1
      %v5208 = vsel %vm1224, %v5203, %v5207
      %v5210 = vshrl.u32 %v4959, 16
      %v5212 = vshll.u32 %v4959, 16
      %v5214 = vrot.slane %v5212, 1
      %v5215 = vor.u32 %v5210, %v5214
      %v5217 = vshll.u32 %v5039, 16
      %v5219 = vrot.slane %v5217, 1
      %v5220 = vsel %vm1224, %v5215, %v5219
      %v5222 = vshrl.u32 %v4960, 16
      %v5224 = vshll.u32 %v4960, 16
      %v5226 = vrot.slane %v5224, 1
      %v5227 = vor.u32 %v5222, %v5226
      %v5229 = vshll.u32 %v5040, 16
      %v5231 = vrot.slane %v5229, 1
      %v5232 = vsel %vm1224, %v5227, %v5231
      %5233 = vrot.lane.b32.xlu0 %v5052, 28
      %v5234 = vpop.permute.xlu0 %5233
      %5235 = vrot.lane.b32.xlu0 %v5064, 28
      %v5236 = vpop.permute.xlu0 %5235
      %5237 = vrot.lane.b32.xlu0 %v5076, 28
      %v5238 = vpop.permute.xlu0 %5237
      %5239 = vrot.lane.b32.xlu0 %v5088, 28
      %v5240 = vpop.permute.xlu0 %5239
      %5241 = vrot.lane.b32.xlu0 %v5100, 28
      %v5242 = vpop.permute.xlu0 %5241
      %5243 = vrot.lane.b32.xlu0 %v5112, 28
      %v5244 = vpop.permute.xlu0 %5243
      %5245 = vrot.lane.b32.xlu0 %v5124, 28
      %v5246 = vpop.permute.xlu0 %5245
      %5247 = vrot.lane.b32.xlu0 %v5136, 28
      %v5248 = vpop.permute.xlu0 %5247
      %5249 = vrot.lane.b32.xlu0 %v5148, 28
      %v5250 = vpop.permute.xlu0 %5249
      %5251 = vrot.lane.b32.xlu0 %v5160, 28
      %v5252 = vpop.permute.xlu0 %5251
      %5253 = vrot.lane.b32.xlu0 %v5172, 28
      %v5254 = vpop.permute.xlu0 %5253
      %5255 = vrot.lane.b32.xlu0 %v5184, 28
      %v5256 = vpop.permute.xlu0 %5255
      %5257 = vrot.lane.b32.xlu0 %v5196, 28
      %v5258 = vpop.permute.xlu0 %5257
      %5259 = vrot.lane.b32.xlu0 %v5208, 28
      %v5260 = vpop.permute.xlu0 %5259
      %5261 = vrot.lane.b32.xlu0 %v5220, 28
      %v5262 = vpop.permute.xlu0 %5261
      %5263 = vrot.lane.b32.xlu0 %v5232, 28
      %v5264 = vpop.permute.xlu0 %5263
      %v5281 = vunpack.c.l.b16 %v3873
      %v5282 = vunpack.c.l.b16 %v3874
      %v5283 = vunpack.c.l.b16 %v3875
      %v5284 = vunpack.c.l.b16 %v3876
      %v5285 = vunpack.c.l.b16 %v3877
      %v5286 = vunpack.c.l.b16 %v3878
      %v5287 = vunpack.c.l.b16 %v3879
      %v5288 = vunpack.c.l.b16 %v3880
      %v5289 = vunpack.c.l.b16 %v3881
      %v5290 = vunpack.c.l.b16 %v3882
      %v5291 = vunpack.c.l.b16 %v3883
      %v5292 = vunpack.c.l.b16 %v3884
      %v5293 = vunpack.c.l.b16 %v3885
      %v5294 = vunpack.c.l.b16 %v3886
      %v5295 = vunpack.c.l.b16 %v3887
      %v5296 = vunpack.c.l.b16 %v3888
      %v5297 = vpack.c.b16 %v4914, %v5281
      %v5298 = vpack.c.b16 %v4916, %v5282
      %v5299 = vpack.c.b16 %v4918, %v5283
      %v5300 = vpack.c.b16 %v4920, %v5284
      %v5301 = vpack.c.b16 %v4922, %v5285
      %v5302 = vpack.c.b16 %v4924, %v5286
      %v5303 = vpack.c.b16 %v4926, %v5287
      %v5304 = vpack.c.b16 %v4928, %v5288
      %v5305 = vpack.c.b16 %v4930, %v5289
      %v5306 = vpack.c.b16 %v4932, %v5290
      %v5307 = vpack.c.b16 %v4934, %v5291
      %v5308 = vpack.c.b16 %v4936, %v5292
      %v5309 = vpack.c.b16 %v4938, %v5293
      %v5310 = vpack.c.b16 %v4940, %v5294
      %v5311 = vpack.c.b16 %v4942, %v5295
      %v5312 = vpack.c.b16 %v4944, %v5296
      %v5313 = vrot.slane %v5297, 1
      %v5314 = vrot.slane %v5025, 1
      %v5315 = vsel %vm1497, %v5313, %v5314
      %v5316 = vrot.slane %v5298, 1
      %v5317 = vrot.slane %v5026, 1
      %v5318 = vsel %vm1497, %v5316, %v5317
      %v5319 = vrot.slane %v5299, 1
      %v5320 = vrot.slane %v5027, 1
      %v5321 = vsel %vm1497, %v5319, %v5320
      %v5322 = vrot.slane %v5300, 1
      %v5323 = vrot.slane %v5028, 1
      %v5324 = vsel %vm1497, %v5322, %v5323
      %v5325 = vrot.slane %v5301, 1
      %v5326 = vrot.slane %v5029, 1
      %v5327 = vsel %vm1497, %v5325, %v5326
      %v5328 = vrot.slane %v5302, 1
      %v5329 = vrot.slane %v5030, 1
      %v5330 = vsel %vm1497, %v5328, %v5329
      %v5331 = vrot.slane %v5303, 1
      %v5332 = vrot.slane %v5031, 1
      %v5333 = vsel %vm1497, %v5331, %v5332
      %v5334 = vrot.slane %v5304, 1
      %v5335 = vrot.slane %v5032, 1
      %v5336 = vsel %vm1497, %v5334, %v5335
      %v5337 = vrot.slane %v5305, 1
      %v5338 = vrot.slane %v5033, 1
      %v5339 = vsel %vm1497, %v5337, %v5338
      %v5340 = vrot.slane %v5306, 1
      %v5341 = vrot.slane %v5034, 1
      %v5342 = vsel %vm1497, %v5340, %v5341
      %v5343 = vrot.slane %v5307, 1
      %v5344 = vrot.slane %v5035, 1
      %v5345 = vsel %vm1497, %v5343, %v5344
      %v5346 = vrot.slane %v5308, 1
      %v5347 = vrot.slane %v5036, 1
      %v5348 = vsel %vm1497, %v5346, %v5347
      %v5349 = vrot.slane %v5309, 1
      %v5350 = vrot.slane %v5037, 1
      %v5351 = vsel %vm1497, %v5349, %v5350
      %v5352 = vrot.slane %v5310, 1
      %v5353 = vrot.slane %v5038, 1
      %v5354 = vsel %vm1497, %v5352, %v5353
      %v5355 = vrot.slane %v5311, 1
      %v5356 = vrot.slane %v5039, 1
      %v5357 = vsel %vm1497, %v5355, %v5356
      %v5358 = vrot.slane %v5312, 1
      %v5359 = vrot.slane %v5040, 1
      %v5360 = vsel %vm1497, %v5358, %v5359
      %5361 = vrot.lane.b32.xlu0 %v5315, 32
      %v5362 = vpop.permute.xlu0 %5361
      %5363 = vrot.lane.b32.xlu0 %v5318, 32
      %v5364 = vpop.permute.xlu0 %5363
      %5365 = vrot.lane.b32.xlu0 %v5321, 32
      %v5366 = vpop.permute.xlu0 %5365
      %5367 = vrot.lane.b32.xlu0 %v5324, 32
      %v5368 = vpop.permute.xlu0 %5367
      %5369 = vrot.lane.b32.xlu0 %v5327, 32
      %v5370 = vpop.permute.xlu0 %5369
      %5371 = vrot.lane.b32.xlu0 %v5330, 32
      %v5372 = vpop.permute.xlu0 %5371
      %5373 = vrot.lane.b32.xlu0 %v5333, 32
      %v5374 = vpop.permute.xlu0 %5373
      %5375 = vrot.lane.b32.xlu0 %v5336, 32
      %v5376 = vpop.permute.xlu0 %5375
      %5377 = vrot.lane.b32.xlu0 %v5339, 32
      %v5378 = vpop.permute.xlu0 %5377
      %5379 = vrot.lane.b32.xlu0 %v5342, 32
      %v5380 = vpop.permute.xlu0 %5379
      %5381 = vrot.lane.b32.xlu0 %v5345, 32
      %v5382 = vpop.permute.xlu0 %5381
      %5383 = vrot.lane.b32.xlu0 %v5348, 32
      %v5384 = vpop.permute.xlu0 %5383
      %5385 = vrot.lane.b32.xlu0 %v5351, 32
      %v5386 = vpop.permute.xlu0 %5385
      %5387 = vrot.lane.b32.xlu0 %v5354, 32
      %v5388 = vpop.permute.xlu0 %5387
      %5389 = vrot.lane.b32.xlu0 %v5357, 32
      %v5390 = vpop.permute.xlu0 %5389
      %5391 = vrot.lane.b32.xlu0 %v5360, 32
      %v5392 = vpop.permute.xlu0 %5391
      %v5394 = vsel %vm2602, %v3953, %v4210
      %v5396 = vsel %vm2602, %v3954, %v4212
      %v5398 = vsel %vm2602, %v3955, %v4214
      %v5400 = vsel %vm2602, %v3956, %v4216
      %v5402 = vsel %vm2602, %v3957, %v4218
      %v5404 = vsel %vm2602, %v3958, %v4220
      %v5406 = vsel %vm2602, %v3959, %v4222
      %v5408 = vsel %vm2602, %v3960, %v4224
      %v5410 = vsel %vm2602, %v3961, %v4226
      %v5412 = vsel %vm2602, %v3962, %v4228
      %v5414 = vsel %vm2602, %v3963, %v4230
      %v5416 = vsel %vm2602, %v3964, %v4232
      %v5418 = vsel %vm2602, %v3965, %v4234
      %v5420 = vsel %vm2602, %v3966, %v4236
      %v5422 = vsel %vm2602, %v3967, %v4238
      %v5424 = vsel %vm2602, %v3968, %v4240
      %v5426 = vsel %vm2635, %v5394, %v4338
      %v5428 = vsel %vm2635, %v5396, %v4340
      %v5430 = vsel %vm2635, %v5398, %v4342
      %v5432 = vsel %vm2635, %v5400, %v4344
      %v5434 = vsel %vm2635, %v5402, %v4346
      %v5436 = vsel %vm2635, %v5404, %v4348
      %v5438 = vsel %vm2635, %v5406, %v4350
      %v5440 = vsel %vm2635, %v5408, %v4352
      %v5442 = vsel %vm2635, %v5410, %v4354
      %v5444 = vsel %vm2635, %v5412, %v4356
      %v5446 = vsel %vm2635, %v5414, %v4358
      %v5448 = vsel %vm2635, %v5416, %v4360
      %v5450 = vsel %vm2635, %v5418, %v4362
      %v5452 = vsel %vm2635, %v5420, %v4364
      %v5454 = vsel %vm2635, %v5422, %v4366
      %v5456 = vsel %vm2635, %v5424, %v4368
      %v5458 = vsel %vm2668, %v5426, %v4450
      %v5460 = vsel %vm2668, %v5428, %v4452
      %v5462 = vsel %vm2668, %v5430, %v4454
      %v5464 = vsel %vm2668, %v5432, %v4456
      %v5466 = vsel %vm2668, %v5434, %v4458
      %v5468 = vsel %vm2668, %v5436, %v4460
      %v5470 = vsel %vm2668, %v5438, %v4462
      %v5472 = vsel %vm2668, %v5440, %v4464
      %v5474 = vsel %vm2668, %v5442, %v4466
      %v5476 = vsel %vm2668, %v5444, %v4468
      %v5478 = vsel %vm2668, %v5446, %v4470
      %v5480 = vsel %vm2668, %v5448, %v4472
      %v5482 = vsel %vm2668, %v5450, %v4474
      %v5484 = vsel %vm2668, %v5452, %v4476
      %v5486 = vsel %vm2668, %v5454, %v4478
      %v5488 = vsel %vm2668, %v5456, %v4480
      %v5490 = vsel %vm2701, %v5458, %v4722
      %v5492 = vsel %vm2701, %v5460, %v4724
      %v5494 = vsel %vm2701, %v5462, %v4726
      %v5496 = vsel %vm2701, %v5464, %v4728
      %v5498 = vsel %vm2701, %v5466, %v4730
      %v5500 = vsel %vm2701, %v5468, %v4732
      %v5502 = vsel %vm2701, %v5470, %v4734
      %v5504 = vsel %vm2701, %v5472, %v4736
      %v5506 = vsel %vm2701, %v5474, %v4738
      %v5508 = vsel %vm2701, %v5476, %v4740
      %v5510 = vsel %vm2701, %v5478, %v4742
      %v5512 = vsel %vm2701, %v5480, %v4744
      %v5514 = vsel %vm2701, %v5482, %v4746
      %v5516 = vsel %vm2701, %v5484, %v4748
      %v5518 = vsel %vm2701, %v5486, %v4750
      %v5520 = vsel %vm2701, %v5488, %v4752
      %v5522 = vsel %vm2734, %v5490, %v4850
      %v5524 = vsel %vm2734, %v5492, %v4852
      %v5526 = vsel %vm2734, %v5494, %v4854
      %v5528 = vsel %vm2734, %v5496, %v4856
      %v5530 = vsel %vm2734, %v5498, %v4858
      %v5532 = vsel %vm2734, %v5500, %v4860
      %v5534 = vsel %vm2734, %v5502, %v4862
      %v5536 = vsel %vm2734, %v5504, %v4864
      %v5538 = vsel %vm2734, %v5506, %v4866
      %v5540 = vsel %vm2734, %v5508, %v4868
      %v5542 = vsel %vm2734, %v5510, %v4870
      %v5544 = vsel %vm2734, %v5512, %v4872
      %v5546 = vsel %vm2734, %v5514, %v4874
      %v5548 = vsel %vm2734, %v5516, %v4876
      %v5550 = vsel %vm2734, %v5518, %v4878
      %v5552 = vsel %vm2734, %v5520, %v4880
      %v5554 = vsel %vm2767, %v5522, %v4962
      %v5556 = vsel %vm2767, %v5524, %v4964
      %v5558 = vsel %vm2767, %v5526, %v4966
      %v5560 = vsel %vm2767, %v5528, %v4968
      %v5562 = vsel %vm2767, %v5530, %v4970
      %v5564 = vsel %vm2767, %v5532, %v4972
      %v5566 = vsel %vm2767, %v5534, %v4974
      %v5568 = vsel %vm2767, %v5536, %v4976
      %v5570 = vsel %vm2767, %v5538, %v4978
      %v5572 = vsel %vm2767, %v5540, %v4980
      %v5574 = vsel %vm2767, %v5542, %v4982
      %v5576 = vsel %vm2767, %v5544, %v4984
      %v5578 = vsel %vm2767, %v5546, %v4986
      %v5580 = vsel %vm2767, %v5548, %v4988
      %v5582 = vsel %vm2767, %v5550, %v4990
      %v5584 = vsel %vm2767, %v5552, %v4992
      %v5586 = vsel %vm2800, %v5554, %v5234
      %v5588 = vsel %vm2800, %v5556, %v5236
      %v5590 = vsel %vm2800, %v5558, %v5238
      %v5592 = vsel %vm2800, %v5560, %v5240
      %v5594 = vsel %vm2800, %v5562, %v5242
      %v5596 = vsel %vm2800, %v5564, %v5244
      %v5598 = vsel %vm2800, %v5566, %v5246
      %v5600 = vsel %vm2800, %v5568, %v5248
      %v5602 = vsel %vm2800, %v5570, %v5250
      %v5604 = vsel %vm2800, %v5572, %v5252
      %v5606 = vsel %vm2800, %v5574, %v5254
      %v5608 = vsel %vm2800, %v5576, %v5256
      %v5610 = vsel %vm2800, %v5578, %v5258
      %v5612 = vsel %vm2800, %v5580, %v5260
      %v5614 = vsel %vm2800, %v5582, %v5262
      %v5616 = vsel %vm2800, %v5584, %v5264
      %v5618 = vsel %vm2833, %v5586, %v5362
      %v5620 = vsel %vm2833, %v5588, %v5364
      %v5622 = vsel %vm2833, %v5590, %v5366
      %v5624 = vsel %vm2833, %v5592, %v5368
      %v5626 = vsel %vm2833, %v5594, %v5370
      %v5628 = vsel %vm2833, %v5596, %v5372
      %v5630 = vsel %vm2833, %v5598, %v5374
      %v5632 = vsel %vm2833, %v5600, %v5376
      %v5634 = vsel %vm2833, %v5602, %v5378
      %v5636 = vsel %vm2833, %v5604, %v5380
      %v5638 = vsel %vm2833, %v5606, %v5382
      %v5640 = vsel %vm2833, %v5608, %v5384
      %v5642 = vsel %vm2833, %v5610, %v5386
      %v5644 = vsel %vm2833, %v5612, %v5388
      %v5646 = vsel %vm2833, %v5614, %v5390
      %v5648 = vsel %vm2833, %v5616, %v5392
      %v5649 = vld [vmem:[%s4] sm:$0xf]
      %v5650 = vld [vmem:[%s4 + $0x4] sm:$0xf]
      %v5651 = vld [vmem:[%s4 + $0x8] sm:$0xf]
      %v5652 = vld [vmem:[%s4 + $0xc] sm:$0xf]
      %v5653 = vld [vmem:[%s4 + $0x10] sm:$0x3]
      %v5659 = vunpack.c.l.b16 %v5649
      %v5660 = vunpack.c.l.b16 %v5650
      %v5661 = vunpack.c.l.b16 %v5651
      %v5662 = vunpack.c.l.b16 %v5652
      %v5663 = vunpack.c.l.b16 %v5653
      %v5664 = vpack.c.b16 %v5660, %v5659
      %v5665 = vpack.c.b16 %v5662, %v5661
      %v5666 = vpack.c.b16 %v5663, %v5663
      %v5669 = vsel %vm2886, %v5618, 0
      %v5671 = vsel %vm2886, %v5620, 0
      %v5673 = vsel %vm2886, %v5622, 0
      %v5675 = vsel %vm2886, %v5624, 0
      %v5677 = vsel %vm2886, %v5626, 0
      %v5679 = vsel %vm2886, %v5628, 0
      %v5681 = vsel %vm2886, %v5630, 0
      %v5683 = vsel %vm2886, %v5632, 0
      %v5685 = vsel %vm2886, %v5634, 0
      %v5687 = vsel %vm2886, %v5636, 0
      %v5689 = vsel %vm2886, %v5638, 0
      %v5691 = vsel %vm2886, %v5640, 0
      %v5693 = vsel %vm2886, %v5642, 0
      %v5695 = vsel %vm2886, %v5644, 0
      %v5697 = vsel %vm2886, %v5646, 0
      %v5699 = vsel %vm2886, %v5648, 0
      %v5702 = vsel %vm2919, %v5666, 0
      %5704 = vmatpush.bf16.msra.mxu0 0
      %5705 = vmatpush.bf16.msra.mxu0 0
      %5706 = vmatpush.bf16.msra.mxu0 0
      %5707 = vmatpush.bf16.msra.mxu0 0
      %5708 = vmatpush.bf16.msra.mxu0 0
      %5709 = vmatpush.bf16.msra.mxu0 %v5702
      %5710 = vmatpush.bf16.msra.mxu0 %v5665
      %5711 = vmatpush.bf16.msra.mxu0 %v5664
      %5712 = vmatmul.bf16.gmra.mxu0 %v5669
      %v5713 = vpop.f32.mrf.mxu0
      %v5714 = vadd.f32 0.0, %v5713
      %v5715 = vpop.f32.mrf.mxu0
      %v5716 = vadd.f32 0.0, %v5715
      %5717 = vmatmul.bf16.gmra.mxu0 %v5671
      %v5718 = vpop.f32.mrf.mxu0
      %v5719 = vadd.f32 0.0, %v5718
      %v5720 = vpop.f32.mrf.mxu0
      %v5721 = vadd.f32 0.0, %v5720
      %5722 = vmatmul.bf16.gmra.mxu0 %v5673
      %v5723 = vpop.f32.mrf.mxu0
      %v5724 = vadd.f32 0.0, %v5723
      %v5725 = vpop.f32.mrf.mxu0
      %v5726 = vadd.f32 0.0, %v5725
      %5727 = vmatmul.bf16.gmra.mxu0 %v5675
      %v5728 = vpop.f32.mrf.mxu0
      %v5729 = vadd.f32 0.0, %v5728
      %v5730 = vpop.f32.mrf.mxu0
      %v5731 = vadd.f32 0.0, %v5730
      %5732 = vmatmul.bf16.gmra.mxu0 %v5677
      %v5733 = vpop.f32.mrf.mxu0
      %v5734 = vadd.f32 0.0, %v5733
      %v5735 = vpop.f32.mrf.mxu0
      %v5736 = vadd.f32 0.0, %v5735
      %5737 = vmatmul.bf16.gmra.mxu0 %v5679
      %v5738 = vpop.f32.mrf.mxu0
      %v5739 = vadd.f32 0.0, %v5738
      %v5740 = vpop.f32.mrf.mxu0
      %v5741 = vadd.f32 0.0, %v5740
      %5742 = vmatmul.bf16.gmra.mxu0 %v5681
      %v5743 = vpop.f32.mrf.mxu0
      %v5744 = vadd.f32 0.0, %v5743
      %v5745 = vpop.f32.mrf.mxu0
      %v5746 = vadd.f32 0.0, %v5745
      %5747 = vmatmul.bf16.gmra.mxu0 %v5683
      %v5748 = vpop.f32.mrf.mxu0
      %v5749 = vadd.f32 0.0, %v5748
      %v5750 = vpop.f32.mrf.mxu0
      %v5751 = vadd.f32 0.0, %v5750
      %5752 = vmatmul.bf16.gmra.mxu0 %v5685
      %v5753 = vpop.f32.mrf.mxu0
      %v5754 = vadd.f32 0.0, %v5753
      %v5755 = vpop.f32.mrf.mxu0
      %v5756 = vadd.f32 0.0, %v5755
      %5757 = vmatmul.bf16.gmra.mxu0 %v5687
      %v5758 = vpop.f32.mrf.mxu0
      %v5759 = vadd.f32 0.0, %v5758
      %v5760 = vpop.f32.mrf.mxu0
      %v5761 = vadd.f32 0.0, %v5760
      %5762 = vmatmul.bf16.gmra.mxu0 %v5689
      %v5763 = vpop.f32.mrf.mxu0
      %v5764 = vadd.f32 0.0, %v5763
      %v5765 = vpop.f32.mrf.mxu0
      %v5766 = vadd.f32 0.0, %v5765
      %5767 = vmatmul.bf16.gmra.mxu0 %v5691
      %v5768 = vpop.f32.mrf.mxu0
      %v5769 = vadd.f32 0.0, %v5768
      %v5770 = vpop.f32.mrf.mxu0
      %v5771 = vadd.f32 0.0, %v5770
      %5772 = vmatmul.bf16.gmra.mxu0 %v5693
      %v5773 = vpop.f32.mrf.mxu0
      %v5774 = vadd.f32 0.0, %v5773
      %v5775 = vpop.f32.mrf.mxu0
      %v5776 = vadd.f32 0.0, %v5775
      %5777 = vmatmul.bf16.gmra.mxu0 %v5695
      %v5778 = vpop.f32.mrf.mxu0
      %v5779 = vadd.f32 0.0, %v5778
      %v5780 = vpop.f32.mrf.mxu0
      %v5781 = vadd.f32 0.0, %v5780
      %5782 = vmatmul.bf16.gmra.mxu0 %v5697
      %v5783 = vpop.f32.mrf.mxu0
      %v5784 = vadd.f32 0.0, %v5783
      %v5785 = vpop.f32.mrf.mxu0
      %v5786 = vadd.f32 0.0, %v5785
      %5787 = vmatmul.bf16.gmra.mxu0 %v5699
      %v5788 = vpop.f32.mrf.mxu0
      %v5789 = vadd.f32 0.0, %v5788
      %v5790 = vpop.f32.mrf.mxu0
      %v5791 = vadd.f32 0.0, %v5790
      %5792 = vdwg.mxu0
      %v5793 = vld [vmem:[%s5] sm:$0x1]
      %v5795 = vperm.slane %v5793, 0
      %v5797 = vmul.f32 %v5714, %v5795
      %v5798 = vmul.f32 %v5716, %v5795
      %v5799 = vmul.f32 %v5719, %v5795
      %v5800 = vmul.f32 %v5721, %v5795
      %v5801 = vmul.f32 %v5724, %v5795
      %v5802 = vmul.f32 %v5726, %v5795
      %v5803 = vmul.f32 %v5729, %v5795
      %v5804 = vmul.f32 %v5731, %v5795
      %v5805 = vmul.f32 %v5734, %v5795
      %v5806 = vmul.f32 %v5736, %v5795
      %v5807 = vmul.f32 %v5739, %v5795
      %v5808 = vmul.f32 %v5741, %v5795
      %v5809 = vmul.f32 %v5744, %v5795
      %v5810 = vmul.f32 %v5746, %v5795
      %v5811 = vmul.f32 %v5749, %v5795
      %v5812 = vmul.f32 %v5751, %v5795
      %v5813 = vmul.f32 %v5754, %v5795
      %v5814 = vmul.f32 %v5756, %v5795
      %v5815 = vmul.f32 %v5759, %v5795
      %v5816 = vmul.f32 %v5761, %v5795
      %v5817 = vmul.f32 %v5764, %v5795
      %v5818 = vmul.f32 %v5766, %v5795
      %v5819 = vmul.f32 %v5769, %v5795
      %v5820 = vmul.f32 %v5771, %v5795
      %v5821 = vmul.f32 %v5774, %v5795
      %v5822 = vmul.f32 %v5776, %v5795
      %v5823 = vmul.f32 %v5779, %v5795
      %v5824 = vmul.f32 %v5781, %v5795
      %v5825 = vmul.f32 %v5784, %v5795
      %v5826 = vmul.f32 %v5786, %v5795
      %v5827 = vmul.f32 %v5789, %v5795
      %v5828 = vmul.f32 %v5791, %v5795
      %v5829 = vld [vmem:[%s6] sm:$0x1]
      %v5831 = vperm.slane %v5829, 0
      %v5833 = vadd.f32 %v5797, %v5831
      %v5834 = vadd.f32 %v5798, %v5831
      %v5835 = vadd.f32 %v5799, %v5831
      %v5836 = vadd.f32 %v5800, %v5831
      %v5837 = vadd.f32 %v5801, %v5831
      %v5838 = vadd.f32 %v5802, %v5831
      %v5839 = vadd.f32 %v5803, %v5831
      %v5840 = vadd.f32 %v5804, %v5831
      %v5841 = vadd.f32 %v5805, %v5831
      %v5842 = vadd.f32 %v5806, %v5831
      %v5843 = vadd.f32 %v5807, %v5831
      %v5844 = vadd.f32 %v5808, %v5831
      %v5845 = vadd.f32 %v5809, %v5831
      %v5846 = vadd.f32 %v5810, %v5831
      %v5847 = vadd.f32 %v5811, %v5831
      %v5848 = vadd.f32 %v5812, %v5831
      %v5849 = vadd.f32 %v5813, %v5831
      %v5850 = vadd.f32 %v5814, %v5831
      %v5851 = vadd.f32 %v5815, %v5831
      %v5852 = vadd.f32 %v5816, %v5831
      %v5853 = vadd.f32 %v5817, %v5831
      %v5854 = vadd.f32 %v5818, %v5831
      %v5855 = vadd.f32 %v5819, %v5831
      %v5856 = vadd.f32 %v5820, %v5831
      %v5857 = vadd.f32 %v5821, %v5831
      %v5858 = vadd.f32 %v5822, %v5831
      %v5859 = vadd.f32 %v5823, %v5831
      %v5860 = vadd.f32 %v5824, %v5831
      %v5861 = vadd.f32 %v5825, %v5831
      %v5862 = vadd.f32 %v5826, %v5831
      %v5863 = vadd.f32 %v5827, %v5831
      %v5864 = vadd.f32 %v5828, %v5831
      %v5865 = vld [vmem:[%s273] sm:$0xff]
      %v5866 = vld [vmem:[%s273 + $0x8] sm:$0xff]
      %v5867 = vld [vmem:[%s273 + $0x10] sm:$0xff]
      %v5868 = vld [vmem:[%s273 + $0x18] sm:$0xff]
      %v5869 = vld [vmem:[%s273 + $0x20] sm:$0xff]
      %v5870 = vld [vmem:[%s273 + $0x28] sm:$0xff]
      %v5871 = vld [vmem:[%s273 + $0x30] sm:$0xff]
      %v5872 = vld [vmem:[%s273 + $0x38] sm:$0xff]
      %v5873 = vld [vmem:[%s273 + $0x40] sm:$0xff]
      %v5874 = vld [vmem:[%s273 + $0x48] sm:$0xff]
      %v5875 = vld [vmem:[%s273 + $0x50] sm:$0xff]
      %v5876 = vld [vmem:[%s273 + $0x58] sm:$0xff]
      %v5877 = vld [vmem:[%s273 + $0x60] sm:$0xff]
      %v5878 = vld [vmem:[%s273 + $0x68] sm:$0xff]
      %v5879 = vld [vmem:[%s273 + $0x70] sm:$0xff]
      %v5880 = vld [vmem:[%s273 + $0x78] sm:$0xff]
      %v5881 = vld [vmem:[%s273 + $0x80] sm:$0xff]
      %v5882 = vld [vmem:[%s273 + $0x88] sm:$0xff]
      %v5883 = vld [vmem:[%s273 + $0x90] sm:$0xff]
      %v5884 = vld [vmem:[%s273 + $0x98] sm:$0xff]
      %v5885 = vld [vmem:[%s273 + $0xa0] sm:$0xff]
      %v5886 = vld [vmem:[%s273 + $0xa8] sm:$0xff]
      %v5887 = vld [vmem:[%s273 + $0xb0] sm:$0xff]
      %v5888 = vld [vmem:[%s273 + $0xb8] sm:$0xff]
      %v5889 = vld [vmem:[%s273 + $0xc0] sm:$0xff]
      %v5890 = vld [vmem:[%s273 + $0xc8] sm:$0xff]
      %v5891 = vld [vmem:[%s273 + $0xd0] sm:$0xff]
      %v5892 = vld [vmem:[%s273 + $0xd8] sm:$0xff]
      %v5893 = vld [vmem:[%s273 + $0xe0] sm:$0xff]
      %v5894 = vld [vmem:[%s273 + $0xe8] sm:$0xff]
      %v5895 = vld [vmem:[%s273 + $0xf0] sm:$0xff]
      %v5896 = vld [vmem:[%s273 + $0xf8] sm:$0xff]
      %v5897 = vadd.f32 %v5833, %v5865
      %v5898 = vadd.f32 %v5834, %v5866
      %v5899 = vadd.f32 %v5835, %v5867
      %v5900 = vadd.f32 %v5836, %v5868
      %v5901 = vadd.f32 %v5837, %v5869
      %v5902 = vadd.f32 %v5838, %v5870
      %v5903 = vadd.f32 %v5839, %v5871
      %v5904 = vadd.f32 %v5840, %v5872
      %v5905 = vadd.f32 %v5841, %v5873
      %v5906 = vadd.f32 %v5842, %v5874
      %v5907 = vadd.f32 %v5843, %v5875
      %v5908 = vadd.f32 %v5844, %v5876
      %v5909 = vadd.f32 %v5845, %v5877
      %v5910 = vadd.f32 %v5846, %v5878
      %v5911 = vadd.f32 %v5847, %v5879
      %v5912 = vadd.f32 %v5848, %v5880
      %v5913 = vadd.f32 %v5849, %v5881
      %v5914 = vadd.f32 %v5850, %v5882
      %v5915 = vadd.f32 %v5851, %v5883
      %v5916 = vadd.f32 %v5852, %v5884
      %v5917 = vadd.f32 %v5853, %v5885
      %v5918 = vadd.f32 %v5854, %v5886
      %v5919 = vadd.f32 %v5855, %v5887
      %v5920 = vadd.f32 %v5856, %v5888
      %v5921 = vadd.f32 %v5857, %v5889
      %v5922 = vadd.f32 %v5858, %v5890
      %v5923 = vadd.f32 %v5859, %v5891
      %v5924 = vadd.f32 %v5860, %v5892
      %v5925 = vadd.f32 %v5861, %v5893
      %v5926 = vadd.f32 %v5862, %v5894
      %v5927 = vadd.f32 %v5863, %v5895
      %v5928 = vadd.f32 %v5864, %v5896
      %v5929 = vmax.f32 %v5897, 0.0
      %v5930 = vmax.f32 %v5898, 0.0
      %v5931 = vmax.f32 %v5899, 0.0
      %v5932 = vmax.f32 %v5900, 0.0
      %v5933 = vmax.f32 %v5901, 0.0
      %v5934 = vmax.f32 %v5902, 0.0
      %v5935 = vmax.f32 %v5903, 0.0
      %v5936 = vmax.f32 %v5904, 0.0
      %v5937 = vmax.f32 %v5905, 0.0
      %v5938 = vmax.f32 %v5906, 0.0
      %v5939 = vmax.f32 %v5907, 0.0
      %v5940 = vmax.f32 %v5908, 0.0
      %v5941 = vmax.f32 %v5909, 0.0
      %v5942 = vmax.f32 %v5910, 0.0
      %v5943 = vmax.f32 %v5911, 0.0
      %v5944 = vmax.f32 %v5912, 0.0
      %v5945 = vmax.f32 %v5913, 0.0
      %v5946 = vmax.f32 %v5914, 0.0
      %v5947 = vmax.f32 %v5915, 0.0
      %v5948 = vmax.f32 %v5916, 0.0
      %v5949 = vmax.f32 %v5917, 0.0
      %v5950 = vmax.f32 %v5918, 0.0
      %v5951 = vmax.f32 %v5919, 0.0
      %v5952 = vmax.f32 %v5920, 0.0
      %v5953 = vmax.f32 %v5921, 0.0
      %v5954 = vmax.f32 %v5922, 0.0
      %v5955 = vmax.f32 %v5923, 0.0
      %v5956 = vmax.f32 %v5924, 0.0
      %v5957 = vmax.f32 %v5925, 0.0
      %v5958 = vmax.f32 %v5926, 0.0
      %v5959 = vmax.f32 %v5927, 0.0
      %v5960 = vmax.f32 %v5928, 0.0
      %5961 = vst.msk [vmem:[%s278] sm:$0xff] %vm2602, %v5929
      %5962 = vst.msk [vmem:[%s278 + $0x8] sm:$0xff] %vm2602, %v5930
      %5963 = vst.msk [vmem:[%s278 + $0x10] sm:$0xff] %vm2602, %v5931
      %5964 = vst.msk [vmem:[%s278 + $0x18] sm:$0xff] %vm2602, %v5932
      %5965 = vst.msk [vmem:[%s278 + $0x20] sm:$0xff] %vm2602, %v5933
      %5966 = vst.msk [vmem:[%s278 + $0x28] sm:$0xff] %vm2602, %v5934
      %5967 = vst.msk [vmem:[%s278 + $0x30] sm:$0xff] %vm2602, %v5935
      %5968 = vst.msk [vmem:[%s278 + $0x38] sm:$0xff] %vm2602, %v5936
      %5969 = vst.msk [vmem:[%s278 + $0x40] sm:$0xff] %vm2602, %v5937
      %5970 = vst.msk [vmem:[%s278 + $0x48] sm:$0xff] %vm2602, %v5938
      %5971 = vst.msk [vmem:[%s278 + $0x50] sm:$0xff] %vm2602, %v5939
      %5972 = vst.msk [vmem:[%s278 + $0x58] sm:$0xff] %vm2602, %v5940
      %5973 = vst.msk [vmem:[%s278 + $0x60] sm:$0xff] %vm2602, %v5941
      %5974 = vst.msk [vmem:[%s278 + $0x68] sm:$0xff] %vm2602, %v5942
      %5975 = vst.msk [vmem:[%s278 + $0x70] sm:$0xff] %vm2602, %v5943
      %5976 = vst.msk [vmem:[%s278 + $0x78] sm:$0xff] %vm2602, %v5944
      %5977 = vst.msk [vmem:[%s278 + $0x80] sm:$0xff] %vm2602, %v5945
      %5978 = vst.msk [vmem:[%s278 + $0x88] sm:$0xff] %vm2602, %v5946
      %5979 = vst.msk [vmem:[%s278 + $0x90] sm:$0xff] %vm2602, %v5947
      %5980 = vst.msk [vmem:[%s278 + $0x98] sm:$0xff] %vm2602, %v5948
      %5981 = vst.msk [vmem:[%s278 + $0xa0] sm:$0xff] %vm2602, %v5949
      %5982 = vst.msk [vmem:[%s278 + $0xa8] sm:$0xff] %vm2602, %v5950
      %5983 = vst.msk [vmem:[%s278 + $0xb0] sm:$0xff] %vm2602, %v5951
      %5984 = vst.msk [vmem:[%s278 + $0xb8] sm:$0xff] %vm2602, %v5952
      %5985 = vst.msk [vmem:[%s278 + $0xc0] sm:$0xff] %vm2602, %v5953
      %5986 = vst.msk [vmem:[%s278 + $0xc8] sm:$0xff] %vm2602, %v5954
      %5987 = vst.msk [vmem:[%s278 + $0xd0] sm:$0xff] %vm2602, %v5955
      %5988 = vst.msk [vmem:[%s278 + $0xd8] sm:$0xff] %vm2602, %v5956
      %5989 = vst.msk [vmem:[%s278 + $0xe0] sm:$0xff] %vm2602, %v5957
      %5990 = vst.msk [vmem:[%s278 + $0xe8] sm:$0xff] %vm2602, %v5958
      %5991 = vst.msk [vmem:[%s278 + $0xf0] sm:$0xff] %vm2602, %v5959
      %5992 = vst.msk [vmem:[%s278 + $0xf8] sm:$0xff] %vm2602, %v5960
      %p5993 = scmp.lt.s32.totalorder %s18, 1
      %s5994 = scalar_select %p5993, %s18, 1
      %s5995 = smul.addr %s5994, 32
      %s5996 = smul.addr %s5995, 8
      %s5997 = scalar_lea.vmem %s7, %s5996
      // Predicated region
      $region49: #{tpu_custom_call.1} parent=47 // pred_check
        %p5998 = pneg %p188
      $region50: #{tpu_custom_call.1} parent=47 // pred_check_branch
        %6000 = sbr.rel (%p5998) target = $region52
      $region51: #{tpu_custom_call.1} parent=47 // pred_region
        _
      $region52: #{tpu_custom_call.1} parent=47 // pred_fallthru
        _
    $region48: #{tpu_custom_call.1} parent=5 // pred_fallthru
      _
    %p6001 = scmp.le.s32.totalorder 2, %s13
    // Predicated region
    $region53: #{tpu_custom_call.1} parent=5 // pred_check
      %p6002 = pneg %p6001
    $region54: #{tpu_custom_call.1} parent=5 // pred_check_branch
      %6004 = sbr.rel (%p6002) target = $region56
    $region55: #{tpu_custom_call.1} parent=5 // pred_region
      %s6005 = ssub.s32 %s13, 2
      // Predicated region
      $region57: #{tpu_custom_call.1} parent=55 // pred_check
        %p6006 = pneg %p194
      $region58: #{tpu_custom_call.1} parent=55 // pred_check_branch
        %6008 = sbr.rel (%p6006) target = $region60
      $region59: #{tpu_custom_call.1} parent=55 // pred_region
        %p6009 = scmp.lt.s32.totalorder %s19, 1
        %s6010 = scalar_select %p6009, %s19, 1
        %s6011 = smul.addr %s6010, 32
        %s6012 = smul.addr %s6011, 8
        %s6013 = scalar_lea.vmem %s7, %s6012
      $region60: #{tpu_custom_call.1} parent=55 // pred_fallthru
        _
    $region56: #{tpu_custom_call.1} parent=5 // pred_fallthru
      _
  $region6: #{tpu_custom_call.1} parent=0 // loop_footer
    %s17 = sadd.s32 1, %s13
  $region7: #{tpu_custom_call.1} parent=0 // loop_footer_branch
    %12 = sbr.rel target = $region3
  $region8: #{tpu_custom_call.1} parent=0 // loop_exit
    _

</llo_original>
